<compile_context>
chip_gen: v7x
topology: tpu7x:2x2x1
jax: 0.10.0
libtpu: 0.0.40
codegen_flags: <defaults>
</compile_context>

<pallas_src>
import jax
import jax.numpy as jnp
from jax import lax
from jax.experimental import pallas as pl
from jax.experimental.pallas import tpu as pltpu


# ------------------------- fused MLP kernel ----------------------------------
# MLP = Linear(input_dim -> triaffine_dim) + LeakyReLU(0.1); dropout identity
# in eval mode.  All four MLPs (h/t/p/p2) share x, so they are one
# (B*S, Din) @ (Din, 4*D) matmul; the result is split into 4 slots so the
# triaffine kernel can index roles directly.

def _mlp4_kernel(x_ref, w_ref, b_ref, o_ref):
    xb = x_ref[...].astype(jnp.bfloat16)                         # cast in-kernel
    h = jnp.dot(xb, w_ref[...], preferred_element_type=jnp.float32) + b_ref[...]
    h = jnp.where(h > 0, h, 0.1 * h)                             # LeakyReLU(0.1)
    d = o_ref.shape[2]
    for s in range(o_ref.shape[0]):                              # slots: h,t,p,p2
        o_ref[s] = h[:, s * d:(s + 1) * d].astype(o_ref.dtype)


def fused_mlp(x, w_cat, b_cat):
    B, S, din = x.shape
    d = w_cat.shape[1] // 4
    x2d = x.reshape(B * S, din)                                  # stays f32
    return pl.pallas_call(
        _mlp4_kernel,
        out_shape=jax.ShapeDtypeStruct((4, B * S, d), jnp.bfloat16),
    )(x2d, w_cat, b_cat)


# ---------------------- fused triaffine kernel (all stages) ------------------
# Per head h (grid step), per batch b:
#   wz[z, (o,i,j)] = Z @ W2d                      (stage 1, f32, stays in VMEM)
#   XY[(x,y),(i,j)] = X[x,i] * Y[y,j]             (built with 0/1 expansion matmuls)
#   s_o[z,(x,y)]   = wz[:, o-block] . XY          (K = d*d deep contraction)
#   sym            = s_o * A_h + (s_o @ P) * B_h  (triu()+triu(1).T in-kernel)
# Output tile per (h,b): (S, n_out*S*S) = (8,128), lane order (o, x, y).

def _tri_kernel(role_x_s, role_y_s, role_z_s,
                x_ref, y_ref, z_ref, w_ref,
                ci_ref, cj_ref, rxp_ref, ryp_ref, p_ref, m_ref, o_ref):
    del role_x_s, role_y_s, role_z_s            # consumed by the index_maps
    Bn = o_ref.shape[1]
    S = o_ref.shape[2]
    d = w_ref.shape[1]
    dd = d * d
    n_out = w_ref.shape[2] // dd

    # Stage 1: all batches merged into M; f32 accumulator kept in VMEM.
    wz = jnp.dot(z_ref[0], w_ref[0], preferred_element_type=jnp.float32)  # (B*S, n_out*d*d)

    a_mask = m_ref[0, 0:1, :]                   # (1, S*S)  triu(<=) or ones
    b_mask = m_ref[0, 1:2, :]                   # (1, S*S)  triu(>)  or zeros
    ci = ci_ref[...]
    cj = cj_ref[...]
    rxp = rxp_ref[...]
    ryp = ryp_ref[...]
    pmat = p_ref[...]

    for b in range(Bn):
        xb = x_ref[0, b * S:(b + 1) * S, :]     # (S, d) bf16
        yb = y_ref[0, b * S:(b + 1) * S, :]     # (S, d) bf16
        # Lane-expanded outer-product factors (no reshapes, just matmuls):
        #   xe[r,c] = X[r//S, c//d],  ye[r,c] = Y[r%S, c%d]
        xe = jnp.dot(
            rxp,
            jnp.dot(xb, ci, preferred_element_type=jnp.float32).astype(jnp.bfloat16),
            preferred_element_type=jnp.float32)                   # (S*S, d*d)
        ye = jnp.dot(
            ryp,
            jnp.dot(yb, cj, preferred_element_type=jnp.float32).astype(jnp.bfloat16),
            preferred_element_type=jnp.float32)                   # (S*S, d*d)
        xy = xe * ye                                              # (S*S, d*d) f32

        pieces = []
        for o in range(n_out):
            wz_o = wz[b * S:(b + 1) * S, o * dd:(o + 1) * dd]     # (S, d*d) f32
            s_o = lax.dot_general(wz_o, xy, (((1,), (1,)), ((), ())),
                                  preferred_element_type=jnp.float32)  # (S_z, S*S)
            s_t = jnp.dot(s_o, pmat, preferred_element_type=jnp.float32)  # (x<->y)
            pieces.append(s_o * a_mask + s_t * b_mask)
        o_ref[0, b] = jnp.concatenate(pieces, axis=-1)            # (S, n_out*S*S)


def fused_triaffine(h4, prepped, batch, seq):
    w2d = prepped['w2d']
    H, d, n2 = w2d.shape
    n_out = n2 // (d * d)
    BS = h4.shape[1]
    B, S = batch, seq
    SS = S * S

    grid_spec = pltpu.PrefetchScalarGridSpec(
        num_scalar_prefetch=3,
        grid=(H,),
        in_specs=[
            pl.BlockSpec((1, BS, d), lambda h, rx, ry, rz: (rx[h], 0, 0)),   # x role
            pl.BlockSpec((1, BS, d), lambda h, rx, ry, rz: (ry[h], 0, 0)),   # y role
            pl.BlockSpec((1, BS, d), lambda h, rx, ry, rz: (rz[h], 0, 0)),   # z role
            pl.BlockSpec((1, d, n2), lambda h, rx, ry, rz: (h, 0, 0)),       # W2d
            pl.BlockSpec((d, d * d), lambda h, rx, ry, rz: (0, 0)),          # ccol_i
            pl.BlockSpec((d, d * d), lambda h, rx, ry, rz: (0, 0)),          # ccol_j
            pl.BlockSpec((SS, S), lambda h, rx, ry, rz: (0, 0)),             # rrow_x
            pl.BlockSpec((SS, S), lambda h, rx, ry, rz: (0, 0)),             # rrow_y
            pl.BlockSpec((SS, SS), lambda h, rx, ry, rz: (0, 0)),            # pmat
            pl.BlockSpec((1, 2, SS), lambda h, rx, ry, rz: (h, 0, 0)),       # sym masks
        ],
        out_specs=pl.BlockSpec((1, B, S, n_out * SS),
                               lambda h, rx, ry, rz: (h, 0, 0, 0)),
    )
    return pl.pallas_call(
        _tri_kernel,
        out_shape=jax.ShapeDtypeStruct((H, B, S, n_out * SS), jnp.float32),
        grid_spec=grid_spec,
        compiler_params=pltpu.CompilerParams(dimension_semantics=("parallel",)),
    )(prepped['role_x'], prepped['role_y'], prepped['role_z'],
      h4, h4, h4, w2d,
      prepped['ccol_i'], prepped['ccol_j'],
      prepped['rrow_x'], prepped['rrow_y'],
      prepped['pmat'], prepped['mask'])


# ------------------------------ glue ops --------------------------------------

def _triu_sym(s):
    """torch: s.triu() + s.triu(1).transpose(-1, -2) (over the last two dims)."""
    n = s.shape[-1]
    r = jnp.arange(n)
    upper = r[:, None] <= r[None, :]
    strict = r[:, None] < r[None, :]
    return (jnp.where(upper, s, 0.0)
            + jnp.swapaxes(jnp.where(strict, s, 0.0), -1, -2))


def prepare_params(params, seq_len):
    """One-time (outside jit) repack of weights + constant tables."""
    w_cat = jnp.concatenate(
        [params['w_h'], params['w_t'], params['w_p'], params['w_p2']],
        axis=1).astype(jnp.bfloat16)                               # (Din, 4D)
    b_cat = jnp.concatenate(
        [params['b_h'], params['b_t'], params['b_p'], params['b_p2']]
    ).reshape(1, -1).astype(jnp.float32)                           # (1, 4D)

    w_all = jnp.stack([params['W_span_pt'], params['W_span_ph'],
                       params['W_ph_sib'], params['W_pt_sib'],
                       params['W_ph_cop'], params['W_pt_cop']])    # (6,o,i,k,j)
    H, n_out, d = w_all.shape[0], w_all.shape[1], w_all.shape[2]
    # (h,o,i,k,j) -> (h,k,o,i,j) -> (h, d_k, n_out*d_i*d_j): MXU-ready.
    w2d = jnp.transpose(w_all, (0, 3, 1, 2, 4)).reshape(
        H, d, n_out * d * d).astype(jnp.bfloat16)

    S = seq_len
    lane = jnp.arange(d * d)
    ccol_i = (lane[None, :] // d == jnp.arange(d)[:, None]).astype(jnp.bfloat16)
    ccol_j = (lane[None, :] % d == jnp.arange(d)[:, None]).astype(jnp.bfloat16)
    row = jnp.arange(S * S)
    rrow_x = (row[:, None] // S == jnp.arange(S)[None, :]).astype(jnp.bfloat16)
    rrow_y = (row[:, None] % S == jnp.arange(S)[None, :]).astype(jnp.bfloat16)
    xg, yg = row // S, row % S
    pmat = ((yg * S + xg)[:, None] == row[None, :]).astype(jnp.float32)  # (x,y) swap
    upper = (xg <= yg).astype(jnp.float32)
    strict = (xg > yg).astype(jnp.float32)
    ones, zeros = jnp.ones_like(upper), jnp.zeros_like(strict)
    # head 1 (span_psh) is NOT symmetrized in the PyTorch module.
    mask = jnp.stack([jnp.stack([ones if h == 1 else upper,
                                 zeros if h == 1 else strict]) for h in range(H)])

    # slots in h4: 0=sh(h), 1=st(t), 2=p, 3=p2   (shared_span=True)
    # heads: 0 span_pst(sh,st,p2) 1 span_psh(sh,st,p) 2 ph_sib(sh,sh,p)
    #        3 pt_sib(st,st,p2)   4 ph_cop(p,p,sh)    5 pt_cop(p2,p2,st)
    role_x = jnp.array([0, 0, 0, 1, 2, 3], jnp.int32)
    role_y = jnp.array([1, 1, 0, 1, 2, 3], jnp.int32)
    role_z = jnp.array([3, 2, 2, 3, 0, 1], jnp.int32)

    return dict(w_cat=w_cat, b_cat=b_cat, w2d=w2d,
                ccol_i=ccol_i, ccol_j=ccol_j, rrow_x=rrow_x, rrow_y=rrow_y,
                pmat=pmat, mask=mask,
                role_x=role_x, role_y=role_y, role_z=role_z)


def srl_second_order_scorer(x, prepped):
    """Forward pass of SRLSecondOrderScorer (split=True, shared_span=True)."""
    B, S, _ = x.shape
    h4 = fused_mlp(x, prepped['w_cat'], prepped['b_cat'])        # (4, B*S, d) bf16
    scores = fused_triaffine(h4, prepped, batch=B, seq=S)        # (H, B, S_z, n_out*S*S)
    H = scores.shape[0]
    n_out = scores.shape[-1] // (S * S)

    sc = scores.reshape(H, B, S, n_out, S, S)                    # (h,b,z,o,x,y), sym done
    base = jnp.moveaxis(sc, 3, -1)                               # (h,b,z,x,y,o)
    span_pst, span_psh, ph_sib, pt_sib = base[0], base[1], base[2], base[3]
    ph_cop = jnp.transpose(base[4], (0, 2, 3, 1, 4))             # (b,x,y,z,o)
    pt_cop = jnp.transpose(base[5], (0, 2, 3, 1, 4))
    return span_psh, span_pst, ph_sib, pt_sib, ph_cop, pt_cop


# ------------------------- pure-JAX reference ---------------------------------

def _mlp_ref(x, w, b):
    h = x @ w + b
    return jnp.where(h > 0, h, 0.1 * h)


def _tri_ref(x, y, z, w):
    return jnp.einsum('bxi,oikj,bzk,byj->bozxy', x, w, z, y)


def srl_ref(x, params):
    sh = _mlp_ref(x, params['w_h'], params['b_h'])
    st = _mlp_ref(x, params['w_t'], params['b_t'])
    p = _mlp_ref(x, params['w_p'], params['b_p'])
    p2 = _mlp_ref(x, params['w_p2'], params['b_p2'])
    span_pst = jnp.moveaxis(_triu_sym(_tri_ref(sh, st, p2, params['W_span_pt'])), 1, -1)
    span_psh = jnp.moveaxis(_tri_ref(sh, st, p, params['W_span_ph']), 1, -1)
    ph_sib = jnp.moveaxis(_triu_sym(_tri_ref(sh, sh, p, params['W_ph_sib'])), 1, -1)
    pt_sib = jnp.moveaxis(_triu_sym(_tri_ref(st, st, p2, params['W_pt_sib'])), 1, -1)
    ph_cop = jnp.transpose(
        jnp.moveaxis(_triu_sym(_tri_ref(p, p, sh, params['W_ph_cop'])), 1, -1),
        (0, 2, 3, 1, 4))
    pt_cop = jnp.transpose(
        jnp.moveaxis(_triu_sym(_tri_ref(p2, p2, st, params['W_pt_cop'])), 1, -1),
        (0, 2, 3, 1, 4))
    return span_psh, span_pst, ph_sib, pt_sib, ph_cop, pt_cop


# ----------------------------------- main --------------------------------------

if __name__ == "__main__":
    B, S, INPUT_DIM, TRIAFFINE_DIM, N_OUT = 2, 8, 32, 32, 2

    key = jax.random.PRNGKey(0)
    keys = jax.random.split(key, 16)
    x = jax.random.normal(keys[0], (B, S, INPUT_DIM), jnp.float32)

    def linear_init(k, din, dout):
        kw, kb = jax.random.split(k)
        w = jax.random.normal(kw, (din, dout), jnp.float32) / jnp.sqrt(din)
        b = jax.random.normal(kb, (dout,), jnp.float32) * 0.1
        return w, b

    params = {}
    params['w_h'], params['b_h'] = linear_init(keys[1], INPUT_DIM, TRIAFFINE_DIM)
    params['w_t'], params['b_t'] = linear_init(keys[2], INPUT_DIM, TRIAFFINE_DIM)
    params['w_p'], params['b_p'] = linear_init(keys[3], INPUT_DIM, TRIAFFINE_DIM)
    params['w_p2'], params['b_p2'] = linear_init(keys[4], INPUT_DIM, TRIAFFINE_DIM)
    for name, k in zip(
            ['W_span_pt', 'W_span_ph', 'W_ph_sib', 'W_pt_sib', 'W_ph_cop', 'W_pt_cop'],
            keys[5:11]):
        params[name] = jax.random.normal(
            k, (N_OUT, TRIAFFINE_DIM, TRIAFFINE_DIM, TRIAFFINE_DIM), jnp.float32) * 0.05

    prepped = prepare_params(params, S)       # one-time weight/constant repack

    fwd = jax.jit(srl_second_order_scorer)
    outs = jax.block_until_ready(fwd(x, prepped))

    refs = srl_ref(x, params)
    for o, r in zip(outs, refs):
        assert o.shape == r.shape == (B, S, S, S, N_OUT), (o.shape, r.shape)
        rel_err = float(jnp.max(jnp.abs(o - r)) / (jnp.max(jnp.abs(r)) + 1e-6))
        assert rel_err < 2e-2, rel_err

    print("KERNEL_OK")
</pallas_src>

<mosaic_0001>
module attributes {stable_mosaic.version = 11 : i64} {
  func.func @_mlp4_kernel(%arg0: memref<16x32xf32, #tpu.memory_space<vmem>>, %arg1: memref<32x128xbf16, #tpu.memory_space<vmem>>, %arg2: memref<1x128xf32, #tpu.memory_space<vmem>>, %arg3: memref<4x16x32xbf16, #tpu.memory_space<vmem>>) attributes {dimension_semantics = [], scalar_prefetch = 0 : i64, scratch_operands = 0 : i64, tpu.core_type = #tpu.core_type<tc>} {
    %c0 = arith.constant 0 : index
    %c0_0 = arith.constant 0 : index
    %0 = vector.load %arg0[%c0, %c0_0] : memref<16x32xf32, #tpu.memory_space<vmem>>, vector<16x32xf32>
    %1 = arith.truncf %0 : vector<16x32xf32> to vector<16x32xbf16>
    %c0_1 = arith.constant 0 : index
    %c0_2 = arith.constant 0 : index
    %2 = vector.load %arg1[%c0_1, %c0_2] : memref<32x128xbf16, #tpu.memory_space<vmem>>, vector<32x128xbf16>
    %cst = arith.constant dense<0.000000e+00> : vector<16x128xf32>
    %3 = tpu.matmul %1, %2, %cst {dimension_numbers = #tpu.dot_dimension_numbers<[1], [0], [0], [1], [0, 0, 1, 1], [], []>} : vector<16x32xbf16>, vector<32x128xbf16>, vector<16x128xf32> -> vector<16x128xf32>
    %c0_3 = arith.constant 0 : index
    %c0_4 = arith.constant 0 : index
    %4 = vector.load %arg2[%c0_3, %c0_4] : memref<1x128xf32, #tpu.memory_space<vmem>>, vector<1x128xf32>
    %5 = vector.broadcast %4 : vector<1x128xf32> to vector<16x128xf32>
    %6 = arith.addf %3, %5 : vector<16x128xf32>
    %cst_5 = arith.constant 0.000000e+00 : f32
    %7 = vector.broadcast %cst_5 : f32 to vector<16x128xf32>
    %8 = arith.cmpf ogt, %6, %7 : vector<16x128xf32>
    %cst_6 = arith.constant 1.000000e-01 : f32
    %9 = vector.broadcast %cst_6 : f32 to vector<16x128xf32>
    %10 = arith.mulf %9, %6 : vector<16x128xf32>
    %11 = arith.select %8, %6, %10 : vector<16x128xi1>, vector<16x128xf32>
    %12 = vector.extract_strided_slice %11 {offsets = [0, 0], sizes = [16, 32], strides = [1, 1]} : vector<16x128xf32> to vector<16x32xf32>
    %13 = arith.truncf %12 : vector<16x32xf32> to vector<16x32xbf16>
    %c0_7 = arith.constant 0 : index
    %c0_8 = arith.constant 0 : index
    %c0_9 = arith.constant 0 : index
    %14 = vector.load %arg3[%c0_7, %c0_8, %c0_9] : memref<4x16x32xbf16, #tpu.memory_space<vmem>>, vector<1x16x32xbf16>
    %15 = vector.shape_cast %14 : vector<1x16x32xbf16> to vector<16x32xbf16>
    %16 = vector.shape_cast %13 : vector<16x32xbf16> to vector<1x16x32xbf16>
    tpu.vector_store %arg3[%c0_7, %c0_8, %c0_9], %16 {strides = array<i32>} : memref<4x16x32xbf16, #tpu.memory_space<vmem>>, vector<1x16x32xbf16>,
    %17 = vector.extract_strided_slice %11 {offsets = [0, 32], sizes = [16, 32], strides = [1, 1]} : vector<16x128xf32> to vector<16x32xf32>
    %18 = arith.truncf %17 : vector<16x32xf32> to vector<16x32xbf16>
    %c1 = arith.constant 1 : index
    %c0_10 = arith.constant 0 : index
    %c0_11 = arith.constant 0 : index
    %19 = vector.load %arg3[%c1, %c0_10, %c0_11] : memref<4x16x32xbf16, #tpu.memory_space<vmem>>, vector<1x16x32xbf16>
    %20 = vector.shape_cast %19 : vector<1x16x32xbf16> to vector<16x32xbf16>
    %21 = vector.shape_cast %18 : vector<16x32xbf16> to vector<1x16x32xbf16>
    tpu.vector_store %arg3[%c1, %c0_10, %c0_11], %21 {strides = array<i32>} : memref<4x16x32xbf16, #tpu.memory_space<vmem>>, vector<1x16x32xbf16>,
    %22 = vector.extract_strided_slice %11 {offsets = [0, 64], sizes = [16, 32], strides = [1, 1]} : vector<16x128xf32> to vector<16x32xf32>
    %23 = arith.truncf %22 : vector<16x32xf32> to vector<16x32xbf16>
    %c2 = arith.constant 2 : index
    %c0_12 = arith.constant 0 : index
    %c0_13 = arith.constant 0 : index
    %24 = vector.load %arg3[%c2, %c0_12, %c0_13] : memref<4x16x32xbf16, #tpu.memory_space<vmem>>, vector<1x16x32xbf16>
    %25 = vector.shape_cast %24 : vector<1x16x32xbf16> to vector<16x32xbf16>
    %26 = vector.shape_cast %23 : vector<16x32xbf16> to vector<1x16x32xbf16>
    tpu.vector_store %arg3[%c2, %c0_12, %c0_13], %26 {strides = array<i32>} : memref<4x16x32xbf16, #tpu.memory_space<vmem>>, vector<1x16x32xbf16>,
    %27 = vector.extract_strided_slice %11 {offsets = [0, 96], sizes = [16, 32], strides = [1, 1]} : vector<16x128xf32> to vector<16x32xf32>
    %28 = arith.truncf %27 : vector<16x32xf32> to vector<16x32xbf16>
    %c3 = arith.constant 3 : index
    %c0_14 = arith.constant 0 : index
    %c0_15 = arith.constant 0 : index
    %29 = vector.load %arg3[%c3, %c0_14, %c0_15] : memref<4x16x32xbf16, #tpu.memory_space<vmem>>, vector<1x16x32xbf16>
    %30 = vector.shape_cast %29 : vector<1x16x32xbf16> to vector<16x32xbf16>
    %31 = vector.shape_cast %28 : vector<16x32xbf16> to vector<1x16x32xbf16>
    tpu.vector_store %arg3[%c3, %c0_14, %c0_15], %31 {strides = array<i32>} : memref<4x16x32xbf16, #tpu.memory_space<vmem>>, vector<1x16x32xbf16>,
    return
  }
}

module attributes {stable_mosaic.version = 11 : i64} {
  func.func @_tri_kernel(%arg0: i32, %arg1: memref<6xi32, #tpu.memory_space<smem>>, %arg2: memref<6xi32, #tpu.memory_space<smem>>, %arg3: memref<6xi32, #tpu.memory_space<smem>>, %arg4: memref<1x16x32xbf16, #tpu.memory_space<vmem>>, %arg5: memref<1x16x32xbf16, #tpu.memory_space<vmem>>, %arg6: memref<1x16x32xbf16, #tpu.memory_space<vmem>>, %arg7: memref<1x32x2048xbf16, #tpu.memory_space<vmem>>, %arg8: memref<32x1024xbf16, #tpu.memory_space<vmem>>, %arg9: memref<32x1024xbf16, #tpu.memory_space<vmem>>, %arg10: memref<64x8xbf16, #tpu.memory_space<vmem>>, %arg11: memref<64x8xbf16, #tpu.memory_space<vmem>>, %arg12: memref<64x64xf32, #tpu.memory_space<vmem>>, %arg13: memref<1x2x64xf32, #tpu.memory_space<vmem>>, %arg14: memref<1x2x8x128xf32, #tpu.memory_space<vmem>>) attributes {dimension_semantics = [#tpu.dimension_semantics<parallel>], iteration_bounds = array<i64: 6>, scalar_prefetch = 3 : i64, scratch_operands = 0 : i64, tpu.core_type = #tpu.core_type<tc>, window_params = [{transform_indices = @transform_0, window_bounds = array<i64: 1, 16, 32>}, {transform_indices = @transform_1, window_bounds = array<i64: 1, 16, 32>}, {transform_indices = @transform_2, window_bounds = array<i64: 1, 16, 32>}, {transform_indices = @transform_3, window_bounds = array<i64: 1, 32, 2048>}, {pipeline_mode = #tpu.pipeline_mode<synchronous>, transform_indices = @transform_4, window_bounds = array<i64: 32, 1024>}, {pipeline_mode = #tpu.pipeline_mode<synchronous>, transform_indices = @transform_5, window_bounds = array<i64: 32, 1024>}, {pipeline_mode = #tpu.pipeline_mode<synchronous>, transform_indices = @transform_6, window_bounds = array<i64: 64, 8>}, {pipeline_mode = #tpu.pipeline_mode<synchronous>, transform_indices = @transform_7, window_bounds = array<i64: 64, 8>}, {pipeline_mode = #tpu.pipeline_mode<synchronous>, transform_indices = @transform_8, window_bounds = array<i64: 64, 64>}, {transform_indices = @transform_9, window_bounds = array<i64: 1, 2, 64>}, {transform_indices = @transform_10, window_bounds = array<i64: 1, 2, 8, 128>}]} {
    %c0 = arith.constant 0 : index
    %c0_0 = arith.constant 0 : index
    %c0_1 = arith.constant 0 : index
    %0 = vector.load %arg6[%c0, %c0_0, %c0_1] : memref<1x16x32xbf16, #tpu.memory_space<vmem>>, vector<1x16x32xbf16>
    %1 = vector.shape_cast %0 : vector<1x16x32xbf16> to vector<16x32xbf16>
    %c0_2 = arith.constant 0 : index
    %c0_3 = arith.constant 0 : index
    %c0_4 = arith.constant 0 : index
    %2 = vector.load %arg7[%c0_2, %c0_3, %c0_4] : memref<1x32x2048xbf16, #tpu.memory_space<vmem>>, vector<1x32x2048xbf16>
    %3 = vector.shape_cast %2 : vector<1x32x2048xbf16> to vector<32x2048xbf16>
    %cst = arith.constant dense<0.000000e+00> : vector<16x2048xf32>
    %4 = tpu.matmul %1, %3, %cst {dimension_numbers = #tpu.dot_dimension_numbers<[1], [0], [0], [1], [0, 0, 1, 1], [], []>} : vector<16x32xbf16>, vector<32x2048xbf16>, vector<16x2048xf32> -> vector<16x2048xf32>
    %c0_5 = arith.constant 0 : index
    %c0_6 = arith.constant 0 : index
    %c0_7 = arith.constant 0 : index
    %5 = vector.load %arg13[%c0_5, %c0_6, %c0_7] : memref<1x2x64xf32, #tpu.memory_space<vmem>>, vector<1x1x64xf32>
    %6 = vector.shape_cast %5 : vector<1x1x64xf32> to vector<1x64xf32>
    %c0_8 = arith.constant 0 : index
    %c1 = arith.constant 1 : index
    %c0_9 = arith.constant 0 : index
    %7 = vector.load %arg13[%c0_8, %c1, %c0_9] : memref<1x2x64xf32, #tpu.memory_space<vmem>>, vector<1x1x64xf32>
    %8 = vector.shape_cast %7 : vector<1x1x64xf32> to vector<1x64xf32>
    %c0_10 = arith.constant 0 : index
    %c0_11 = arith.constant 0 : index
    %9 = vector.load %arg8[%c0_10, %c0_11] : memref<32x1024xbf16, #tpu.memory_space<vmem>>, vector<32x1024xbf16>
    %c0_12 = arith.constant 0 : index
    %c0_13 = arith.constant 0 : index
    %10 = vector.load %arg9[%c0_12, %c0_13] : memref<32x1024xbf16, #tpu.memory_space<vmem>>, vector<32x1024xbf16>
    %c0_14 = arith.constant 0 : index
    %c0_15 = arith.constant 0 : index
    %11 = vector.load %arg10[%c0_14, %c0_15] : memref<64x8xbf16, #tpu.memory_space<vmem>>, vector<64x8xbf16>
    %c0_16 = arith.constant 0 : index
    %c0_17 = arith.constant 0 : index
    %12 = vector.load %arg11[%c0_16, %c0_17] : memref<64x8xbf16, #tpu.memory_space<vmem>>, vector<64x8xbf16>
    %c0_18 = arith.constant 0 : index
    %c0_19 = arith.constant 0 : index
    %13 = vector.load %arg12[%c0_18, %c0_19] : memref<64x64xf32, #tpu.memory_space<vmem>>, vector<64x64xf32>
    %c0_20 = arith.constant 0 : index
    %c0_21 = arith.constant 0 : index
    %c0_22 = arith.constant 0 : index
    %14 = vector.load %arg4[%c0_20, %c0_21, %c0_22] : memref<1x16x32xbf16, #tpu.memory_space<vmem>>, vector<1x8x32xbf16>
    %15 = vector.shape_cast %14 : vector<1x8x32xbf16> to vector<8x32xbf16>
    %c0_23 = arith.constant 0 : index
    %c0_24 = arith.constant 0 : index
    %c0_25 = arith.constant 0 : index
    %16 = vector.load %arg5[%c0_23, %c0_24, %c0_25] : memref<1x16x32xbf16, #tpu.memory_space<vmem>>, vector<1x8x32xbf16>
    %17 = vector.shape_cast %16 : vector<1x8x32xbf16> to vector<8x32xbf16>
    %cst_26 = arith.constant dense<0.000000e+00> : vector<8x1024xf32>
    %18 = tpu.matmul %15, %9, %cst_26 {dimension_numbers = #tpu.dot_dimension_numbers<[1], [0], [0], [1], [0, 0, 1, 1], [], []>} : vector<8x32xbf16>, vector<32x1024xbf16>, vector<8x1024xf32> -> vector<8x1024xf32>
    %19 = arith.truncf %18 : vector<8x1024xf32> to vector<8x1024xbf16>
    %cst_27 = arith.constant dense<0.000000e+00> : vector<64x1024xf32>
    %20 = tpu.matmul %11, %19, %cst_27 {dimension_numbers = #tpu.dot_dimension_numbers<[1], [0], [0], [1], [0, 0, 1, 1], [], []>} : vector<64x8xbf16>, vector<8x1024xbf16>, vector<64x1024xf32> -> vector<64x1024xf32>
    %cst_28 = arith.constant dense<0.000000e+00> : vector<8x1024xf32>
    %21 = tpu.matmul %17, %10, %cst_28 {dimension_numbers = #tpu.dot_dimension_numbers<[1], [0], [0], [1], [0, 0, 1, 1], [], []>} : vector<8x32xbf16>, vector<32x1024xbf16>, vector<8x1024xf32> -> vector<8x1024xf32>
    %22 = arith.truncf %21 : vector<8x1024xf32> to vector<8x1024xbf16>
    %cst_29 = arith.constant dense<0.000000e+00> : vector<64x1024xf32>
    %23 = tpu.matmul %12, %22, %cst_29 {dimension_numbers = #tpu.dot_dimension_numbers<[1], [0], [0], [1], [0, 0, 1, 1], [], []>} : vector<64x8xbf16>, vector<8x1024xbf16>, vector<64x1024xf32> -> vector<64x1024xf32>
    %24 = arith.mulf %20, %23 : vector<64x1024xf32>
    %25 = vector.extract_strided_slice %4 {offsets = [0, 0], sizes = [8, 1024], strides = [1, 1]} : vector<16x2048xf32> to vector<8x1024xf32>
    %cst_30 = arith.constant dense<0.000000e+00> : vector<8x64xf32>
    %26 = tpu.matmul %25, %24, %cst_30 {dimension_numbers = #tpu.dot_dimension_numbers<[1], [1], [0], [0], [0, 0, 1, 0], [], []>} : vector<8x1024xf32>, vector<64x1024xf32>, vector<8x64xf32> -> vector<8x64xf32>
    %cst_31 = arith.constant dense<0.000000e+00> : vector<8x64xf32>
    %27 = tpu.matmul %26, %13, %cst_31 {dimension_numbers = #tpu.dot_dimension_numbers<[1], [0], [0], [1], [0, 0, 1, 1], [], []>} : vector<8x64xf32>, vector<64x64xf32>, vector<8x64xf32> -> vector<8x64xf32>
    %28 = vector.broadcast %6 : vector<1x64xf32> to vector<8x64xf32>
    %29 = arith.mulf %26, %28 : vector<8x64xf32>
    %30 = vector.broadcast %8 : vector<1x64xf32> to vector<8x64xf32>
    %31 = arith.mulf %27, %30 : vector<8x64xf32>
    %32 = arith.addf %29, %31 : vector<8x64xf32>
    %33 = vector.extract_strided_slice %4 {offsets = [0, 1024], sizes = [8, 1024], strides = [1, 1]} : vector<16x2048xf32> to vector<8x1024xf32>
    %cst_32 = arith.constant dense<0.000000e+00> : vector<8x64xf32>
    %34 = tpu.matmul %33, %24, %cst_32 {dimension_numbers = #tpu.dot_dimension_numbers<[1], [1], [0], [0], [0, 0, 1, 0], [], []>} : vector<8x1024xf32>, vector<64x1024xf32>, vector<8x64xf32> -> vector<8x64xf32>
    %cst_33 = arith.constant dense<0.000000e+00> : vector<8x64xf32>
    %35 = tpu.matmul %34, %13, %cst_33 {dimension_numbers = #tpu.dot_dimension_numbers<[1], [0], [0], [1], [0, 0, 1, 1], [], []>} : vector<8x64xf32>, vector<64x64xf32>, vector<8x64xf32> -> vector<8x64xf32>
    %36 = vector.broadcast %6 : vector<1x64xf32> to vector<8x64xf32>
    %37 = arith.mulf %34, %36 : vector<8x64xf32>
    %38 = vector.broadcast %8 : vector<1x64xf32> to vector<8x64xf32>
    %39 = arith.mulf %35, %38 : vector<8x64xf32>
    %40 = arith.addf %37, %39 : vector<8x64xf32>
    %41 = tpu.concatenate %32, %40 in 1 : vector<8x64xf32>, vector<8x64xf32> -> vector<8x128xf32>
    %c0_34 = arith.constant 0 : index
    %c0_35 = arith.constant 0 : index
    %c0_36 = arith.constant 0 : index
    %c0_37 = arith.constant 0 : index
    %42 = vector.load %arg14[%c0_34, %c0_35, %c0_36, %c0_37] : memref<1x2x8x128xf32, #tpu.memory_space<vmem>>, vector<1x1x8x128xf32>
    %43 = vector.shape_cast %42 : vector<1x1x8x128xf32> to vector<8x128xf32>
    %44 = vector.shape_cast %41 : vector<8x128xf32> to vector<1x1x8x128xf32>
    tpu.vector_store %arg14[%c0_34, %c0_35, %c0_36, %c0_37], %44 {strides = array<i32>} : memref<1x2x8x128xf32, #tpu.memory_space<vmem>>, vector<1x1x8x128xf32>,
    %c0_38 = arith.constant 0 : index
    %c8 = arith.constant 8 : index
    %c0_39 = arith.constant 0 : index
    %45 = vector.load %arg4[%c0_38, %c8, %c0_39] : memref<1x16x32xbf16, #tpu.memory_space<vmem>>, vector<1x8x32xbf16>
    %46 = vector.shape_cast %45 : vector<1x8x32xbf16> to vector<8x32xbf16>
    %c0_40 = arith.constant 0 : index
    %c8_41 = arith.constant 8 : index
    %c0_42 = arith.constant 0 : index
    %47 = vector.load %arg5[%c0_40, %c8_41, %c0_42] : memref<1x16x32xbf16, #tpu.memory_space<vmem>>, vector<1x8x32xbf16>
    %48 = vector.shape_cast %47 : vector<1x8x32xbf16> to vector<8x32xbf16>
    %cst_43 = arith.constant dense<0.000000e+00> : vector<8x1024xf32>
    %49 = tpu.matmul %46, %9, %cst_43 {dimension_numbers = #tpu.dot_dimension_numbers<[1], [0], [0], [1], [0, 0, 1, 1], [], []>} : vector<8x32xbf16>, vector<32x1024xbf16>, vector<8x1024xf32> -> vector<8x1024xf32>
    %50 = arith.truncf %49 : vector<8x1024xf32> to vector<8x1024xbf16>
    %cst_44 = arith.constant dense<0.000000e+00> : vector<64x1024xf32>
    %51 = tpu.matmul %11, %50, %cst_44 {dimension_numbers = #tpu.dot_dimension_numbers<[1], [0], [0], [1], [0, 0, 1, 1], [], []>} : vector<64x8xbf16>, vector<8x1024xbf16>, vector<64x1024xf32> -> vector<64x1024xf32>
    %cst_45 = arith.constant dense<0.000000e+00> : vector<8x1024xf32>
    %52 = tpu.matmul %48, %10, %cst_45 {dimension_numbers = #tpu.dot_dimension_numbers<[1], [0], [0], [1], [0, 0, 1, 1], [], []>} : vector<8x32xbf16>, vector<32x1024xbf16>, vector<8x1024xf32> -> vector<8x1024xf32>
    %53 = arith.truncf %52 : vector<8x1024xf32> to vector<8x1024xbf16>
    %cst_46 = arith.constant dense<0.000000e+00> : vector<64x1024xf32>
    %54 = tpu.matmul %12, %53, %cst_46 {dimension_numbers = #tpu.dot_dimension_numbers<[1], [0], [0], [1], [0, 0, 1, 1], [], []>} : vector<64x8xbf16>, vector<8x1024xbf16>, vector<64x1024xf32> -> vector<64x1024xf32>
    %55 = arith.mulf %51, %54 : vector<64x1024xf32>
    %56 = vector.extract_strided_slice %4 {offsets = [8, 0], sizes = [8, 1024], strides = [1, 1]} : vector<16x2048xf32> to vector<8x1024xf32>
    %cst_47 = arith.constant dense<0.000000e+00> : vector<8x64xf32>
    %57 = tpu.matmul %56, %55, %cst_47 {dimension_numbers = #tpu.dot_dimension_numbers<[1], [1], [0], [0], [0, 0, 1, 0], [], []>} : vector<8x1024xf32>, vector<64x1024xf32>, vector<8x64xf32> -> vector<8x64xf32>
    %cst_48 = arith.constant dense<0.000000e+00> : vector<8x64xf32>
    %58 = tpu.matmul %57, %13, %cst_48 {dimension_numbers = #tpu.dot_dimension_numbers<[1], [0], [0], [1], [0, 0, 1, 1], [], []>} : vector<8x64xf32>, vector<64x64xf32>, vector<8x64xf32> -> vector<8x64xf32>
    %59 = vector.broadcast %6 : vector<1x64xf32> to vector<8x64xf32>
    %60 = arith.mulf %57, %59 : vector<8x64xf32>
    %61 = vector.broadcast %8 : vector<1x64xf32> to vector<8x64xf32>
    %62 = arith.mulf %58, %61 : vector<8x64xf32>
    %63 = arith.addf %60, %62 : vector<8x64xf32>
    %64 = vector.extract_strided_slice %4 {offsets = [8, 1024], sizes = [8, 1024], strides = [1, 1]} : vector<16x2048xf32> to vector<8x1024xf32>
    %cst_49 = arith.constant dense<0.000000e+00> : vector<8x64xf32>
    %65 = tpu.matmul %64, %55, %cst_49 {dimension_numbers = #tpu.dot_dimension_numbers<[1], [1], [0], [0], [0, 0, 1, 0], [], []>} : vector<8x1024xf32>, vector<64x1024xf32>, vector<8x64xf32> -> vector<8x64xf32>
    %cst_50 = arith.constant dense<0.000000e+00> : vector<8x64xf32>
    %66 = tpu.matmul %65, %13, %cst_50 {dimension_numbers = #tpu.dot_dimension_numbers<[1], [0], [0], [1], [0, 0, 1, 1], [], []>} : vector<8x64xf32>, vector<64x64xf32>, vector<8x64xf32> -> vector<8x64xf32>
    %67 = vector.broadcast %6 : vector<1x64xf32> to vector<8x64xf32>
    %68 = arith.mulf %65, %67 : vector<8x64xf32>
    %69 = vector.broadcast %8 : vector<1x64xf32> to vector<8x64xf32>
    %70 = arith.mulf %66, %69 : vector<8x64xf32>
    %71 = arith.addf %68, %70 : vector<8x64xf32>
    %72 = tpu.concatenate %63, %71 in 1 : vector<8x64xf32>, vector<8x64xf32> -> vector<8x128xf32>
    %c0_51 = arith.constant 0 : index
    %c1_52 = arith.constant 1 : index
    %c0_53 = arith.constant 0 : index
    %c0_54 = arith.constant 0 : index
    %73 = vector.load %arg14[%c0_51, %c1_52, %c0_53, %c0_54] : memref<1x2x8x128xf32, #tpu.memory_space<vmem>>, vector<1x1x8x128xf32>
    %74 = vector.shape_cast %73 : vector<1x1x8x128xf32> to vector<8x128xf32>
    %75 = vector.shape_cast %72 : vector<8x128xf32> to vector<1x1x8x128xf32>
    tpu.vector_store %arg14[%c0_51, %c1_52, %c0_53, %c0_54], %75 {strides = array<i32>} : memref<1x2x8x128xf32, #tpu.memory_space<vmem>>, vector<1x1x8x128xf32>,
    return
  }
  func.func @transform_0(%arg0: i32, %arg1: memref<6xi32, #tpu.memory_space<smem>>, %arg2: memref<6xi32, #tpu.memory_space<smem>>, %arg3: memref<6xi32, #tpu.memory_space<smem>>) -> (i32, i32, i32) {
    %0 = arith.index_cast %arg0 : i32 to index
    %1 = memref.load %arg1[%0] : memref<6xi32, #tpu.memory_space<smem>>
    %c0_i32 = arith.constant 0 : i32
    %c0_i32_0 = arith.constant 0 : i32
    %c0_i32_1 = arith.constant 0 : i32
    return %1, %c0_i32, %c0_i32_0 : i32, i32, i32
  }
  func.func @transform_1(%arg0: i32, %arg1: memref<6xi32, #tpu.memory_space<smem>>, %arg2: memref<6xi32, #tpu.memory_space<smem>>, %arg3: memref<6xi32, #tpu.memory_space<smem>>) -> (i32, i32, i32) {
    %0 = arith.index_cast %arg0 : i32 to index
    %1 = memref.load %arg2[%0] : memref<6xi32, #tpu.memory_space<smem>>
    %c0_i32 = arith.constant 0 : i32
    %c0_i32_0 = arith.constant 0 : i32
    %c0_i32_1 = arith.constant 0 : i32
    return %1, %c0_i32, %c0_i32_0 : i32, i32, i32
  }
  func.func @transform_2(%arg0: i32, %arg1: memref<6xi32, #tpu.memory_space<smem>>, %arg2: memref<6xi32, #tpu.memory_space<smem>>, %arg3: memref<6xi32, #tpu.memory_space<smem>>) -> (i32, i32, i32) {
    %0 = arith.index_cast %arg0 : i32 to index
    %1 = memref.load %arg3[%0] : memref<6xi32, #tpu.memory_space<smem>>
    %c0_i32 = arith.constant 0 : i32
    %c0_i32_0 = arith.constant 0 : i32
    %c0_i32_1 = arith.constant 0 : i32
    return %1, %c0_i32, %c0_i32_0 : i32, i32, i32
  }
  func.func @transform_3(%arg0: i32, %arg1: memref<6xi32, #tpu.memory_space<smem>>, %arg2: memref<6xi32, #tpu.memory_space<smem>>, %arg3: memref<6xi32, #tpu.memory_space<smem>>) -> (i32, i32, i32) {
    %c0_i32 = arith.constant 0 : i32
    %c0_i32_0 = arith.constant 0 : i32
    %c0_i32_1 = arith.constant 0 : i32
    return %arg0, %c0_i32, %c0_i32_0 : i32, i32, i32
  }
  func.func @transform_4(%arg0: i32, %arg1: memref<6xi32, #tpu.memory_space<smem>>, %arg2: memref<6xi32, #tpu.memory_space<smem>>, %arg3: memref<6xi32, #tpu.memory_space<smem>>) -> (i32, i32) {
    %c0_i32 = arith.constant 0 : i32
    %c0_i32_0 = arith.constant 0 : i32
    %c0_i32_1 = arith.constant 0 : i32
    return %c0_i32, %c0_i32_0 : i32, i32
  }
  func.func @transform_5(%arg0: i32, %arg1: memref<6xi32, #tpu.memory_space<smem>>, %arg2: memref<6xi32, #tpu.memory_space<smem>>, %arg3: memref<6xi32, #tpu.memory_space<smem>>) -> (i32, i32) {
    %c0_i32 = arith.constant 0 : i32
    %c0_i32_0 = arith.constant 0 : i32
    %c0_i32_1 = arith.constant 0 : i32
    return %c0_i32, %c0_i32_0 : i32, i32
  }
  func.func @transform_6(%arg0: i32, %arg1: memref<6xi32, #tpu.memory_space<smem>>, %arg2: memref<6xi32, #tpu.memory_space<smem>>, %arg3: memref<6xi32, #tpu.memory_space<smem>>) -> (i32, i32) {
    %c0_i32 = arith.constant 0 : i32
    %c0_i32_0 = arith.constant 0 : i32
    %c0_i32_1 = arith.constant 0 : i32
    return %c0_i32, %c0_i32_0 : i32, i32
  }
  func.func @transform_7(%arg0: i32, %arg1: memref<6xi32, #tpu.memory_space<smem>>, %arg2: memref<6xi32, #tpu.memory_space<smem>>, %arg3: memref<6xi32, #tpu.memory_space<smem>>) -> (i32, i32) {
    %c0_i32 = arith.constant 0 : i32
    %c0_i32_0 = arith.constant 0 : i32
    %c0_i32_1 = arith.constant 0 : i32
    return %c0_i32, %c0_i32_0 : i32, i32
  }
  func.func @transform_8(%arg0: i32, %arg1: memref<6xi32, #tpu.memory_space<smem>>, %arg2: memref<6xi32, #tpu.memory_space<smem>>, %arg3: memref<6xi32, #tpu.memory_space<smem>>) -> (i32, i32) {
    %c0_i32 = arith.constant 0 : i32
    %c0_i32_0 = arith.constant 0 : i32
    %c0_i32_1 = arith.constant 0 : i32
    return %c0_i32, %c0_i32_0 : i32, i32
  }
  func.func @transform_9(%arg0: i32, %arg1: memref<6xi32, #tpu.memory_space<smem>>, %arg2: memref<6xi32, #tpu.memory_space<smem>>, %arg3: memref<6xi32, #tpu.memory_space<smem>>) -> (i32, i32, i32) {
    %c0_i32 = arith.constant 0 : i32
    %c0_i32_0 = arith.constant 0 : i32
    %c0_i32_1 = arith.constant 0 : i32
    return %arg0, %c0_i32, %c0_i32_0 : i32, i32, i32
  }
  func.func @transform_10(%arg0: i32, %arg1: memref<6xi32, #tpu.memory_space<smem>>, %arg2: memref<6xi32, #tpu.memory_space<smem>>, %arg3: memref<6xi32, #tpu.memory_space<smem>>) -> (i32, i32, i32, i32) {
    %c0_i32 = arith.constant 0 : i32
    %c0_i32_0 = arith.constant 0 : i32
    %c0_i32_1 = arith.constant 0 : i32
    %c0_i32_2 = arith.constant 0 : i32
    return %arg0, %c0_i32, %c0_i32_0, %c0_i32_1 : i32, i32, i32, i32
  }
}

</mosaic_0001>

<llo_original>
// kernel: srl_second_order_scorer.2
$region0: #{srl_second_order_scorer.2}
  #allocation0 [shape = 'u32[]', space=smem, size = 0x4, offset = 0x4, fixed_abs, tag = 'smem constant byte address 0x4 - core index']
  #allocation1 [shape = 'u32[144,128]{1,0:T(1,128)}', space=vmem, size = 0x12000, scoped, tag = 'internal scratch']
  %s0 = inlined_call_operand.hbm [shape: f32[16,32], index: 0, kind: input, shape index: {}]
  %s1 = inlined_call_operand.vmem [shape: bf16[32,128], index: 1, kind: input, shape index: {}]
  %s2 = inlined_call_operand.hbm [shape: f32[1,128], index: 2, kind: input, shape index: {}]
  %s3 = inlined_call_operand.vmem [shape: bf16[4,16,32], index: 3, kind: output, shape index: {}]
  %s4 = sld [smem:[#allocation0]]
  $region30: #{srl_second_order_scorer.2} parent=0
    _
  %s6 = ssub.s32 1, %s4
  %s7 = scalar_select 0, %s6, %s4
  $region1: #{srl_second_order_scorer.2} parent=0
    #allocation2 [shape = 'u8[8192]{0}', space=vmem, size = 0x2000, scoped, tag = 'input window, operand 0, single buffered']
    #allocation3 [shape = 's32[1]{0}', space=sflag, size = 0x4, scoped, tag = 'scoped memory for srl_second_order_scorer.2']
    #allocation4 [shape = 'u8[512]{0}', space=vmem, size = 0x400, scoped, tag = 'input window, operand 2, single buffered']
    #allocation5 [shape = 's32[1]{0}', space=sflag, size = 0x4, scoped, tag = 'scoped memory for srl_second_order_scorer.2']
    %8 = vsyncpa [#allocation3], 0
    %9 = vsyncpa [#allocation5], 0
    // Predicated region
    $region2: #{srl_second_order_scorer.2} parent=1 // pred_check
      _
    $region3: #{srl_second_order_scorer.2} parent=1 // pred_check_branch
      %11 = sbr.rel (0) target = $region5
    $region4: #{srl_second_order_scorer.2} parent=1 // pred_region
      %s13 = ssub.s32 256, 256
      %14 = vsyncadd [#allocation3], %s13
      %s15 = sshll.u32 [#allocation2], 4
      %s16 = int_to_ptr.vmem [resolvable:$true] %s15
      %21 = dma.hbm_to_vmem [thread:$0]  %s0, 256, %s16, [#allocation3], 128, 128, 8
    $region5: #{srl_second_order_scorer.2} parent=1 // pred_fallthru
      _
    // Predicated region
    $region6: #{srl_second_order_scorer.2} parent=1 // pred_check
      _
    $region7: #{srl_second_order_scorer.2} parent=1 // pred_check_branch
      %23 = sbr.rel (0) target = $region9
    $region8: #{srl_second_order_scorer.2} parent=1 // pred_region
      _
    $region9: #{srl_second_order_scorer.2} parent=1 // pred_fallthru
      _
    // Predicated region
    $region10: #{srl_second_order_scorer.2} parent=1 // pred_check
      _
    $region11: #{srl_second_order_scorer.2} parent=1 // pred_check_branch
      %25 = sbr.rel (0) target = $region13
    $region12: #{srl_second_order_scorer.2} parent=1 // pred_region
      %s27 = ssub.s32 16, 16
      %28 = vsyncadd [#allocation5], %s27
      %s30 = sshll.u32 [#allocation4], 4
      %s31 = int_to_ptr.vmem [resolvable:$true] %s30
      %33 = dma.hbm_to_vmem [thread:$0]  %s2, 16, %s31, [#allocation5]
    $region13: #{srl_second_order_scorer.2} parent=1 // pred_fallthru
      _
    // Predicated region
    $region14: #{srl_second_order_scorer.2} parent=1 // pred_check
      _
    $region15: #{srl_second_order_scorer.2} parent=1 // pred_check_branch
      %35 = sbr.rel (0) target = $region17
    $region16: #{srl_second_order_scorer.2} parent=1 // pred_region
      %36 = dma.done [#allocation3], 256
    $region17: #{srl_second_order_scorer.2} parent=1 // pred_fallthru
      _
    // Predicated region
    $region18: #{srl_second_order_scorer.2} parent=1 // pred_check
      _
    $region19: #{srl_second_order_scorer.2} parent=1 // pred_check_branch
      %38 = sbr.rel (0) target = $region21
    $region20: #{srl_second_order_scorer.2} parent=1 // pred_region
      %39 = dma.done [#allocation5], 16
    $region21: #{srl_second_order_scorer.2} parent=1 // pred_fallthru
      _
    %v41 = vld [vmem:[#allocation2] sm:$0xff]
    %v42 = vld [vmem:[#allocation2 + $0x8] sm:$0xff]
    %v43 = vpack.c.bf16 %v42, %v41
    %v44 = vld [vmem:[%s1] sm:$0xf]
    %v45 = vld [vmem:[%s1 + $0x4] sm:$0xf]
    %v46 = vld [vmem:[%s1 + $0x8] sm:$0xf]
    %v47 = vld [vmem:[%s1 + $0xc] sm:$0xf]
    %v48 = vld [vmem:[#allocation4] sm:$0x1]
    %v50 = vlaneseq
    %v51 = vshrl.u32 %v50, 7
    %v52 = vsub.s32 0, %v51
    %v53 = vrot.slane %v48, %v52
    %v59 = vunpack.c.l.b16 %v44
    %v60 = vunpack.c.l.b16 %v45
    %v61 = vunpack.c.l.b16 %v46
    %v62 = vunpack.c.l.b16 %v47
    %v63 = vpack.c.b16 %v60, %v59
    %v64 = vpack.c.b16 %v62, %v61
    %vm67 = vcmask 261120
    %v69 = vsel %vm67, %v43, 0
    %71 = vmatprep.subr.bf16.mxu0 0
    %72 = vmatpush1.bf16.msra.mxu0 %v63
    %73 = vmatprep.subr.bf16.mxu0 0
    %74 = vmatpush1.bf16.msra.mxu0 %v64
    %75 = vmatprep.subr.bf16.mxu0 0
    %76 = vmatpush1.bf16.msra.mxu0 0
    %77 = vmatprep.subr.bf16.mxu0 0
    %78 = vmatpush1.bf16.msra.mxu0 0
    %79 = vmatprep.subr.bf16.mxu0 0
    %80 = vmatpush1.bf16.msra.mxu0 0
    %81 = vmatprep.subr.bf16.mxu0 0
    %82 = vmatpush1.bf16.msra.mxu0 0
    %83 = vmatprep.subr.bf16.mxu0 0
    %84 = vmatpush1.bf16.msra.mxu0 0
    %85 = vmatprep.subr.bf16.mxu0 0
    %86 = vmatpush1.bf16.msra.mxu0 0
    %87 = vmatprep.subr.bf16.mxu0 0
    %88 = vmatpush1.bf16.msra.mxu0 0
    %89 = vmatprep.subr.bf16.mxu0 0
    %90 = vmatpush1.bf16.msra.mxu0 0
    %91 = vmatprep.subr.bf16.mxu0 0
    %92 = vmatpush1.bf16.msra.mxu0 0
    %93 = vmatprep.subr.bf16.mxu0 0
    %94 = vmatpush1.bf16.msra.mxu0 0
    %95 = vmatprep.subr.bf16.mxu0 0
    %96 = vmatpush1.bf16.msra.mxu0 0
    %97 = vmatprep.subr.bf16.mxu0 0
    %98 = vmatpush1.bf16.msra.mxu0 0
    %99 = vmatprep.subr.bf16.mxu0 0
    %100 = vmatpush1.bf16.msra.mxu0 0
    %101 = vmatprep.subr.bf16.mxu0 0
    %102 = vmatpush1.bf16.msra.mxu0 0
    %103 = vmatprep.mubr.bf16.mxu0 0
    %104 = vmatmul.mubr.bf16.gmra.mrb[0].mxu0 %v69
    %v105 = vpop.f32.mrb[0].mxu0
    %v106 = vadd.f32 %v53, %v105
    %v107 = vpop.f32.mrb[0].mxu0
    %v108 = vpop.f32.mrb[0].mxu0
    %v109 = vadd.f32 %v53, %v108
    %v110 = vpop.f32.mrb[0].mxu0
    %111 = vdwg.mxu0
    %vm112 = vcmp.gt.f32.partialorder %v106, 0.0
    %vm113 = vcmp.gt.f32.partialorder %v109, 0.0
    %v114 = vmul.f32 %v106, 0.1
    %v115 = vmul.f32 %v109, 0.1
    %v116 = vsel %vm112, %v106, %v114
    %v117 = vsel %vm113, %v109, %v115
    %v118 = vpack.c.bf16 %v117, %v116
    %v120 = vunpack.c.l.b16 %v118
    %v121 = vunpack.c.h.b16 %v118
    %v122 = vpack.c.b16 %v120, %v120
    %v123 = vpack.c.b16 %v121, %v121
    %vm126 = vcmask 257024
    %127 = vst.msk [vmem:[%s3] sm:$0xf] %vm126, %v122
    %128 = vst.msk [vmem:[%s3 + $0x4] sm:$0xf] %vm126, %v123
    %129 = vrot.lane.b32.xlu0 %v122, 96
    %v130 = vpop.permute.xlu0 %129
    %131 = vrot.lane.b32.xlu0 %v123, 96
    %v132 = vpop.permute.xlu0 %131
    %s135 = scalar_lea.vmem %s3, 8
    %136 = vst.msk [vmem:[%s135] sm:$0xf] %vm126, %v130
    %137 = vst.msk [vmem:[%s135 + $0x4] sm:$0xf] %vm126, %v132
    %138 = vrot.lane.b32.xlu0 %v122, 64
    %v139 = vpop.permute.xlu0 %138
    %140 = vrot.lane.b32.xlu0 %v123, 64
    %v141 = vpop.permute.xlu0 %140
    %s144 = scalar_lea.vmem %s3, 16
    %145 = vst.msk [vmem:[%s144] sm:$0xf] %vm126, %v139
    %146 = vst.msk [vmem:[%s144 + $0x4] sm:$0xf] %vm126, %v141
    %147 = vrot.lane.b32.xlu0 %v122, 32
    %v148 = vpop.permute.xlu0 %147
    %149 = vrot.lane.b32.xlu0 %v123, 32
    %v150 = vpop.permute.xlu0 %149
    %s153 = scalar_lea.vmem %s3, 24
    %154 = vst.msk [vmem:[%s153] sm:$0xf] %vm126, %v148
    %155 = vst.msk [vmem:[%s153 + $0x4] sm:$0xf] %vm126, %v150
    // Predicated region
    $region22: #{srl_second_order_scorer.2} parent=1 // pred_check
      _
    $region23: #{srl_second_order_scorer.2} parent=1 // pred_check_branch
      %157 = sbr.rel (0) target = $region25
    $region24: #{srl_second_order_scorer.2} parent=1 // pred_region
      _
    $region25: #{srl_second_order_scorer.2} parent=1 // pred_fallthru
      _
    // Predicated region
    $region26: #{srl_second_order_scorer.2} parent=1 // pred_check
      _
    $region27: #{srl_second_order_scorer.2} parent=1 // pred_check_branch
      %159 = sbr.rel (0) target = $region29
    $region28: #{srl_second_order_scorer.2} parent=1 // pred_region
      _
    $region29: #{srl_second_order_scorer.2} parent=1 // pred_fallthru
      _
    %160 = vsyncpa [#allocation3], 1
    %161 = vsyncpa [#allocation5], 1

// kernel: srl_second_order_scorer.3
$region0: #{srl_second_order_scorer.3}
  #allocation0 [shape = 'u32[]', space=smem, size = 0x4, offset = 0x4, fixed_abs, tag = 'smem constant byte address 0x4 - core index']
  #allocation1 [shape = 'u32[144,128]{1,0:T(1,128)}', space=vmem, size = 0x12000, scoped, tag = 'internal scratch']
  #allocation2 [shape = 's32[1]{0}', space=sflag, size = 0x4, scoped, tag = 'scoped memory for srl_second_order_scorer.3']
  #allocation3 [shape = 'u8[512]{0}', space=smem, size = 0x200, scoped, tag = 'prefetched SMEM operand 0']
  #allocation4 [shape = 'u8[512]{0}', space=smem, size = 0x200, scoped, tag = 'prefetched SMEM operand 1']
  #allocation5 [shape = 'u8[512]{0}', space=smem, size = 0x200, scoped, tag = 'prefetched SMEM operand 2']
  %s0 = inlined_call_operand.vmem [shape: s32[6], index: 0, kind: input, shape index: {}]
  %s1 = inlined_call_operand.vmem [shape: s32[6], index: 1, kind: input, shape index: {}]
  %s2 = inlined_call_operand.vmem [shape: s32[6], index: 2, kind: input, shape index: {}]
  %s3 = inlined_call_operand.vmem [shape: bf16[4,16,32], index: 3, kind: input, shape index: {}, may-alias: {3,4,5}]
  %s4 = inlined_call_operand.vmem [shape: bf16[4,16,32], index: 4, kind: input, shape index: {}, may-alias: {3,4,5}]
  %s5 = inlined_call_operand.vmem [shape: bf16[4,16,32], index: 5, kind: input, shape index: {}, may-alias: {3,4,5}]
  %s6 = inlined_call_operand.hbm [shape: bf16[6,32,2048], index: 6, kind: input, shape index: {}]
  %s7 = inlined_call_operand.vmem [shape: bf16[32,1024], index: 7, kind: input, shape index: {}]
  %s8 = inlined_call_operand.hbm [shape: bf16[32,1024], index: 8, kind: input, shape index: {}]
  %s9 = inlined_call_operand.vmem [shape: bf16[64,8], index: 9, kind: input, shape index: {}]
  %s10 = inlined_call_operand.vmem [shape: bf16[64,8], index: 10, kind: input, shape index: {}]
  %s11 = inlined_call_operand.hbm [shape: f32[64,64], index: 11, kind: input, shape index: {}]
  %s12 = inlined_call_operand.vmem [shape: f32[6,2,64], index: 12, kind: input, shape index: {}]
  %s13 = inlined_call_operand.vmem [shape: f32[6,2,8,128], index: 13, kind: output, shape index: {}]
  %s14 = sld [smem:[#allocation0]]
  $region85: #{srl_second_order_scorer.3} parent=0
    _
  %s16 = ssub.s32 1, %s14
  %s17 = scalar_select 0, %s16, %s14
  %s18 = sshll.u32 %s0, 4
  %s19 = int_to_ptr.vmem [resolvable:$true] %s18
  %21 = dma.vmem_to_smem %s19, 16, [#allocation3], [#allocation2]
  %s22 = sshll.u32 %s1, 4
  %s23 = int_to_ptr.vmem [resolvable:$true] %s22
  %25 = dma.vmem_to_smem %s23, 16, [#allocation4], [#allocation2]
  %s26 = sshll.u32 %s2, 4
  %s27 = int_to_ptr.vmem [resolvable:$true] %s26
  %29 = dma.vmem_to_smem %s27, 16, [#allocation5], [#allocation2]
  %30 = dma.done [#allocation2], 48
  %31 = sfence
  $region1: #{srl_second_order_scorer.3} parent=0
    #allocation6 [shape = 'u8[262144]{0}', space=vmem, size = 0x40000, scoped, tag = 'input window, operand 6']
    #allocation7 [shape = 's32[2]{0}', space=sflag, size = 0x8, scoped, tag = 'scoped memory for srl_second_order_scorer.3']
    #allocation8 [shape = 'u8[65536]{0}', space=vmem, size = 0x10000, scoped, tag = 'input window, operand 8, single buffered']
    #allocation9 [shape = 's32[1]{0}', space=sflag, size = 0x4, scoped, tag = 'scoped memory for srl_second_order_scorer.3']
    #allocation10 [shape = 'u8[32768]{0}', space=vmem, size = 0x8000, scoped, tag = 'input window, operand 11, single buffered']
    %32 = vsyncpa [#allocation7], 0
    %s33 = scalar_lea.sflag [#allocation7], 1
    %34 = vsyncpa %s33, 0
    %35 = vsyncpa [#allocation9], 0
    loop: start=0, step=1, limit=8
    $region2: #{srl_second_order_scorer.3} parent=1 // loop_pre_header
      _
    $region3: #{srl_second_order_scorer.3} parent=1 // loop_header
      %s37 = sphi 0, %s41
      %p38 = scmp.ge.s32.totalorder %s37, 8
      %s49 = sphi 0, %s51
      %s52 = sphi 0, %s49
      %s53 = sphi 0, %s52
      %s69 = sphi 0, %s53
      %s77 = sphi 0, %s79
      %s80 = sphi 0, %s77
      %s81 = sphi 0, %s80
      %s97 = sphi 0, %s81
      %s105 = sphi 0, %s107
      %s108 = sphi 0, %s105
      %s109 = sphi 0, %s108
      %s125 = sphi 0, %s109
      %s131 = sphi 0, %s133
      %s134 = sphi 0, %s131
      %s135 = sphi 0, %s134
      %s151 = sphi 0, %s135
      %s155 = sphi 0, %s155
      %s157 = sphi 0, %s155
      %s158 = sphi 0, %s157
      %s172 = sphi 0, %s158
      %s176 = sphi 0, %s176
      %s178 = sphi 0, %s176
      %s179 = sphi 0, %s178
      %s193 = sphi 0, %s179
      %s197 = sphi 0, %s197
      %s199 = sphi 0, %s197
      %s200 = sphi 0, %s199
      %s214 = sphi 0, %s200
      %s218 = sphi 0, %s218
      %s220 = sphi 0, %s218
      %s221 = sphi 0, %s220
      %s235 = sphi 0, %s221
      %s239 = sphi 0, %s239
      %s241 = sphi 0, %s239
      %s242 = sphi 0, %s241
      %s256 = sphi 0, %s242
      %s262 = sphi 0, %s264
      %s265 = sphi 0, %s262
      %s266 = sphi 0, %s265
      %s282 = sphi 0, %s266
      %s288 = sphi 0, %s290
      %s291 = sphi 0, %s288
      %s292 = sphi 0, %s291
      %s308 = sphi 0, %s292
    $region4: #{srl_second_order_scorer.3} parent=1 // loop_header_branch
      %40 = sbr.rel (%p38) target = $region8
    $region5: #{srl_second_order_scorer.3} parent=1 // loop_body
      %s42 = ssub.s32 %s37, 1
      %s43 = ssub.s32 %s37, 2
      %s44 = sadd.s32 %s37, 1
      %s45 = sld [smem:[#allocation3 + %s37]]
      %s46 = sld [smem:[#allocation3 + %s44]]
      %s47 = ssub.s32 %s45, %s46
      %p48 = scmp.eq.s32.totalorder %s47, 0
      %s50 = sadd.s32 %s49, 1
      %s51 = scalar_select %p48, %s49, %s50
      %p54 = pneg %p48
      %p55 = scmp.eq.s32.totalorder %s37, 5
      %p56 = por %p54, %p55
      %p57 = scmp.ne.s32.totalorder %s49, %s52
      %p58 = scmp.eq.s32.totalorder %s37, 0
      %p59 = por %p57, %p58
      %p60 = scmp.ne.s32.totalorder %s49, %s52
      %p61 = scmp.eq.s32.totalorder %s42, 5
      %p62 = por %p60, %p61
      %p63 = scmp.ne.s32.totalorder %s52, %s53
      %p64 = scmp.eq.s32.totalorder %s42, 0
      %p65 = por %p63, %p64
      %p66 = scmp.ne.s32.totalorder %s52, %s53
      %p67 = scmp.eq.s32.totalorder %s43, 5
      %p68 = por %p66, %p67
      %p70 = scmp.ne.s32.totalorder %s53, %s69
      %p71 = scmp.eq.s32.totalorder %s43, 0
      %p72 = por %p70, %p71
      %s73 = sld [smem:[#allocation4 + %s37]]
      %s74 = sld [smem:[#allocation4 + %s44]]
      %s75 = ssub.s32 %s73, %s74
      %p76 = scmp.eq.s32.totalorder %s75, 0
      %s78 = sadd.s32 %s77, 1
      %s79 = scalar_select %p76, %s77, %s78
      %p82 = pneg %p76
      %p83 = scmp.eq.s32.totalorder %s37, 5
      %p84 = por %p82, %p83
      %p85 = scmp.ne.s32.totalorder %s77, %s80
      %p86 = scmp.eq.s32.totalorder %s37, 0
      %p87 = por %p85, %p86
      %p88 = scmp.ne.s32.totalorder %s77, %s80
      %p89 = scmp.eq.s32.totalorder %s42, 5
      %p90 = por %p88, %p89
      %p91 = scmp.ne.s32.totalorder %s80, %s81
      %p92 = scmp.eq.s32.totalorder %s42, 0
      %p93 = por %p91, %p92
      %p94 = scmp.ne.s32.totalorder %s80, %s81
      %p95 = scmp.eq.s32.totalorder %s43, 5
      %p96 = por %p94, %p95
      %p98 = scmp.ne.s32.totalorder %s81, %s97
      %p99 = scmp.eq.s32.totalorder %s43, 0
      %p100 = por %p98, %p99
      %s101 = sld [smem:[#allocation5 + %s37]]
      %s102 = sld [smem:[#allocation5 + %s44]]
      %s103 = ssub.s32 %s101, %s102
      %p104 = scmp.eq.s32.totalorder %s103, 0
      %s106 = sadd.s32 %s105, 1
      %s107 = scalar_select %p104, %s105, %s106
      %p110 = pneg %p104
      %p111 = scmp.eq.s32.totalorder %s37, 5
      %p112 = por %p110, %p111
      %p113 = scmp.ne.s32.totalorder %s105, %s108
      %p114 = scmp.eq.s32.totalorder %s37, 0
      %p115 = por %p113, %p114
      %p116 = scmp.ne.s32.totalorder %s105, %s108
      %p117 = scmp.eq.s32.totalorder %s42, 5
      %p118 = por %p116, %p117
      %p119 = scmp.ne.s32.totalorder %s108, %s109
      %p120 = scmp.eq.s32.totalorder %s42, 0
      %p121 = por %p119, %p120
      %p122 = scmp.ne.s32.totalorder %s108, %s109
      %p123 = scmp.eq.s32.totalorder %s43, 5
      %p124 = por %p122, %p123
      %p126 = scmp.ne.s32.totalorder %s109, %s125
      %p127 = scmp.eq.s32.totalorder %s43, 0
      %p128 = por %p126, %p127
      %s129 = ssub.s32 %s37, %s44
      %p130 = scmp.eq.s32.totalorder %s129, 0
      %s132 = sadd.s32 %s131, 1
      %s133 = scalar_select %p130, %s131, %s132
      %p136 = pneg %p130
      %p137 = scmp.eq.s32.totalorder %s37, 5
      %p138 = por %p136, %p137
      %p139 = scmp.ne.s32.totalorder %s131, %s134
      %p140 = scmp.eq.s32.totalorder %s37, 0
      %p141 = por %p139, %p140
      %p142 = scmp.ne.s32.totalorder %s131, %s134
      %p143 = scmp.eq.s32.totalorder %s42, 5
      %p144 = por %p142, %p143
      %p145 = scmp.ne.s32.totalorder %s134, %s135
      %p146 = scmp.eq.s32.totalorder %s42, 0
      %p147 = por %p145, %p146
      %p148 = scmp.ne.s32.totalorder %s134, %s135
      %p149 = scmp.eq.s32.totalorder %s43, 5
      %p150 = por %p148, %p149
      %p152 = scmp.ne.s32.totalorder %s135, %s151
      %p153 = scmp.eq.s32.totalorder %s43, 0
      %p154 = por %p152, %p153
      %s156 = sadd.s32 %s155, 1
      %p159 = scmp.eq.s32.totalorder %s37, 5
      %p160 = scmp.ne.s32.totalorder %s155, %s157
      %p161 = scmp.eq.s32.totalorder %s37, 0
      %p162 = por %p160, %p161
      %p163 = scmp.ne.s32.totalorder %s155, %s157
      %p164 = scmp.eq.s32.totalorder %s42, 5
      %p165 = por %p163, %p164
      %p166 = scmp.ne.s32.totalorder %s157, %s158
      %p167 = scmp.eq.s32.totalorder %s42, 0
      %p168 = por %p166, %p167
      %p169 = scmp.ne.s32.totalorder %s157, %s158
      %p170 = scmp.eq.s32.totalorder %s43, 5
      %p171 = por %p169, %p170
      %p173 = scmp.ne.s32.totalorder %s158, %s172
      %p174 = scmp.eq.s32.totalorder %s43, 0
      %p175 = por %p173, %p174
      %s177 = sadd.s32 %s176, 1
      %p180 = scmp.eq.s32.totalorder %s37, 5
      %p181 = scmp.ne.s32.totalorder %s176, %s178
      %p182 = scmp.eq.s32.totalorder %s37, 0
      %p183 = por %p181, %p182
      %p184 = scmp.ne.s32.totalorder %s176, %s178
      %p185 = scmp.eq.s32.totalorder %s42, 5
      %p186 = por %p184, %p185
      %p187 = scmp.ne.s32.totalorder %s178, %s179
      %p188 = scmp.eq.s32.totalorder %s42, 0
      %p189 = por %p187, %p188
      %p190 = scmp.ne.s32.totalorder %s178, %s179
      %p191 = scmp.eq.s32.totalorder %s43, 5
      %p192 = por %p190, %p191
      %p194 = scmp.ne.s32.totalorder %s179, %s193
      %p195 = scmp.eq.s32.totalorder %s43, 0
      %p196 = por %p194, %p195
      %s198 = sadd.s32 %s197, 1
      %p201 = scmp.eq.s32.totalorder %s37, 5
      %p202 = scmp.ne.s32.totalorder %s197, %s199
      %p203 = scmp.eq.s32.totalorder %s37, 0
      %p204 = por %p202, %p203
      %p205 = scmp.ne.s32.totalorder %s197, %s199
      %p206 = scmp.eq.s32.totalorder %s42, 5
      %p207 = por %p205, %p206
      %p208 = scmp.ne.s32.totalorder %s199, %s200
      %p209 = scmp.eq.s32.totalorder %s42, 0
      %p210 = por %p208, %p209
      %p211 = scmp.ne.s32.totalorder %s199, %s200
      %p212 = scmp.eq.s32.totalorder %s43, 5
      %p213 = por %p211, %p212
      %p215 = scmp.ne.s32.totalorder %s200, %s214
      %p216 = scmp.eq.s32.totalorder %s43, 0
      %p217 = por %p215, %p216
      %s219 = sadd.s32 %s218, 1
      %p222 = scmp.eq.s32.totalorder %s37, 5
      %p223 = scmp.ne.s32.totalorder %s218, %s220
      %p224 = scmp.eq.s32.totalorder %s37, 0
      %p225 = por %p223, %p224
      %p226 = scmp.ne.s32.totalorder %s218, %s220
      %p227 = scmp.eq.s32.totalorder %s42, 5
      %p228 = por %p226, %p227
      %p229 = scmp.ne.s32.totalorder %s220, %s221
      %p230 = scmp.eq.s32.totalorder %s42, 0
      %p231 = por %p229, %p230
      %p232 = scmp.ne.s32.totalorder %s220, %s221
      %p233 = scmp.eq.s32.totalorder %s43, 5
      %p234 = por %p232, %p233
      %p236 = scmp.ne.s32.totalorder %s221, %s235
      %p237 = scmp.eq.s32.totalorder %s43, 0
      %p238 = por %p236, %p237
      %s240 = sadd.s32 %s239, 1
      %p243 = scmp.eq.s32.totalorder %s37, 5
      %p244 = scmp.ne.s32.totalorder %s239, %s241
      %p245 = scmp.eq.s32.totalorder %s37, 0
      %p246 = por %p244, %p245
      %p247 = scmp.ne.s32.totalorder %s239, %s241
      %p248 = scmp.eq.s32.totalorder %s42, 5
      %p249 = por %p247, %p248
      %p250 = scmp.ne.s32.totalorder %s241, %s242
      %p251 = scmp.eq.s32.totalorder %s42, 0
      %p252 = por %p250, %p251
      %p253 = scmp.ne.s32.totalorder %s241, %s242
      %p254 = scmp.eq.s32.totalorder %s43, 5
      %p255 = por %p253, %p254
      %p257 = scmp.ne.s32.totalorder %s242, %s256
      %p258 = scmp.eq.s32.totalorder %s43, 0
      %p259 = por %p257, %p258
      %s260 = ssub.s32 %s37, %s44
      %p261 = scmp.eq.s32.totalorder %s260, 0
      %s263 = sadd.s32 %s262, 1
      %s264 = scalar_select %p261, %s262, %s263
      %p267 = pneg %p261
      %p268 = scmp.eq.s32.totalorder %s37, 5
      %p269 = por %p267, %p268
      %p270 = scmp.ne.s32.totalorder %s262, %s265
      %p271 = scmp.eq.s32.totalorder %s37, 0
      %p272 = por %p270, %p271
      %p273 = scmp.ne.s32.totalorder %s262, %s265
      %p274 = scmp.eq.s32.totalorder %s42, 5
      %p275 = por %p273, %p274
      %p276 = scmp.ne.s32.totalorder %s265, %s266
      %p277 = scmp.eq.s32.totalorder %s42, 0
      %p278 = por %p276, %p277
      %p279 = scmp.ne.s32.totalorder %s265, %s266
      %p280 = scmp.eq.s32.totalorder %s43, 5
      %p281 = por %p279, %p280
      %p283 = scmp.ne.s32.totalorder %s266, %s282
      %p284 = scmp.eq.s32.totalorder %s43, 0
      %p285 = por %p283, %p284
      %s286 = ssub.s32 %s37, %s44
      %p287 = scmp.eq.s32.totalorder %s286, 0
      %s289 = sadd.s32 %s288, 1
      %s290 = scalar_select %p287, %s288, %s289
      %p293 = pneg %p287
      %p294 = scmp.eq.s32.totalorder %s37, 5
      %p295 = por %p293, %p294
      %p296 = scmp.ne.s32.totalorder %s288, %s291
      %p297 = scmp.eq.s32.totalorder %s37, 0
      %p298 = por %p296, %p297
      %p299 = scmp.ne.s32.totalorder %s288, %s291
      %p300 = scmp.eq.s32.totalorder %s42, 5
      %p301 = por %p299, %p300
      %p302 = scmp.ne.s32.totalorder %s291, %s292
      %p303 = scmp.eq.s32.totalorder %s42, 0
      %p304 = por %p302, %p303
      %p305 = scmp.ne.s32.totalorder %s291, %s292
      %p306 = scmp.eq.s32.totalorder %s43, 5
      %p307 = por %p305, %p306
      %p309 = scmp.ne.s32.totalorder %s292, %s308
      %p310 = scmp.eq.s32.totalorder %s43, 0
      %p311 = por %p309, %p310
      %p312 = scmp.le.s32.totalorder 1, %s37
      %p313 = scmp.lt.s32.totalorder %s37, 7
      %p314 = pnand %p312, %p313
      %p315 = pneg %p314
      // Predicated region
      $region9: #{srl_second_order_scorer.3} parent=5 // pred_check
        _
      $region10: #{srl_second_order_scorer.3} parent=5 // pred_check_branch
        %317 = sbr.rel (%p314) target = $region12
      $region11: #{srl_second_order_scorer.3} parent=5 // pred_region
        %s318 = ssub.s32 %s37, 1
        // Predicated region
        $region13: #{srl_second_order_scorer.3} parent=11 // pred_check
          %p319 = pneg %p168
        $region14: #{srl_second_order_scorer.3} parent=11 // pred_check_branch
          %321 = sbr.rel (%p319) target = $region16
        $region15: #{srl_second_order_scorer.3} parent=11 // pred_region
          _
        $region16: #{srl_second_order_scorer.3} parent=11 // pred_fallthru
          _
        // Predicated region
        $region17: #{srl_second_order_scorer.3} parent=11 // pred_check
          %p322 = pneg %p189
        $region18: #{srl_second_order_scorer.3} parent=11 // pred_check_branch
          %324 = sbr.rel (%p322) target = $region20
        $region19: #{srl_second_order_scorer.3} parent=11 // pred_region
          %s326 = ssub.s32 2048, 2048
          %327 = vsyncadd [#allocation9], %s326
          %s328 = sshll.u32 [#allocation8], 4
          %s329 = int_to_ptr.vmem [resolvable:$true] %s328
          %334 = dma.hbm_to_vmem [thread:$0]  %s8, 2048, %s329, [#allocation9], 512, 512, 32
        $region20: #{srl_second_order_scorer.3} parent=11 // pred_fallthru
          _
        // Predicated region
        $region21: #{srl_second_order_scorer.3} parent=11 // pred_check
          %p335 = pneg %p210
        $region22: #{srl_second_order_scorer.3} parent=11 // pred_check_branch
          %337 = sbr.rel (%p335) target = $region24
        $region23: #{srl_second_order_scorer.3} parent=11 // pred_region
          _
        $region24: #{srl_second_order_scorer.3} parent=11 // pred_fallthru
          _
        // Predicated region
        $region25: #{srl_second_order_scorer.3} parent=11 // pred_check
          %p338 = pneg %p231
        $region26: #{srl_second_order_scorer.3} parent=11 // pred_check_branch
          %340 = sbr.rel (%p338) target = $region28
        $region27: #{srl_second_order_scorer.3} parent=11 // pred_region
          _
        $region28: #{srl_second_order_scorer.3} parent=11 // pred_fallthru
          _
        // Predicated region
        $region29: #{srl_second_order_scorer.3} parent=11 // pred_check
          %p341 = pneg %p252
        $region30: #{srl_second_order_scorer.3} parent=11 // pred_check_branch
          %343 = sbr.rel (%p341) target = $region32
        $region31: #{srl_second_order_scorer.3} parent=11 // pred_region
          %s345 = ssub.s32 1024, 1024
          %346 = vsyncadd [#allocation9], %s345
          %s347 = sshll.u32 [#allocation10], 4
          %s348 = int_to_ptr.vmem [resolvable:$true] %s347
          %353 = dma.hbm_to_vmem [thread:$0]  %s11, 1024, %s348, [#allocation9], 128, 128, 8
        $region32: #{srl_second_order_scorer.3} parent=11 // pred_fallthru
          _
      $region12: #{srl_second_order_scorer.3} parent=5 // pred_fallthru
        _
      %p354 = scmp.lt.s32.totalorder %s37, 6
      // Predicated region
      $region33: #{srl_second_order_scorer.3} parent=5 // pred_check
        %p355 = pneg %p354
      $region34: #{srl_second_order_scorer.3} parent=5 // pred_check_branch
        %357 = sbr.rel (%p355) target = $region36
      $region35: #{srl_second_order_scorer.3} parent=5 // pred_region
        // Predicated region
        $region37: #{srl_second_order_scorer.3} parent=35 // pred_check
          %p358 = pneg %p59
        $region38: #{srl_second_order_scorer.3} parent=35 // pred_check_branch
          %360 = sbr.rel (%p358) target = $region40
        $region39: #{srl_second_order_scorer.3} parent=35 // pred_region
          %s361 = sld [smem:[#allocation3 + %s37]]
          %p362 = scmp.lt.s32.totalorder %s361, 3
          %s363 = scalar_select %p362, %s361, 3
          %s364 = smul.addr %s363, 2
          %s365 = smul.addr %s364, 4
          %s366 = scalar_lea.vmem %s3, %s365
          %s367 = sld [smem:[#allocation3 + %s37]]
        $region40: #{srl_second_order_scorer.3} parent=35 // pred_fallthru
          _
        // Predicated region
        $region41: #{srl_second_order_scorer.3} parent=35 // pred_check
          %p368 = pneg %p87
        $region42: #{srl_second_order_scorer.3} parent=35 // pred_check_branch
          %370 = sbr.rel (%p368) target = $region44
        $region43: #{srl_second_order_scorer.3} parent=35 // pred_region
          %s371 = sld [smem:[#allocation4 + %s37]]
          %p372 = scmp.lt.s32.totalorder %s371, 3
          %s373 = scalar_select %p372, %s371, 3
          %s374 = smul.addr %s373, 2
          %s375 = smul.addr %s374, 4
          %s376 = scalar_lea.vmem %s4, %s375
          %s377 = sld [smem:[#allocation4 + %s37]]
        $region44: #{srl_second_order_scorer.3} parent=35 // pred_fallthru
          _
        // Predicated region
        $region45: #{srl_second_order_scorer.3} parent=35 // pred_check
          %p378 = pneg %p115
        $region46: #{srl_second_order_scorer.3} parent=35 // pred_check_branch
          %380 = sbr.rel (%p378) target = $region48
        $region47: #{srl_second_order_scorer.3} parent=35 // pred_region
          %s381 = sld [smem:[#allocation5 + %s37]]
          %p382 = scmp.lt.s32.totalorder %s381, 3
          %s383 = scalar_select %p382, %s381, 3
          %s384 = smul.addr %s383, 2
          %s385 = smul.addr %s384, 4
          %s386 = scalar_lea.vmem %s5, %s385
          %s387 = sld [smem:[#allocation5 + %s37]]
        $region48: #{srl_second_order_scorer.3} parent=35 // pred_fallthru
          _
        // Predicated region
        $region49: #{srl_second_order_scorer.3} parent=35 // pred_check
          %p388 = pneg %p141
        $region50: #{srl_second_order_scorer.3} parent=35 // pred_check_branch
          %390 = sbr.rel (%p388) target = $region52
        $region51: #{srl_second_order_scorer.3} parent=35 // pred_region
          %s391 = sand.u32 %s131, 1
          %s392 = scalar_lea.sflag [#allocation7], %s391
          %s393 = sand.u32 %s131, 1
          %s394 = smul.addr %s393, 256
          %s395 = scalar_lea.vmem [#allocation6], %s394
          %s397 = ssub.s32 4096, 4096
          %398 = vsyncadd %s392, %s397
          %s399 = smul.addr %s37, 64
          %s400 = smul.addr %s399, 64
          %s401 = scalar_lea.hbm %s6, %s400
          %s402 = sshll.u32 %s395, 4
          %s403 = int_to_ptr.vmem [resolvable:$true] %s402
          %408 = dma.hbm_to_vmem [thread:$0]  %s401, 4096, %s403, %s392, 1024, 1024, 64
        $region52: #{srl_second_order_scorer.3} parent=35 // pred_fallthru
          _
        // Predicated region
        $region53: #{srl_second_order_scorer.3} parent=35 // pred_check
          %p409 = pneg %p272
        $region54: #{srl_second_order_scorer.3} parent=35 // pred_check_branch
          %411 = sbr.rel (%p409) target = $region56
        $region55: #{srl_second_order_scorer.3} parent=35 // pred_region
          %p412 = scmp.lt.s32.totalorder %s37, 5
          %s413 = scalar_select %p412, %s37, 5
          %s414 = smul.addr %s413, 2
          %s415 = scalar_lea.vmem %s12, %s414
        $region56: #{srl_second_order_scorer.3} parent=35 // pred_fallthru
          _
      $region36: #{srl_second_order_scorer.3} parent=5 // pred_fallthru
        _
      %p416 = scmp.le.s32.totalorder 1, %s37
      %p417 = scmp.lt.s32.totalorder %s37, 7
      %p418 = pnand %p416, %p417
      %p419 = pneg %p418
      // Predicated region
      $region57: #{srl_second_order_scorer.3} parent=5 // pred_check
        _
      $region58: #{srl_second_order_scorer.3} parent=5 // pred_check_branch
        %421 = sbr.rel (%p418) target = $region60
      $region59: #{srl_second_order_scorer.3} parent=5 // pred_region
        %s422 = ssub.s32 %s37, 1
        %s423 = sand.u32 %s134, 1
        %s424 = scalar_lea.sflag [#allocation7], %s423
        %s425 = sand.u32 %s134, 1
        %s426 = smul.addr %s425, 256
        %s427 = scalar_lea.vmem [#allocation6], %s426
        // Predicated region
        $region61: #{srl_second_order_scorer.3} parent=59 // pred_check
          %p428 = pneg %p147
        $region62: #{srl_second_order_scorer.3} parent=59 // pred_check_branch
          %430 = sbr.rel (%p428) target = $region64
        $region63: #{srl_second_order_scorer.3} parent=59 // pred_region
          %431 = dma.done %s424, 4096
        $region64: #{srl_second_order_scorer.3} parent=59 // pred_fallthru
          _
        // Predicated region
        $region65: #{srl_second_order_scorer.3} parent=59 // pred_check
          %p432 = pneg %p189
        $region66: #{srl_second_order_scorer.3} parent=59 // pred_check_branch
          %434 = sbr.rel (%p432) target = $region68
        $region67: #{srl_second_order_scorer.3} parent=59 // pred_region
          %435 = dma.done [#allocation9], 2048
        $region68: #{srl_second_order_scorer.3} parent=59 // pred_fallthru
          _
        // Predicated region
        $region69: #{srl_second_order_scorer.3} parent=59 // pred_check
          %p436 = pneg %p252
        $region70: #{srl_second_order_scorer.3} parent=59 // pred_check_branch
          %438 = sbr.rel (%p436) target = $region72
        $region71: #{srl_second_order_scorer.3} parent=59 // pred_region
          %439 = dma.done [#allocation9], 1024
        $region72: #{srl_second_order_scorer.3} parent=59 // pred_fallthru
          _
        %s440 = sld [smem:[#allocation3 + %s42]]
        %p441 = scmp.lt.s32.totalorder %s440, 3
        %s442 = scalar_select %p441, %s440, 3
        %s443 = smul.addr %s442, 2
        %s444 = smul.addr %s443, 4
        %s445 = scalar_lea.vmem %s3, %s444
        %p446 = pneg %p65
        %p447 = pneg %p62
        %s448 = sld [smem:[#allocation4 + %s42]]
        %p449 = scmp.lt.s32.totalorder %s448, 3
        %s450 = scalar_select %p449, %s448, 3
        %s451 = smul.addr %s450, 2
        %s452 = smul.addr %s451, 4
        %s453 = scalar_lea.vmem %s4, %s452
        %p454 = pneg %p93
        %p455 = pneg %p90
        %s456 = sld [smem:[#allocation5 + %s42]]
        %p457 = scmp.lt.s32.totalorder %s456, 3
        %s458 = scalar_select %p457, %s456, 3
        %s459 = smul.addr %s458, 2
        %s460 = smul.addr %s459, 4
        %s461 = scalar_lea.vmem %s5, %s460
        %p462 = pneg %p121
        %p463 = pneg %p118
        %s464 = sand.u32 %s134, 1
        %s465 = scalar_lea.sflag [#allocation7], %s464
        %s466 = sand.u32 %s134, 1
        %s467 = smul.addr %s466, 256
        %s468 = scalar_lea.vmem [#allocation6], %s467
        %p469 = pneg %p147
        %p470 = pneg %p144
        %p471 = pneg %p168
        %p472 = pneg %p165
        %p473 = pneg %p189
        %p474 = pneg %p186
        %p475 = pneg %p210
        %p476 = pneg %p207
        %p477 = pneg %p231
        %p478 = pneg %p228
        %p479 = pneg %p252
        %p480 = pneg %p249
        %p481 = scmp.lt.s32.totalorder %s42, 5
        %s482 = scalar_select %p481, %s42, 5
        %s483 = smul.addr %s482, 2
        %s484 = scalar_lea.vmem %s12, %s483
        %p485 = pneg %p278
        %p486 = pneg %p275
        %p487 = pneg %p304
        %p488 = pneg %p301
        %p489 = scmp.lt.s32.totalorder %s42, 5
        %s490 = scalar_select %p489, %s42, 5
        %s491 = smul.addr %s490, 2
        %s492 = smul.addr %s491, 8
        %s493 = scalar_lea.vmem %s13, %s492
        %s494 = sld [smem:[#allocation3 + %s42]]
        %p495 = scmp.lt.s32.totalorder %s494, 3
        %s496 = scalar_select %p495, %s494, 3
        %s497 = smul.addr %s496, 2
        %s498 = smul.addr %s497, 4
        %s499 = scalar_lea.vmem %s3, %s498
        %s500 = sld [smem:[#allocation3 + %s42]]
        %s501 = sld [smem:[#allocation4 + %s42]]
        %p502 = scmp.lt.s32.totalorder %s501, 3
        %s503 = scalar_select %p502, %s501, 3
        %s504 = smul.addr %s503, 2
        %s505 = smul.addr %s504, 4
        %s506 = scalar_lea.vmem %s4, %s505
        %s507 = sld [smem:[#allocation4 + %s42]]
        %s508 = sld [smem:[#allocation5 + %s42]]
        %p509 = scmp.lt.s32.totalorder %s508, 3
        %s510 = scalar_select %p509, %s508, 3
        %s511 = smul.addr %s510, 2
        %s512 = smul.addr %s511, 4
        %s513 = scalar_lea.vmem %s5, %s512
        %s514 = sld [smem:[#allocation5 + %s42]]
        %p515 = scmp.lt.s32.totalorder %s42, 5
        %s516 = scalar_select %p515, %s42, 5
        %s517 = smul.addr %s516, 2
        %s518 = scalar_lea.vmem %s12, %s517
        %p519 = scmp.lt.s32.totalorder %s42, 5
        %s520 = scalar_select %p519, %s42, 5
        %s521 = smul.addr %s520, 2
        %s522 = smul.addr %s521, 8
        %s523 = scalar_lea.vmem %s13, %s522
        %v525 = vld [vmem:[%s513] sm:$0xf]
        %v526 = vld [vmem:[%s513 + $0x4] sm:$0xf]
        %v527 = vld [vmem:[%s427] sm:$0xff]
        %v528 = vld [vmem:[%s427 + $0x8] sm:$0xff]
        %v529 = vld [vmem:[%s427 + $0x10] sm:$0xff]
        %v530 = vld [vmem:[%s427 + $0x18] sm:$0xff]
        %v531 = vld [vmem:[%s427 + $0x20] sm:$0xff]
        %v532 = vld [vmem:[%s427 + $0x28] sm:$0xff]
        %v533 = vld [vmem:[%s427 + $0x30] sm:$0xff]
        %v534 = vld [vmem:[%s427 + $0x38] sm:$0xff]
        %v535 = vld [vmem:[%s427 + $0x40] sm:$0xff]
        %v536 = vld [vmem:[%s427 + $0x48] sm:$0xff]
        %v537 = vld [vmem:[%s427 + $0x50] sm:$0xff]
        %v538 = vld [vmem:[%s427 + $0x58] sm:$0xff]
        %v539 = vld [vmem:[%s427 + $0x60] sm:$0xff]
        %v540 = vld [vmem:[%s427 + $0x68] sm:$0xff]
        %v541 = vld [vmem:[%s427 + $0x70] sm:$0xff]
        %v542 = vld [vmem:[%s427 + $0x78] sm:$0xff]
        %v543 = vld [vmem:[%s427 + $0x80] sm:$0xff]
        %v544 = vld [vmem:[%s427 + $0x88] sm:$0xff]
        %v545 = vld [vmem:[%s427 + $0x90] sm:$0xff]
        %v546 = vld [vmem:[%s427 + $0x98] sm:$0xff]
        %v547 = vld [vmem:[%s427 + $0xa0] sm:$0xff]
        %v548 = vld [vmem:[%s427 + $0xa8] sm:$0xff]
        %v549 = vld [vmem:[%s427 + $0xb0] sm:$0xff]
        %v550 = vld [vmem:[%s427 + $0xb8] sm:$0xff]
        %v551 = vld [vmem:[%s427 + $0xc0] sm:$0xff]
        %v552 = vld [vmem:[%s427 + $0xc8] sm:$0xff]
        %v553 = vld [vmem:[%s427 + $0xd0] sm:$0xff]
        %v554 = vld [vmem:[%s427 + $0xd8] sm:$0xff]
        %v555 = vld [vmem:[%s427 + $0xe0] sm:$0xff]
        %v556 = vld [vmem:[%s427 + $0xe8] sm:$0xff]
        %v557 = vld [vmem:[%s427 + $0xf0] sm:$0xff]
        %v558 = vld [vmem:[%s427 + $0xf8] sm:$0xff]
        %v561 = vunpack.c.l.b16 %v525
        %v562 = vunpack.c.l.b16 %v526
        %v563 = vpack.c.b16 %v562, %v561
        %v596 = vunpack.c.l.b16 %v527
        %v597 = vunpack.c.h.b16 %v527
        %v598 = vunpack.c.l.b16 %v528
        %v599 = vunpack.c.h.b16 %v528
        %v600 = vunpack.c.l.b16 %v529
        %v601 = vunpack.c.h.b16 %v529
        %v602 = vunpack.c.l.b16 %v530
        %v603 = vunpack.c.h.b16 %v530
        %v604 = vunpack.c.l.b16 %v531
        %v605 = vunpack.c.h.b16 %v531
        %v606 = vunpack.c.l.b16 %v532
        %v607 = vunpack.c.h.b16 %v532
        %v608 = vunpack.c.l.b16 %v533
        %v609 = vunpack.c.h.b16 %v533
        %v610 = vunpack.c.l.b16 %v534
        %v611 = vunpack.c.h.b16 %v534
        %v612 = vunpack.c.l.b16 %v535
        %v613 = vunpack.c.h.b16 %v535
        %v614 = vunpack.c.l.b16 %v536
        %v615 = vunpack.c.h.b16 %v536
        %v616 = vunpack.c.l.b16 %v537
        %v617 = vunpack.c.h.b16 %v537
        %v618 = vunpack.c.l.b16 %v538
        %v619 = vunpack.c.h.b16 %v538
        %v620 = vunpack.c.l.b16 %v539
        %v621 = vunpack.c.h.b16 %v539
        %v622 = vunpack.c.l.b16 %v540
        %v623 = vunpack.c.h.b16 %v540
        %v624 = vunpack.c.l.b16 %v541
        %v625 = vunpack.c.h.b16 %v541
        %v626 = vunpack.c.l.b16 %v542
        %v627 = vunpack.c.h.b16 %v542
        %v628 = vunpack.c.l.b16 %v543
        %v629 = vunpack.c.h.b16 %v543
        %v630 = vunpack.c.l.b16 %v544
        %v631 = vunpack.c.h.b16 %v544
        %v632 = vunpack.c.l.b16 %v545
        %v633 = vunpack.c.h.b16 %v545
        %v634 = vunpack.c.l.b16 %v546
        %v635 = vunpack.c.h.b16 %v546
        %v636 = vunpack.c.l.b16 %v547
        %v637 = vunpack.c.h.b16 %v547
        %v638 = vunpack.c.l.b16 %v548
        %v639 = vunpack.c.h.b16 %v548
        %v640 = vunpack.c.l.b16 %v549
        %v641 = vunpack.c.h.b16 %v549
        %v642 = vunpack.c.l.b16 %v550
        %v643 = vunpack.c.h.b16 %v550
        %v644 = vunpack.c.l.b16 %v551
        %v645 = vunpack.c.h.b16 %v551
        %v646 = vunpack.c.l.b16 %v552
        %v647 = vunpack.c.h.b16 %v552
        %v648 = vunpack.c.l.b16 %v553
        %v649 = vunpack.c.h.b16 %v553
        %v650 = vunpack.c.l.b16 %v554
        %v651 = vunpack.c.h.b16 %v554
        %v652 = vunpack.c.l.b16 %v555
        %v653 = vunpack.c.h.b16 %v555
        %v654 = vunpack.c.l.b16 %v556
        %v655 = vunpack.c.h.b16 %v556
        %v656 = vunpack.c.l.b16 %v557
        %v657 = vunpack.c.h.b16 %v557
        %v658 = vunpack.c.l.b16 %v558
        %v659 = vunpack.c.h.b16 %v558
        %v660 = vpack.c.b16 %v612, %v596
        %v661 = vpack.c.b16 %v613, %v597
        %v662 = vpack.c.b16 %v614, %v598
        %v663 = vpack.c.b16 %v615, %v599
        %v664 = vpack.c.b16 %v616, %v600
        %v665 = vpack.c.b16 %v617, %v601
        %v666 = vpack.c.b16 %v618, %v602
        %v667 = vpack.c.b16 %v619, %v603
        %v668 = vpack.c.b16 %v620, %v604
        %v669 = vpack.c.b16 %v621, %v605
        %v670 = vpack.c.b16 %v622, %v606
        %v671 = vpack.c.b16 %v623, %v607
        %v672 = vpack.c.b16 %v624, %v608
        %v673 = vpack.c.b16 %v625, %v609
        %v674 = vpack.c.b16 %v626, %v610
        %v675 = vpack.c.b16 %v627, %v611
        %v676 = vpack.c.b16 %v644, %v628
        %v677 = vpack.c.b16 %v645, %v629
        %v678 = vpack.c.b16 %v646, %v630
        %v679 = vpack.c.b16 %v647, %v631
        %v680 = vpack.c.b16 %v648, %v632
        %v681 = vpack.c.b16 %v649, %v633
        %v682 = vpack.c.b16 %v650, %v634
        %v683 = vpack.c.b16 %v651, %v635
        %v684 = vpack.c.b16 %v652, %v636
        %v685 = vpack.c.b16 %v653, %v637
        %v686 = vpack.c.b16 %v654, %v638
        %v687 = vpack.c.b16 %v655, %v639
        %v688 = vpack.c.b16 %v656, %v640
        %v689 = vpack.c.b16 %v657, %v641
        %v690 = vpack.c.b16 %v658, %v642
        %v691 = vpack.c.b16 %v659, %v643
        %vm724 = vcmask 261120
        %v726 = vsel %vm724, %v563, 0
        %728 = vmatprep.subr.bf16.mxu0 %v661
        %729 = vmatpush1.bf16.msra.mxu0 %v660
        %730 = vmatprep.subr.bf16.mxu0 %v677
        %731 = vmatpush1.bf16.msra.mxu0 %v676
        %732 = vmatprep.subr.bf16.mxu0 0
        %733 = vmatpush1.bf16.msra.mxu0 0
        %734 = vmatprep.subr.bf16.mxu0 0
        %735 = vmatpush1.bf16.msra.mxu0 0
        %736 = vmatprep.subr.bf16.mxu0 0
        %737 = vmatpush1.bf16.msra.mxu0 0
        %738 = vmatprep.subr.bf16.mxu0 0
        %739 = vmatpush1.bf16.msra.mxu0 0
        %740 = vmatprep.subr.bf16.mxu0 0
        %741 = vmatpush1.bf16.msra.mxu0 0
        %742 = vmatprep.subr.bf16.mxu0 0
        %743 = vmatpush1.bf16.msra.mxu0 0
        %744 = vmatprep.subr.bf16.mxu0 0
        %745 = vmatpush1.bf16.msra.mxu0 0
        %746 = vmatprep.subr.bf16.mxu0 0
        %747 = vmatpush1.bf16.msra.mxu0 0
        %748 = vmatprep.subr.bf16.mxu0 0
        %749 = vmatpush1.bf16.msra.mxu0 0
        %750 = vmatprep.subr.bf16.mxu0 0
        %751 = vmatpush1.bf16.msra.mxu0 0
        %752 = vmatprep.subr.bf16.mxu0 0
        %753 = vmatpush1.bf16.msra.mxu0 0
        %754 = vmatprep.subr.bf16.mxu0 0
        %755 = vmatpush1.bf16.msra.mxu0 0
        %756 = vmatprep.subr.bf16.mxu0 0
        %757 = vmatpush1.bf16.msra.mxu0 0
        %758 = vmatprep.subr.bf16.mxu0 0
        %759 = vmatpush1.bf16.msra.mxu0 0
        %760 = vmatprep.mubr.bf16.mxu0 0
        %761 = vmatmul.mubr.bf16.gmra.mrb[0].mxu0 %v726
        %v762 = vpop.f32.mrb[0].mxu0
        %v763 = vadd.f32 0.0, %v762
        %v764 = vpop.f32.mrb[0].mxu0
        %v765 = vadd.f32 0.0, %v764
        %v766 = vpop.f32.mrb[0].mxu0
        %v767 = vadd.f32 0.0, %v766
        %v768 = vpop.f32.mrb[0].mxu0
        %v769 = vadd.f32 0.0, %v768
        %770 = vdwg.mxu0
        %771 = vmatprep.subr.bf16.mxu0 %v663
        %772 = vmatpush1.bf16.msra.mxu0 %v662
        %773 = vmatprep.subr.bf16.mxu0 %v679
        %774 = vmatpush1.bf16.msra.mxu0 %v678
        %775 = vmatprep.subr.bf16.mxu0 0
        %776 = vmatpush1.bf16.msra.mxu0 0
        %777 = vmatprep.subr.bf16.mxu0 0
        %778 = vmatpush1.bf16.msra.mxu0 0
        %779 = vmatprep.subr.bf16.mxu0 0
        %780 = vmatpush1.bf16.msra.mxu0 0
        %781 = vmatprep.subr.bf16.mxu0 0
        %782 = vmatpush1.bf16.msra.mxu0 0
        %783 = vmatprep.subr.bf16.mxu0 0
        %784 = vmatpush1.bf16.msra.mxu0 0
        %785 = vmatprep.subr.bf16.mxu0 0
        %786 = vmatpush1.bf16.msra.mxu0 0
        %787 = vmatprep.subr.bf16.mxu0 0
        %788 = vmatpush1.bf16.msra.mxu0 0
        %789 = vmatprep.subr.bf16.mxu0 0
        %790 = vmatpush1.bf16.msra.mxu0 0
        %791 = vmatprep.subr.bf16.mxu0 0
        %792 = vmatpush1.bf16.msra.mxu0 0
        %793 = vmatprep.subr.bf16.mxu0 0
        %794 = vmatpush1.bf16.msra.mxu0 0
        %795 = vmatprep.subr.bf16.mxu0 0
        %796 = vmatpush1.bf16.msra.mxu0 0
        %797 = vmatprep.subr.bf16.mxu0 0
        %798 = vmatpush1.bf16.msra.mxu0 0
        %799 = vmatprep.subr.bf16.mxu0 0
        %800 = vmatpush1.bf16.msra.mxu0 0
        %801 = vmatprep.subr.bf16.mxu0 0
        %802 = vmatpush1.bf16.msra.mxu0 0
        %803 = vmatprep.mubr.bf16.mxu0 0
        %804 = vmatmul.mubr.bf16.gmra.mrb[0].mxu0 %v726
        %v805 = vpop.f32.mrb[0].mxu0
        %v806 = vadd.f32 0.0, %v805
        %v807 = vpop.f32.mrb[0].mxu0
        %v808 = vadd.f32 0.0, %v807
        %v809 = vpop.f32.mrb[0].mxu0
        %v810 = vadd.f32 0.0, %v809
        %v811 = vpop.f32.mrb[0].mxu0
        %v812 = vadd.f32 0.0, %v811
        %813 = vdwg.mxu0
        %814 = vmatprep.subr.bf16.mxu0 %v665
        %815 = vmatpush1.bf16.msra.mxu0 %v664
        %816 = vmatprep.subr.bf16.mxu0 %v681
        %817 = vmatpush1.bf16.msra.mxu0 %v680
        %818 = vmatprep.subr.bf16.mxu0 0
        %819 = vmatpush1.bf16.msra.mxu0 0
        %820 = vmatprep.subr.bf16.mxu0 0
        %821 = vmatpush1.bf16.msra.mxu0 0
        %822 = vmatprep.subr.bf16.mxu0 0
        %823 = vmatpush1.bf16.msra.mxu0 0
        %824 = vmatprep.subr.bf16.mxu0 0
        %825 = vmatpush1.bf16.msra.mxu0 0
        %826 = vmatprep.subr.bf16.mxu0 0
        %827 = vmatpush1.bf16.msra.mxu0 0
        %828 = vmatprep.subr.bf16.mxu0 0
        %829 = vmatpush1.bf16.msra.mxu0 0
        %830 = vmatprep.subr.bf16.mxu0 0
        %831 = vmatpush1.bf16.msra.mxu0 0
        %832 = vmatprep.subr.bf16.mxu0 0
        %833 = vmatpush1.bf16.msra.mxu0 0
        %834 = vmatprep.subr.bf16.mxu0 0
        %835 = vmatpush1.bf16.msra.mxu0 0
        %836 = vmatprep.subr.bf16.mxu0 0
        %837 = vmatpush1.bf16.msra.mxu0 0
        %838 = vmatprep.subr.bf16.mxu0 0
        %839 = vmatpush1.bf16.msra.mxu0 0
        %840 = vmatprep.subr.bf16.mxu0 0
        %841 = vmatpush1.bf16.msra.mxu0 0
        %842 = vmatprep.subr.bf16.mxu0 0
        %843 = vmatpush1.bf16.msra.mxu0 0
        %844 = vmatprep.subr.bf16.mxu0 0
        %845 = vmatpush1.bf16.msra.mxu0 0
        %846 = vmatprep.mubr.bf16.mxu0 0
        %847 = vmatmul.mubr.bf16.gmra.mrb[0].mxu0 %v726
        %v848 = vpop.f32.mrb[0].mxu0
        %v849 = vadd.f32 0.0, %v848
        %v850 = vpop.f32.mrb[0].mxu0
        %v851 = vadd.f32 0.0, %v850
        %v852 = vpop.f32.mrb[0].mxu0
        %v853 = vadd.f32 0.0, %v852
        %v854 = vpop.f32.mrb[0].mxu0
        %v855 = vadd.f32 0.0, %v854
        %856 = vdwg.mxu0
        %857 = vmatprep.subr.bf16.mxu0 %v667
        %858 = vmatpush1.bf16.msra.mxu0 %v666
        %859 = vmatprep.subr.bf16.mxu0 %v683
        %860 = vmatpush1.bf16.msra.mxu0 %v682
        %861 = vmatprep.subr.bf16.mxu0 0
        %862 = vmatpush1.bf16.msra.mxu0 0
        %863 = vmatprep.subr.bf16.mxu0 0
        %864 = vmatpush1.bf16.msra.mxu0 0
        %865 = vmatprep.subr.bf16.mxu0 0
        %866 = vmatpush1.bf16.msra.mxu0 0
        %867 = vmatprep.subr.bf16.mxu0 0
        %868 = vmatpush1.bf16.msra.mxu0 0
        %869 = vmatprep.subr.bf16.mxu0 0
        %870 = vmatpush1.bf16.msra.mxu0 0
        %871 = vmatprep.subr.bf16.mxu0 0
        %872 = vmatpush1.bf16.msra.mxu0 0
        %873 = vmatprep.subr.bf16.mxu0 0
        %874 = vmatpush1.bf16.msra.mxu0 0
        %875 = vmatprep.subr.bf16.mxu0 0
        %876 = vmatpush1.bf16.msra.mxu0 0
        %877 = vmatprep.subr.bf16.mxu0 0
        %878 = vmatpush1.bf16.msra.mxu0 0
        %879 = vmatprep.subr.bf16.mxu0 0
        %880 = vmatpush1.bf16.msra.mxu0 0
        %881 = vmatprep.subr.bf16.mxu0 0
        %882 = vmatpush1.bf16.msra.mxu0 0
        %883 = vmatprep.subr.bf16.mxu0 0
        %884 = vmatpush1.bf16.msra.mxu0 0
        %885 = vmatprep.subr.bf16.mxu0 0
        %886 = vmatpush1.bf16.msra.mxu0 0
        %887 = vmatprep.subr.bf16.mxu0 0
        %888 = vmatpush1.bf16.msra.mxu0 0
        %889 = vmatprep.mubr.bf16.mxu0 0
        %890 = vmatmul.mubr.bf16.gmra.mrb[0].mxu0 %v726
        %v891 = vpop.f32.mrb[0].mxu0
        %v892 = vadd.f32 0.0, %v891
        %v893 = vpop.f32.mrb[0].mxu0
        %v894 = vadd.f32 0.0, %v893
        %v895 = vpop.f32.mrb[0].mxu0
        %v896 = vadd.f32 0.0, %v895
        %v897 = vpop.f32.mrb[0].mxu0
        %v898 = vadd.f32 0.0, %v897
        %899 = vdwg.mxu0
        %900 = vmatprep.subr.bf16.mxu0 %v669
        %901 = vmatpush1.bf16.msra.mxu0 %v668
        %902 = vmatprep.subr.bf16.mxu0 %v685
        %903 = vmatpush1.bf16.msra.mxu0 %v684
        %904 = vmatprep.subr.bf16.mxu0 0
        %905 = vmatpush1.bf16.msra.mxu0 0
        %906 = vmatprep.subr.bf16.mxu0 0
        %907 = vmatpush1.bf16.msra.mxu0 0
        %908 = vmatprep.subr.bf16.mxu0 0
        %909 = vmatpush1.bf16.msra.mxu0 0
        %910 = vmatprep.subr.bf16.mxu0 0
        %911 = vmatpush1.bf16.msra.mxu0 0
        %912 = vmatprep.subr.bf16.mxu0 0
        %913 = vmatpush1.bf16.msra.mxu0 0
        %914 = vmatprep.subr.bf16.mxu0 0
        %915 = vmatpush1.bf16.msra.mxu0 0
        %916 = vmatprep.subr.bf16.mxu0 0
        %917 = vmatpush1.bf16.msra.mxu0 0
        %918 = vmatprep.subr.bf16.mxu0 0
        %919 = vmatpush1.bf16.msra.mxu0 0
        %920 = vmatprep.subr.bf16.mxu0 0
        %921 = vmatpush1.bf16.msra.mxu0 0
        %922 = vmatprep.subr.bf16.mxu0 0
        %923 = vmatpush1.bf16.msra.mxu0 0
        %924 = vmatprep.subr.bf16.mxu0 0
        %925 = vmatpush1.bf16.msra.mxu0 0
        %926 = vmatprep.subr.bf16.mxu0 0
        %927 = vmatpush1.bf16.msra.mxu0 0
        %928 = vmatprep.subr.bf16.mxu0 0
        %929 = vmatpush1.bf16.msra.mxu0 0
        %930 = vmatprep.subr.bf16.mxu0 0
        %931 = vmatpush1.bf16.msra.mxu0 0
        %932 = vmatprep.mubr.bf16.mxu0 0
        %933 = vmatmul.mubr.bf16.gmra.mrb[0].mxu0 %v726
        %v934 = vpop.f32.mrb[0].mxu0
        %v935 = vadd.f32 0.0, %v934
        %v936 = vpop.f32.mrb[0].mxu0
        %v937 = vadd.f32 0.0, %v936
        %v938 = vpop.f32.mrb[0].mxu0
        %v939 = vadd.f32 0.0, %v938
        %v940 = vpop.f32.mrb[0].mxu0
        %v941 = vadd.f32 0.0, %v940
        %942 = vdwg.mxu0
        %943 = vmatprep.subr.bf16.mxu0 %v671
        %944 = vmatpush1.bf16.msra.mxu0 %v670
        %945 = vmatprep.subr.bf16.mxu0 %v687
        %946 = vmatpush1.bf16.msra.mxu0 %v686
        %947 = vmatprep.subr.bf16.mxu0 0
        %948 = vmatpush1.bf16.msra.mxu0 0
        %949 = vmatprep.subr.bf16.mxu0 0
        %950 = vmatpush1.bf16.msra.mxu0 0
        %951 = vmatprep.subr.bf16.mxu0 0
        %952 = vmatpush1.bf16.msra.mxu0 0
        %953 = vmatprep.subr.bf16.mxu0 0
        %954 = vmatpush1.bf16.msra.mxu0 0
        %955 = vmatprep.subr.bf16.mxu0 0
        %956 = vmatpush1.bf16.msra.mxu0 0
        %957 = vmatprep.subr.bf16.mxu0 0
        %958 = vmatpush1.bf16.msra.mxu0 0
        %959 = vmatprep.subr.bf16.mxu0 0
        %960 = vmatpush1.bf16.msra.mxu0 0
        %961 = vmatprep.subr.bf16.mxu0 0
        %962 = vmatpush1.bf16.msra.mxu0 0
        %963 = vmatprep.subr.bf16.mxu0 0
        %964 = vmatpush1.bf16.msra.mxu0 0
        %965 = vmatprep.subr.bf16.mxu0 0
        %966 = vmatpush1.bf16.msra.mxu0 0
        %967 = vmatprep.subr.bf16.mxu0 0
        %968 = vmatpush1.bf16.msra.mxu0 0
        %969 = vmatprep.subr.bf16.mxu0 0
        %970 = vmatpush1.bf16.msra.mxu0 0
        %971 = vmatprep.subr.bf16.mxu0 0
        %972 = vmatpush1.bf16.msra.mxu0 0
        %973 = vmatprep.subr.bf16.mxu0 0
        %974 = vmatpush1.bf16.msra.mxu0 0
        %975 = vmatprep.mubr.bf16.mxu0 0
        %976 = vmatmul.mubr.bf16.gmra.mrb[0].mxu0 %v726
        %v977 = vpop.f32.mrb[0].mxu0
        %v978 = vadd.f32 0.0, %v977
        %v979 = vpop.f32.mrb[0].mxu0
        %v980 = vadd.f32 0.0, %v979
        %v981 = vpop.f32.mrb[0].mxu0
        %v982 = vadd.f32 0.0, %v981
        %v983 = vpop.f32.mrb[0].mxu0
        %v984 = vadd.f32 0.0, %v983
        %985 = vdwg.mxu0
        %986 = vmatprep.subr.bf16.mxu0 %v673
        %987 = vmatpush1.bf16.msra.mxu0 %v672
        %988 = vmatprep.subr.bf16.mxu0 %v689
        %989 = vmatpush1.bf16.msra.mxu0 %v688
        %990 = vmatprep.subr.bf16.mxu0 0
        %991 = vmatpush1.bf16.msra.mxu0 0
        %992 = vmatprep.subr.bf16.mxu0 0
        %993 = vmatpush1.bf16.msra.mxu0 0
        %994 = vmatprep.subr.bf16.mxu0 0
        %995 = vmatpush1.bf16.msra.mxu0 0
        %996 = vmatprep.subr.bf16.mxu0 0
        %997 = vmatpush1.bf16.msra.mxu0 0
        %998 = vmatprep.subr.bf16.mxu0 0
        %999 = vmatpush1.bf16.msra.mxu0 0
        %1000 = vmatprep.subr.bf16.mxu0 0
        %1001 = vmatpush1.bf16.msra.mxu0 0
        %1002 = vmatprep.subr.bf16.mxu0 0
        %1003 = vmatpush1.bf16.msra.mxu0 0
        %1004 = vmatprep.subr.bf16.mxu0 0
        %1005 = vmatpush1.bf16.msra.mxu0 0
        %1006 = vmatprep.subr.bf16.mxu0 0
        %1007 = vmatpush1.bf16.msra.mxu0 0
        %1008 = vmatprep.subr.bf16.mxu0 0
        %1009 = vmatpush1.bf16.msra.mxu0 0
        %1010 = vmatprep.subr.bf16.mxu0 0
        %1011 = vmatpush1.bf16.msra.mxu0 0
        %1012 = vmatprep.subr.bf16.mxu0 0
        %1013 = vmatpush1.bf16.msra.mxu0 0
        %1014 = vmatprep.subr.bf16.mxu0 0
        %1015 = vmatpush1.bf16.msra.mxu0 0
        %1016 = vmatprep.subr.bf16.mxu0 0
        %1017 = vmatpush1.bf16.msra.mxu0 0
        %1018 = vmatprep.mubr.bf16.mxu0 0
        %1019 = vmatmul.mubr.bf16.gmra.mrb[0].mxu0 %v726
        %v1020 = vpop.f32.mrb[0].mxu0
        %v1021 = vadd.f32 0.0, %v1020
        %v1022 = vpop.f32.mrb[0].mxu0
        %v1023 = vadd.f32 0.0, %v1022
        %v1024 = vpop.f32.mrb[0].mxu0
        %v1025 = vadd.f32 0.0, %v1024
        %v1026 = vpop.f32.mrb[0].mxu0
        %v1027 = vadd.f32 0.0, %v1026
        %1028 = vdwg.mxu0
        %1029 = vmatprep.subr.bf16.mxu0 %v675
        %1030 = vmatpush1.bf16.msra.mxu0 %v674
        %1031 = vmatprep.subr.bf16.mxu0 %v691
        %1032 = vmatpush1.bf16.msra.mxu0 %v690
        %1033 = vmatprep.subr.bf16.mxu0 0
        %1034 = vmatpush1.bf16.msra.mxu0 0
        %1035 = vmatprep.subr.bf16.mxu0 0
        %1036 = vmatpush1.bf16.msra.mxu0 0
        %1037 = vmatprep.subr.bf16.mxu0 0
        %1038 = vmatpush1.bf16.msra.mxu0 0
        %1039 = vmatprep.subr.bf16.mxu0 0
        %1040 = vmatpush1.bf16.msra.mxu0 0
        %1041 = vmatprep.subr.bf16.mxu0 0
        %1042 = vmatpush1.bf16.msra.mxu0 0
        %1043 = vmatprep.subr.bf16.mxu0 0
        %1044 = vmatpush1.bf16.msra.mxu0 0
        %1045 = vmatprep.subr.bf16.mxu0 0
        %1046 = vmatpush1.bf16.msra.mxu0 0
        %1047 = vmatprep.subr.bf16.mxu0 0
        %1048 = vmatpush1.bf16.msra.mxu0 0
        %1049 = vmatprep.subr.bf16.mxu0 0
        %1050 = vmatpush1.bf16.msra.mxu0 0
        %1051 = vmatprep.subr.bf16.mxu0 0
        %1052 = vmatpush1.bf16.msra.mxu0 0
        %1053 = vmatprep.subr.bf16.mxu0 0
        %1054 = vmatpush1.bf16.msra.mxu0 0
        %1055 = vmatprep.subr.bf16.mxu0 0
        %1056 = vmatpush1.bf16.msra.mxu0 0
        %1057 = vmatprep.subr.bf16.mxu0 0
        %1058 = vmatpush1.bf16.msra.mxu0 0
        %1059 = vmatprep.subr.bf16.mxu0 0
        %1060 = vmatpush1.bf16.msra.mxu0 0
        %1061 = vmatprep.mubr.bf16.mxu0 0
        %1062 = vmatmul.mubr.bf16.gmra.mrb[0].mxu0 %v726
        %v1063 = vpop.f32.mrb[0].mxu0
        %v1064 = vadd.f32 0.0, %v1063
        %v1065 = vpop.f32.mrb[0].mxu0
        %v1066 = vadd.f32 0.0, %v1065
        %v1067 = vpop.f32.mrb[0].mxu0
        %v1068 = vadd.f32 0.0, %v1067
        %v1069 = vpop.f32.mrb[0].mxu0
        %v1070 = vadd.f32 0.0, %v1069
        %1071 = vdwg.mxu0
        %v1072 = vld [vmem:[%s518] sm:$0x1]
        %v1073 = vld [vmem:[%s518 + $0x1] sm:$0x1]
        %v1074 = vld [vmem:[%s7] sm:$0xff]
        %v1075 = vld [vmem:[%s7 + $0x8] sm:$0xff]
        %v1076 = vld [vmem:[%s7 + $0x10] sm:$0xff]
        %v1077 = vld [vmem:[%s7 + $0x18] sm:$0xff]
        %v1078 = vld [vmem:[%s7 + $0x20] sm:$0xff]
        %v1079 = vld [vmem:[%s7 + $0x28] sm:$0xff]
        %v1080 = vld [vmem:[%s7 + $0x30] sm:$0xff]
        %v1081 = vld [vmem:[%s7 + $0x38] sm:$0xff]
        %v1082 = vld [vmem:[%s7 + $0x40] sm:$0xff]
        %v1083 = vld [vmem:[%s7 + $0x48] sm:$0xff]
        %v1084 = vld [vmem:[%s7 + $0x50] sm:$0xff]
        %v1085 = vld [vmem:[%s7 + $0x58] sm:$0xff]
        %v1086 = vld [vmem:[%s7 + $0x60] sm:$0xff]
        %v1087 = vld [vmem:[%s7 + $0x68] sm:$0xff]
        %v1088 = vld [vmem:[%s7 + $0x70] sm:$0xff]
        %v1089 = vld [vmem:[%s7 + $0x78] sm:$0xff]
        %v1090 = vld [vmem:[#allocation8] sm:$0xff]
        %v1091 = vld [vmem:[#allocation8 + $0x8] sm:$0xff]
        %v1092 = vld [vmem:[#allocation8 + $0x10] sm:$0xff]
        %v1093 = vld [vmem:[#allocation8 + $0x18] sm:$0xff]
        %v1094 = vld [vmem:[#allocation8 + $0x20] sm:$0xff]
        %v1095 = vld [vmem:[#allocation8 + $0x28] sm:$0xff]
        %v1096 = vld [vmem:[#allocation8 + $0x30] sm:$0xff]
        %v1097 = vld [vmem:[#allocation8 + $0x38] sm:$0xff]
        %v1098 = vld [vmem:[#allocation8 + $0x40] sm:$0xff]
        %v1099 = vld [vmem:[#allocation8 + $0x48] sm:$0xff]
        %v1100 = vld [vmem:[#allocation8 + $0x50] sm:$0xff]
        %v1101 = vld [vmem:[#allocation8 + $0x58] sm:$0xff]
        %v1102 = vld [vmem:[#allocation8 + $0x60] sm:$0xff]
        %v1103 = vld [vmem:[#allocation8 + $0x68] sm:$0xff]
        %v1104 = vld [vmem:[#allocation8 + $0x70] sm:$0xff]
        %v1105 = vld [vmem:[#allocation8 + $0x78] sm:$0xff]
        %v1106 = vld [vmem:[%s9] sm:$0xf]
        %v1107 = vld [vmem:[%s9 + $0x4] sm:$0xf]
        %v1108 = vld [vmem:[%s9 + $0x8] sm:$0xf]
        %v1109 = vld [vmem:[%s9 + $0xc] sm:$0xf]
        %v1110 = vld [vmem:[%s9 + $0x10] sm:$0xf]
        %v1111 = vld [vmem:[%s9 + $0x14] sm:$0xf]
        %v1112 = vld [vmem:[%s9 + $0x18] sm:$0xf]
        %v1113 = vld [vmem:[%s9 + $0x1c] sm:$0xf]
        %v1114 = vld [vmem:[%s10] sm:$0xf]
        %v1115 = vld [vmem:[%s10 + $0x4] sm:$0xf]
        %v1116 = vld [vmem:[%s10 + $0x8] sm:$0xf]
        %v1117 = vld [vmem:[%s10 + $0xc] sm:$0xf]
        %v1118 = vld [vmem:[%s10 + $0x10] sm:$0xf]
        %v1119 = vld [vmem:[%s10 + $0x14] sm:$0xf]
        %v1120 = vld [vmem:[%s10 + $0x18] sm:$0xf]
        %v1121 = vld [vmem:[%s10 + $0x1c] sm:$0xf]
        %v1122 = vld [vmem:[#allocation10] sm:$0xff]
        %v1123 = vld [vmem:[#allocation10 + $0x8] sm:$0xff]
        %v1124 = vld [vmem:[#allocation10 + $0x10] sm:$0xff]
        %v1125 = vld [vmem:[#allocation10 + $0x18] sm:$0xff]
        %v1126 = vld [vmem:[#allocation10 + $0x20] sm:$0xff]
        %v1127 = vld [vmem:[#allocation10 + $0x28] sm:$0xff]
        %v1128 = vld [vmem:[#allocation10 + $0x30] sm:$0xff]
        %v1129 = vld [vmem:[#allocation10 + $0x38] sm:$0xff]
        %v1130 = vld [vmem:[%s499] sm:$0xf]
        %v1131 = vld [vmem:[%s506] sm:$0xf]
        %v1148 = vunpack.c.l.b16 %v1074
        %v1149 = vunpack.c.h.b16 %v1074
        %v1150 = vunpack.c.l.b16 %v1075
        %v1151 = vunpack.c.h.b16 %v1075
        %v1152 = vunpack.c.l.b16 %v1076
        %v1153 = vunpack.c.h.b16 %v1076
        %v1154 = vunpack.c.l.b16 %v1077
        %v1155 = vunpack.c.h.b16 %v1077
        %v1156 = vunpack.c.l.b16 %v1078
        %v1157 = vunpack.c.h.b16 %v1078
        %v1158 = vunpack.c.l.b16 %v1079
        %v1159 = vunpack.c.h.b16 %v1079
        %v1160 = vunpack.c.l.b16 %v1080
        %v1161 = vunpack.c.h.b16 %v1080
        %v1162 = vunpack.c.l.b16 %v1081
        %v1163 = vunpack.c.h.b16 %v1081
        %v1164 = vunpack.c.l.b16 %v1082
        %v1165 = vunpack.c.h.b16 %v1082
        %v1166 = vunpack.c.l.b16 %v1083
        %v1167 = vunpack.c.h.b16 %v1083
        %v1168 = vunpack.c.l.b16 %v1084
        %v1169 = vunpack.c.h.b16 %v1084
        %v1170 = vunpack.c.l.b16 %v1085
        %v1171 = vunpack.c.h.b16 %v1085
        %v1172 = vunpack.c.l.b16 %v1086
        %v1173 = vunpack.c.h.b16 %v1086
        %v1174 = vunpack.c.l.b16 %v1087
        %v1175 = vunpack.c.h.b16 %v1087
        %v1176 = vunpack.c.l.b16 %v1088
        %v1177 = vunpack.c.h.b16 %v1088
        %v1178 = vunpack.c.l.b16 %v1089
        %v1179 = vunpack.c.h.b16 %v1089
        %v1180 = vpack.c.b16 %v1156, %v1148
        %v1181 = vpack.c.b16 %v1157, %v1149
        %v1182 = vpack.c.b16 %v1158, %v1150
        %v1183 = vpack.c.b16 %v1159, %v1151
        %v1184 = vpack.c.b16 %v1160, %v1152
        %v1185 = vpack.c.b16 %v1161, %v1153
        %v1186 = vpack.c.b16 %v1162, %v1154
        %v1187 = vpack.c.b16 %v1163, %v1155
        %v1188 = vpack.c.b16 %v1172, %v1164
        %v1189 = vpack.c.b16 %v1173, %v1165
        %v1190 = vpack.c.b16 %v1174, %v1166
        %v1191 = vpack.c.b16 %v1175, %v1167
        %v1192 = vpack.c.b16 %v1176, %v1168
        %v1193 = vpack.c.b16 %v1177, %v1169
        %v1194 = vpack.c.b16 %v1178, %v1170
        %v1195 = vpack.c.b16 %v1179, %v1171
        %v1213 = vsel %vm724, %v1130, 0
        %1215 = vmatprep.subr.bf16.mxu0 %v1181
        %1216 = vmatpush1.bf16.msra.mxu0 %v1180
        %1217 = vmatprep.subr.bf16.mxu0 %v1189
        %1218 = vmatpush1.bf16.msra.mxu0 %v1188
        %1219 = vmatprep.subr.bf16.mxu0 0
        %1220 = vmatpush1.bf16.msra.mxu0 0
        %1221 = vmatprep.subr.bf16.mxu0 0
        %1222 = vmatpush1.bf16.msra.mxu0 0
        %1223 = vmatprep.subr.bf16.mxu0 0
        %1224 = vmatpush1.bf16.msra.mxu0 0
        %1225 = vmatprep.subr.bf16.mxu0 0
        %1226 = vmatpush1.bf16.msra.mxu0 0
        %1227 = vmatprep.subr.bf16.mxu0 0
        %1228 = vmatpush1.bf16.msra.mxu0 0
        %1229 = vmatprep.subr.bf16.mxu0 0
        %1230 = vmatpush1.bf16.msra.mxu0 0
        %1231 = vmatprep.subr.bf16.mxu0 0
        %1232 = vmatpush1.bf16.msra.mxu0 0
        %1233 = vmatprep.subr.bf16.mxu0 0
        %1234 = vmatpush1.bf16.msra.mxu0 0
        %1235 = vmatprep.subr.bf16.mxu0 0
        %1236 = vmatpush1.bf16.msra.mxu0 0
        %1237 = vmatprep.subr.bf16.mxu0 0
        %1238 = vmatpush1.bf16.msra.mxu0 0
        %1239 = vmatprep.subr.bf16.mxu0 0
        %1240 = vmatpush1.bf16.msra.mxu0 0
        %1241 = vmatprep.subr.bf16.mxu0 0
        %1242 = vmatpush1.bf16.msra.mxu0 0
        %1243 = vmatprep.subr.bf16.mxu0 0
        %1244 = vmatpush1.bf16.msra.mxu0 0
        %1245 = vmatprep.subr.bf16.mxu0 0
        %1246 = vmatpush1.bf16.msra.mxu0 0
        %1247 = vmatprep.mubr.bf16.mxu0 0
        %1248 = vmatmul.mubr.bf16.gmra.mrb[0].mxu0 %v1213
        %v1249 = vpop.f32.mrb[0].mxu0
        %v1250 = vadd.f32 0.0, %v1249
        %v1251 = vpop.f32.mrb[0].mxu0
        %v1252 = vadd.f32 0.0, %v1251
        %v1253 = vpop.f32.mrb[0].mxu0
        %v1254 = vpop.f32.mrb[0].mxu0
        %1255 = vdwg.mxu0
        %1256 = vmatprep.subr.bf16.mxu0 %v1183
        %1257 = vmatpush1.bf16.msra.mxu0 %v1182
        %1258 = vmatprep.subr.bf16.mxu0 %v1191
        %1259 = vmatpush1.bf16.msra.mxu0 %v1190
        %1260 = vmatprep.subr.bf16.mxu0 0
        %1261 = vmatpush1.bf16.msra.mxu0 0
        %1262 = vmatprep.subr.bf16.mxu0 0
        %1263 = vmatpush1.bf16.msra.mxu0 0
        %1264 = vmatprep.subr.bf16.mxu0 0
        %1265 = vmatpush1.bf16.msra.mxu0 0
        %1266 = vmatprep.subr.bf16.mxu0 0
        %1267 = vmatpush1.bf16.msra.mxu0 0
        %1268 = vmatprep.subr.bf16.mxu0 0
        %1269 = vmatpush1.bf16.msra.mxu0 0
        %1270 = vmatprep.subr.bf16.mxu0 0
        %1271 = vmatpush1.bf16.msra.mxu0 0
        %1272 = vmatprep.subr.bf16.mxu0 0
        %1273 = vmatpush1.bf16.msra.mxu0 0
        %1274 = vmatprep.subr.bf16.mxu0 0
        %1275 = vmatpush1.bf16.msra.mxu0 0
        %1276 = vmatprep.subr.bf16.mxu0 0
        %1277 = vmatpush1.bf16.msra.mxu0 0
        %1278 = vmatprep.subr.bf16.mxu0 0
        %1279 = vmatpush1.bf16.msra.mxu0 0
        %1280 = vmatprep.subr.bf16.mxu0 0
        %1281 = vmatpush1.bf16.msra.mxu0 0
        %1282 = vmatprep.subr.bf16.mxu0 0
        %1283 = vmatpush1.bf16.msra.mxu0 0
        %1284 = vmatprep.subr.bf16.mxu0 0
        %1285 = vmatpush1.bf16.msra.mxu0 0
        %1286 = vmatprep.subr.bf16.mxu0 0
        %1287 = vmatpush1.bf16.msra.mxu0 0
        %1288 = vmatprep.mubr.bf16.mxu0 0
        %1289 = vmatmul.mubr.bf16.gmra.mrb[0].mxu0 %v1213
        %v1290 = vpop.f32.mrb[0].mxu0
        %v1291 = vadd.f32 0.0, %v1290
        %v1292 = vpop.f32.mrb[0].mxu0
        %v1293 = vadd.f32 0.0, %v1292
        %v1294 = vpop.f32.mrb[0].mxu0
        %v1295 = vpop.f32.mrb[0].mxu0
        %1296 = vdwg.mxu0
        %1297 = vmatprep.subr.bf16.mxu0 %v1185
        %1298 = vmatpush1.bf16.msra.mxu0 %v1184
        %1299 = vmatprep.subr.bf16.mxu0 %v1193
        %1300 = vmatpush1.bf16.msra.mxu0 %v1192
        %1301 = vmatprep.subr.bf16.mxu0 0
        %1302 = vmatpush1.bf16.msra.mxu0 0
        %1303 = vmatprep.subr.bf16.mxu0 0
        %1304 = vmatpush1.bf16.msra.mxu0 0
        %1305 = vmatprep.subr.bf16.mxu0 0
        %1306 = vmatpush1.bf16.msra.mxu0 0
        %1307 = vmatprep.subr.bf16.mxu0 0
        %1308 = vmatpush1.bf16.msra.mxu0 0
        %1309 = vmatprep.subr.bf16.mxu0 0
        %1310 = vmatpush1.bf16.msra.mxu0 0
        %1311 = vmatprep.subr.bf16.mxu0 0
        %1312 = vmatpush1.bf16.msra.mxu0 0
        %1313 = vmatprep.subr.bf16.mxu0 0
        %1314 = vmatpush1.bf16.msra.mxu0 0
        %1315 = vmatprep.subr.bf16.mxu0 0
        %1316 = vmatpush1.bf16.msra.mxu0 0
        %1317 = vmatprep.subr.bf16.mxu0 0
        %1318 = vmatpush1.bf16.msra.mxu0 0
        %1319 = vmatprep.subr.bf16.mxu0 0
        %1320 = vmatpush1.bf16.msra.mxu0 0
        %1321 = vmatprep.subr.bf16.mxu0 0
        %1322 = vmatpush1.bf16.msra.mxu0 0
        %1323 = vmatprep.subr.bf16.mxu0 0
        %1324 = vmatpush1.bf16.msra.mxu0 0
        %1325 = vmatprep.subr.bf16.mxu0 0
        %1326 = vmatpush1.bf16.msra.mxu0 0
        %1327 = vmatprep.subr.bf16.mxu0 0
        %1328 = vmatpush1.bf16.msra.mxu0 0
        %1329 = vmatprep.mubr.bf16.mxu0 0
        %1330 = vmatmul.mubr.bf16.gmra.mrb[0].mxu0 %v1213
        %v1331 = vpop.f32.mrb[0].mxu0
        %v1332 = vadd.f32 0.0, %v1331
        %v1333 = vpop.f32.mrb[0].mxu0
        %v1334 = vadd.f32 0.0, %v1333
        %v1335 = vpop.f32.mrb[0].mxu0
        %v1336 = vpop.f32.mrb[0].mxu0
        %1337 = vdwg.mxu0
        %1338 = vmatprep.subr.bf16.mxu0 %v1187
        %1339 = vmatpush1.bf16.msra.mxu0 %v1186
        %1340 = vmatprep.subr.bf16.mxu0 %v1195
        %1341 = vmatpush1.bf16.msra.mxu0 %v1194
        %1342 = vmatprep.subr.bf16.mxu0 0
        %1343 = vmatpush1.bf16.msra.mxu0 0
        %1344 = vmatprep.subr.bf16.mxu0 0
        %1345 = vmatpush1.bf16.msra.mxu0 0
        %1346 = vmatprep.subr.bf16.mxu0 0
        %1347 = vmatpush1.bf16.msra.mxu0 0
        %1348 = vmatprep.subr.bf16.mxu0 0
        %1349 = vmatpush1.bf16.msra.mxu0 0
        %1350 = vmatprep.subr.bf16.mxu0 0
        %1351 = vmatpush1.bf16.msra.mxu0 0
        %1352 = vmatprep.subr.bf16.mxu0 0
        %1353 = vmatpush1.bf16.msra.mxu0 0
        %1354 = vmatprep.subr.bf16.mxu0 0
        %1355 = vmatpush1.bf16.msra.mxu0 0
        %1356 = vmatprep.subr.bf16.mxu0 0
        %1357 = vmatpush1.bf16.msra.mxu0 0
        %1358 = vmatprep.subr.bf16.mxu0 0
        %1359 = vmatpush1.bf16.msra.mxu0 0
        %1360 = vmatprep.subr.bf16.mxu0 0
        %1361 = vmatpush1.bf16.msra.mxu0 0
        %1362 = vmatprep.subr.bf16.mxu0 0
        %1363 = vmatpush1.bf16.msra.mxu0 0
        %1364 = vmatprep.subr.bf16.mxu0 0
        %1365 = vmatpush1.bf16.msra.mxu0 0
        %1366 = vmatprep.subr.bf16.mxu0 0
        %1367 = vmatpush1.bf16.msra.mxu0 0
        %1368 = vmatprep.subr.bf16.mxu0 0
        %1369 = vmatpush1.bf16.msra.mxu0 0
        %1370 = vmatprep.mubr.bf16.mxu0 0
        %1371 = vmatmul.mubr.bf16.gmra.mrb[0].mxu0 %v1213
        %v1372 = vpop.f32.mrb[0].mxu0
        %v1373 = vadd.f32 0.0, %v1372
        %v1374 = vpop.f32.mrb[0].mxu0
        %v1375 = vadd.f32 0.0, %v1374
        %v1376 = vpop.f32.mrb[0].mxu0
        %v1377 = vpop.f32.mrb[0].mxu0
        %1378 = vdwg.mxu0
        %v1379 = vpack.c.bf16 %v1250, %v1250
        %v1380 = vpack.c.bf16 %v1252, %v1252
        %v1381 = vpack.c.bf16 %v1291, %v1291
        %v1382 = vpack.c.bf16 %v1293, %v1293
        %v1383 = vpack.c.bf16 %v1332, %v1332
        %v1384 = vpack.c.bf16 %v1334, %v1334
        %v1385 = vpack.c.bf16 %v1373, %v1373
        %v1386 = vpack.c.bf16 %v1375, %v1375
        %v1395 = vunpack.c.l.b16 %v1106
        %v1396 = vunpack.c.l.b16 %v1107
        %v1397 = vunpack.c.l.b16 %v1108
        %v1398 = vunpack.c.l.b16 %v1109
        %v1399 = vunpack.c.l.b16 %v1110
        %v1400 = vunpack.c.l.b16 %v1111
        %v1401 = vunpack.c.l.b16 %v1112
        %v1402 = vunpack.c.l.b16 %v1113
        %v1403 = vpack.c.b16 %v1396, %v1395
        %v1404 = vpack.c.b16 %v1398, %v1397
        %v1405 = vpack.c.b16 %v1400, %v1399
        %v1406 = vpack.c.b16 %v1402, %v1401
        %vm1407 = vcmask 64512
        %v1409 = vsel %vm1407, %v1403, 0
        %v1412 = vsel %vm1407, %v1404, 0
        %v1415 = vsel %vm1407, %v1405, 0
        %v1418 = vsel %vm1407, %v1406, 0
        %vm1420 = vcmask 1043456
        %v1422 = vsel %vm1420, %v1379, 0
        %v1425 = vsel %vm1420, %v1380, 0
        %v1428 = vsel %vm1420, %v1381, 0
        %v1431 = vsel %vm1420, %v1382, 0
        %v1434 = vsel %vm1420, %v1383, 0
        %v1437 = vsel %vm1420, %v1384, 0
        %v1440 = vsel %vm1420, %v1385, 0
        %v1443 = vsel %vm1420, %v1386, 0
        %1445 = vmatprep.subr.bf16.mxu0 %v1425
        %1446 = vmatpush1.bf16.msra.mxu0 %v1422
        %1447 = vmatprep.subr.bf16.mxu0 0
        %1448 = vmatpush1.bf16.msra.mxu0 0
        %1449 = vmatprep.subr.bf16.mxu0 0
        %1450 = vmatpush1.bf16.msra.mxu0 0
        %1451 = vmatprep.subr.bf16.mxu0 0
        %1452 = vmatpush1.bf16.msra.mxu0 0
        %1453 = vmatprep.subr.bf16.mxu0 0
        %1454 = vmatpush1.bf16.msra.mxu0 0
        %1455 = vmatprep.subr.bf16.mxu0 0
        %1456 = vmatpush1.bf16.msra.mxu0 0
        %1457 = vmatprep.subr.bf16.mxu0 0
        %1458 = vmatpush1.bf16.msra.mxu0 0
        %1459 = vmatprep.subr.bf16.mxu0 0
        %1460 = vmatpush1.bf16.msra.mxu0 0
        %1461 = vmatprep.subr.bf16.mxu0 0
        %1462 = vmatpush1.bf16.msra.mxu0 0
        %1463 = vmatprep.subr.bf16.mxu0 0
        %1464 = vmatpush1.bf16.msra.mxu0 0
        %1465 = vmatprep.subr.bf16.mxu0 0
        %1466 = vmatpush1.bf16.msra.mxu0 0
        %1467 = vmatprep.subr.bf16.mxu0 0
        %1468 = vmatpush1.bf16.msra.mxu0 0
        %1469 = vmatprep.subr.bf16.mxu0 0
        %1470 = vmatpush1.bf16.msra.mxu0 0
        %1471 = vmatprep.subr.bf16.mxu0 0
        %1472 = vmatpush1.bf16.msra.mxu0 0
        %1473 = vmatprep.subr.bf16.mxu0 0
        %1474 = vmatpush1.bf16.msra.mxu0 0
        %1475 = vmatprep.subr.bf16.mxu0 0
        %1476 = vmatpush1.bf16.msra.mxu0 0
        %1477 = vmatprep.mubr.bf16.mxu0 0
        %1478 = vmatmul.mubr.bf16.gmra.mrb[0].mxu0 %v1409
        %v1479 = vpop.f32.mrb[0].mxu0
        %v1480 = vadd.f32 0.0, %v1479
        %v1481 = vpop.f32.mrb[0].mxu0
        %v1482 = vadd.f32 0.0, %v1481
        %v1483 = vpop.f32.mrb[0].mxu0
        %v1484 = vadd.f32 0.0, %v1483
        %v1485 = vpop.f32.mrb[0].mxu0
        %v1486 = vadd.f32 0.0, %v1485
        %1487 = vmatprep.mubr.bf16.mxu0 0
        %1488 = vmatmul.mubr.bf16.gmra.mrb[0].mxu0 %v1412
        %v1489 = vpop.f32.mrb[0].mxu0
        %v1490 = vadd.f32 0.0, %v1489
        %v1491 = vpop.f32.mrb[0].mxu0
        %v1492 = vadd.f32 0.0, %v1491
        %v1493 = vpop.f32.mrb[0].mxu0
        %v1494 = vadd.f32 0.0, %v1493
        %v1495 = vpop.f32.mrb[0].mxu0
        %v1496 = vadd.f32 0.0, %v1495
        %1497 = vmatprep.mubr.bf16.mxu0 0
        %1498 = vmatmul.mubr.bf16.gmra.mrb[0].mxu0 %v1415
        %v1499 = vpop.f32.mrb[0].mxu0
        %v1500 = vadd.f32 0.0, %v1499
        %v1501 = vpop.f32.mrb[0].mxu0
        %v1502 = vadd.f32 0.0, %v1501
        %v1503 = vpop.f32.mrb[0].mxu0
        %v1504 = vadd.f32 0.0, %v1503
        %v1505 = vpop.f32.mrb[0].mxu0
        %v1506 = vadd.f32 0.0, %v1505
        %1507 = vmatprep.mubr.bf16.mxu0 0
        %1508 = vmatmul.mubr.bf16.gmra.mrb[0].mxu0 %v1418
        %v1509 = vpop.f32.mrb[0].mxu0
        %v1510 = vadd.f32 0.0, %v1509
        %v1511 = vpop.f32.mrb[0].mxu0
        %v1512 = vadd.f32 0.0, %v1511
        %v1513 = vpop.f32.mrb[0].mxu0
        %v1514 = vadd.f32 0.0, %v1513
        %v1515 = vpop.f32.mrb[0].mxu0
        %v1516 = vadd.f32 0.0, %v1515
        %1517 = vdwg.mxu0
        %1518 = vmatprep.subr.bf16.mxu0 %v1431
        %1519 = vmatpush1.bf16.msra.mxu0 %v1428
        %1520 = vmatprep.subr.bf16.mxu0 0
        %1521 = vmatpush1.bf16.msra.mxu0 0
        %1522 = vmatprep.subr.bf16.mxu0 0
        %1523 = vmatpush1.bf16.msra.mxu0 0
        %1524 = vmatprep.subr.bf16.mxu0 0
        %1525 = vmatpush1.bf16.msra.mxu0 0
        %1526 = vmatprep.subr.bf16.mxu0 0
        %1527 = vmatpush1.bf16.msra.mxu0 0
        %1528 = vmatprep.subr.bf16.mxu0 0
        %1529 = vmatpush1.bf16.msra.mxu0 0
        %1530 = vmatprep.subr.bf16.mxu0 0
        %1531 = vmatpush1.bf16.msra.mxu0 0
        %1532 = vmatprep.subr.bf16.mxu0 0
        %1533 = vmatpush1.bf16.msra.mxu0 0
        %1534 = vmatprep.subr.bf16.mxu0 0
        %1535 = vmatpush1.bf16.msra.mxu0 0
        %1536 = vmatprep.subr.bf16.mxu0 0
        %1537 = vmatpush1.bf16.msra.mxu0 0
        %1538 = vmatprep.subr.bf16.mxu0 0
        %1539 = vmatpush1.bf16.msra.mxu0 0
        %1540 = vmatprep.subr.bf16.mxu0 0
        %1541 = vmatpush1.bf16.msra.mxu0 0
        %1542 = vmatprep.subr.bf16.mxu0 0
        %1543 = vmatpush1.bf16.msra.mxu0 0
        %1544 = vmatprep.subr.bf16.mxu0 0
        %1545 = vmatpush1.bf16.msra.mxu0 0
        %1546 = vmatprep.subr.bf16.mxu0 0
        %1547 = vmatpush1.bf16.msra.mxu0 0
        %1548 = vmatprep.subr.bf16.mxu0 0
        %1549 = vmatpush1.bf16.msra.mxu0 0
        %1550 = vmatprep.mubr.bf16.mxu0 0
        %1551 = vmatmul.mubr.bf16.gmra.mrb[0].mxu0 %v1409
        %v1552 = vpop.f32.mrb[0].mxu0
        %v1553 = vadd.f32 0.0, %v1552
        %v1554 = vpop.f32.mrb[0].mxu0
        %v1555 = vadd.f32 0.0, %v1554
        %v1556 = vpop.f32.mrb[0].mxu0
        %v1557 = vadd.f32 0.0, %v1556
        %v1558 = vpop.f32.mrb[0].mxu0
        %v1559 = vadd.f32 0.0, %v1558
        %1560 = vmatprep.mubr.bf16.mxu0 0
        %1561 = vmatmul.mubr.bf16.gmra.mrb[0].mxu0 %v1412
        %v1562 = vpop.f32.mrb[0].mxu0
        %v1563 = vadd.f32 0.0, %v1562
        %v1564 = vpop.f32.mrb[0].mxu0
        %v1565 = vadd.f32 0.0, %v1564
        %v1566 = vpop.f32.mrb[0].mxu0
        %v1567 = vadd.f32 0.0, %v1566
        %v1568 = vpop.f32.mrb[0].mxu0
        %v1569 = vadd.f32 0.0, %v1568
        %1570 = vmatprep.mubr.bf16.mxu0 0
        %1571 = vmatmul.mubr.bf16.gmra.mrb[0].mxu0 %v1415
        %v1572 = vpop.f32.mrb[0].mxu0
        %v1573 = vadd.f32 0.0, %v1572
        %v1574 = vpop.f32.mrb[0].mxu0
        %v1575 = vadd.f32 0.0, %v1574
        %v1576 = vpop.f32.mrb[0].mxu0
        %v1577 = vadd.f32 0.0, %v1576
        %v1578 = vpop.f32.mrb[0].mxu0
        %v1579 = vadd.f32 0.0, %v1578
        %1580 = vmatprep.mubr.bf16.mxu0 0
        %1581 = vmatmul.mubr.bf16.gmra.mrb[0].mxu0 %v1418
        %v1582 = vpop.f32.mrb[0].mxu0
        %v1583 = vadd.f32 0.0, %v1582
        %v1584 = vpop.f32.mrb[0].mxu0
        %v1585 = vadd.f32 0.0, %v1584
        %v1586 = vpop.f32.mrb[0].mxu0
        %v1587 = vadd.f32 0.0, %v1586
        %v1588 = vpop.f32.mrb[0].mxu0
        %v1589 = vadd.f32 0.0, %v1588
        %1590 = vdwg.mxu0
        %1591 = vmatprep.subr.bf16.mxu0 %v1437
        %1592 = vmatpush1.bf16.msra.mxu0 %v1434
        %1593 = vmatprep.subr.bf16.mxu0 0
        %1594 = vmatpush1.bf16.msra.mxu0 0
        %1595 = vmatprep.subr.bf16.mxu0 0
        %1596 = vmatpush1.bf16.msra.mxu0 0
        %1597 = vmatprep.subr.bf16.mxu0 0
        %1598 = vmatpush1.bf16.msra.mxu0 0
        %1599 = vmatprep.subr.bf16.mxu0 0
        %1600 = vmatpush1.bf16.msra.mxu0 0
        %1601 = vmatprep.subr.bf16.mxu0 0
        %1602 = vmatpush1.bf16.msra.mxu0 0
        %1603 = vmatprep.subr.bf16.mxu0 0
        %1604 = vmatpush1.bf16.msra.mxu0 0
        %1605 = vmatprep.subr.bf16.mxu0 0
        %1606 = vmatpush1.bf16.msra.mxu0 0
        %1607 = vmatprep.subr.bf16.mxu0 0
        %1608 = vmatpush1.bf16.msra.mxu0 0
        %1609 = vmatprep.subr.bf16.mxu0 0
        %1610 = vmatpush1.bf16.msra.mxu0 0
        %1611 = vmatprep.subr.bf16.mxu0 0
        %1612 = vmatpush1.bf16.msra.mxu0 0
        %1613 = vmatprep.subr.bf16.mxu0 0
        %1614 = vmatpush1.bf16.msra.mxu0 0
        %1615 = vmatprep.subr.bf16.mxu0 0
        %1616 = vmatpush1.bf16.msra.mxu0 0
        %1617 = vmatprep.subr.bf16.mxu0 0
        %1618 = vmatpush1.bf16.msra.mxu0 0
        %1619 = vmatprep.subr.bf16.mxu0 0
        %1620 = vmatpush1.bf16.msra.mxu0 0
        %1621 = vmatprep.subr.bf16.mxu0 0
        %1622 = vmatpush1.bf16.msra.mxu0 0
        %1623 = vmatprep.mubr.bf16.mxu0 0
        %1624 = vmatmul.mubr.bf16.gmra.mrb[0].mxu0 %v1409
        %v1625 = vpop.f32.mrb[0].mxu0
        %v1626 = vadd.f32 0.0, %v1625
        %v1627 = vpop.f32.mrb[0].mxu0
        %v1628 = vadd.f32 0.0, %v1627
        %v1629 = vpop.f32.mrb[0].mxu0
        %v1630 = vadd.f32 0.0, %v1629
        %v1631 = vpop.f32.mrb[0].mxu0
        %v1632 = vadd.f32 0.0, %v1631
        %1633 = vmatprep.mubr.bf16.mxu0 0
        %1634 = vmatmul.mubr.bf16.gmra.mrb[0].mxu0 %v1412
        %v1635 = vpop.f32.mrb[0].mxu0
        %v1636 = vadd.f32 0.0, %v1635
        %v1637 = vpop.f32.mrb[0].mxu0
        %v1638 = vadd.f32 0.0, %v1637
        %v1639 = vpop.f32.mrb[0].mxu0
        %v1640 = vadd.f32 0.0, %v1639
        %v1641 = vpop.f32.mrb[0].mxu0
        %v1642 = vadd.f32 0.0, %v1641
        %1643 = vmatprep.mubr.bf16.mxu0 0
        %1644 = vmatmul.mubr.bf16.gmra.mrb[0].mxu0 %v1415
        %v1645 = vpop.f32.mrb[0].mxu0
        %v1646 = vadd.f32 0.0, %v1645
        %v1647 = vpop.f32.mrb[0].mxu0
        %v1648 = vadd.f32 0.0, %v1647
        %v1649 = vpop.f32.mrb[0].mxu0
        %v1650 = vadd.f32 0.0, %v1649
        %v1651 = vpop.f32.mrb[0].mxu0
        %v1652 = vadd.f32 0.0, %v1651
        %1653 = vmatprep.mubr.bf16.mxu0 0
        %1654 = vmatmul.mubr.bf16.gmra.mrb[0].mxu0 %v1418
        %v1655 = vpop.f32.mrb[0].mxu0
        %v1656 = vadd.f32 0.0, %v1655
        %v1657 = vpop.f32.mrb[0].mxu0
        %v1658 = vadd.f32 0.0, %v1657
        %v1659 = vpop.f32.mrb[0].mxu0
        %v1660 = vadd.f32 0.0, %v1659
        %v1661 = vpop.f32.mrb[0].mxu0
        %v1662 = vadd.f32 0.0, %v1661
        %1663 = vdwg.mxu0
        %1664 = vmatprep.subr.bf16.mxu0 %v1443
        %1665 = vmatpush1.bf16.msra.mxu0 %v1440
        %1666 = vmatprep.subr.bf16.mxu0 0
        %1667 = vmatpush1.bf16.msra.mxu0 0
        %1668 = vmatprep.subr.bf16.mxu0 0
        %1669 = vmatpush1.bf16.msra.mxu0 0
        %1670 = vmatprep.subr.bf16.mxu0 0
        %1671 = vmatpush1.bf16.msra.mxu0 0
        %1672 = vmatprep.subr.bf16.mxu0 0
        %1673 = vmatpush1.bf16.msra.mxu0 0
        %1674 = vmatprep.subr.bf16.mxu0 0
        %1675 = vmatpush1.bf16.msra.mxu0 0
        %1676 = vmatprep.subr.bf16.mxu0 0
        %1677 = vmatpush1.bf16.msra.mxu0 0
        %1678 = vmatprep.subr.bf16.mxu0 0
        %1679 = vmatpush1.bf16.msra.mxu0 0
        %1680 = vmatprep.subr.bf16.mxu0 0
        %1681 = vmatpush1.bf16.msra.mxu0 0
        %1682 = vmatprep.subr.bf16.mxu0 0
        %1683 = vmatpush1.bf16.msra.mxu0 0
        %1684 = vmatprep.subr.bf16.mxu0 0
        %1685 = vmatpush1.bf16.msra.mxu0 0
        %1686 = vmatprep.subr.bf16.mxu0 0
        %1687 = vmatpush1.bf16.msra.mxu0 0
        %1688 = vmatprep.subr.bf16.mxu0 0
        %1689 = vmatpush1.bf16.msra.mxu0 0
        %1690 = vmatprep.subr.bf16.mxu0 0
        %1691 = vmatpush1.bf16.msra.mxu0 0
        %1692 = vmatprep.subr.bf16.mxu0 0
        %1693 = vmatpush1.bf16.msra.mxu0 0
        %1694 = vmatprep.subr.bf16.mxu0 0
        %1695 = vmatpush1.bf16.msra.mxu0 0
        %1696 = vmatprep.mubr.bf16.mxu0 0
        %1697 = vmatmul.mubr.bf16.gmra.mrb[0].mxu0 %v1409
        %v1698 = vpop.f32.mrb[0].mxu0
        %v1699 = vadd.f32 0.0, %v1698
        %v1700 = vpop.f32.mrb[0].mxu0
        %v1701 = vadd.f32 0.0, %v1700
        %v1702 = vpop.f32.mrb[0].mxu0
        %v1703 = vadd.f32 0.0, %v1702
        %v1704 = vpop.f32.mrb[0].mxu0
        %v1705 = vadd.f32 0.0, %v1704
        %1706 = vmatprep.mubr.bf16.mxu0 0
        %1707 = vmatmul.mubr.bf16.gmra.mrb[0].mxu0 %v1412
        %v1708 = vpop.f32.mrb[0].mxu0
        %v1709 = vadd.f32 0.0, %v1708
        %v1710 = vpop.f32.mrb[0].mxu0
        %v1711 = vadd.f32 0.0, %v1710
        %v1712 = vpop.f32.mrb[0].mxu0
        %v1713 = vadd.f32 0.0, %v1712
        %v1714 = vpop.f32.mrb[0].mxu0
        %v1715 = vadd.f32 0.0, %v1714
        %1716 = vmatprep.mubr.bf16.mxu0 0
        %1717 = vmatmul.mubr.bf16.gmra.mrb[0].mxu0 %v1415
        %v1718 = vpop.f32.mrb[0].mxu0
        %v1719 = vadd.f32 0.0, %v1718
        %v1720 = vpop.f32.mrb[0].mxu0
        %v1721 = vadd.f32 0.0, %v1720
        %v1722 = vpop.f32.mrb[0].mxu0
        %v1723 = vadd.f32 0.0, %v1722
        %v1724 = vpop.f32.mrb[0].mxu0
        %v1725 = vadd.f32 0.0, %v1724
        %1726 = vmatprep.mubr.bf16.mxu0 0
        %1727 = vmatmul.mubr.bf16.gmra.mrb[0].mxu0 %v1418
        %v1728 = vpop.f32.mrb[0].mxu0
        %v1729 = vadd.f32 0.0, %v1728
        %v1730 = vpop.f32.mrb[0].mxu0
        %v1731 = vadd.f32 0.0, %v1730
        %v1732 = vpop.f32.mrb[0].mxu0
        %v1733 = vadd.f32 0.0, %v1732
        %v1734 = vpop.f32.mrb[0].mxu0
        %v1735 = vadd.f32 0.0, %v1734
        %1736 = vdwg.mxu0
        %v1753 = vunpack.c.l.b16 %v1090
        %v1754 = vunpack.c.h.b16 %v1090
        %v1755 = vunpack.c.l.b16 %v1091
        %v1756 = vunpack.c.h.b16 %v1091
        %v1757 = vunpack.c.l.b16 %v1092
        %v1758 = vunpack.c.h.b16 %v1092
        %v1759 = vunpack.c.l.b16 %v1093
        %v1760 = vunpack.c.h.b16 %v1093
        %v1761 = vunpack.c.l.b16 %v1094
        %v1762 = vunpack.c.h.b16 %v1094
        %v1763 = vunpack.c.l.b16 %v1095
        %v1764 = vunpack.c.h.b16 %v1095
        %v1765 = vunpack.c.l.b16 %v1096
        %v1766 = vunpack.c.h.b16 %v1096
        %v1767 = vunpack.c.l.b16 %v1097
        %v1768 = vunpack.c.h.b16 %v1097
        %v1769 = vunpack.c.l.b16 %v1098
        %v1770 = vunpack.c.h.b16 %v1098
        %v1771 = vunpack.c.l.b16 %v1099
        %v1772 = vunpack.c.h.b16 %v1099
        %v1773 = vunpack.c.l.b16 %v1100
        %v1774 = vunpack.c.h.b16 %v1100
        %v1775 = vunpack.c.l.b16 %v1101
        %v1776 = vunpack.c.h.b16 %v1101
        %v1777 = vunpack.c.l.b16 %v1102
        %v1778 = vunpack.c.h.b16 %v1102
        %v1779 = vunpack.c.l.b16 %v1103
        %v1780 = vunpack.c.h.b16 %v1103
        %v1781 = vunpack.c.l.b16 %v1104
        %v1782 = vunpack.c.h.b16 %v1104
        %v1783 = vunpack.c.l.b16 %v1105
        %v1784 = vunpack.c.h.b16 %v1105
        %v1785 = vpack.c.b16 %v1761, %v1753
        %v1786 = vpack.c.b16 %v1762, %v1754
        %v1787 = vpack.c.b16 %v1763, %v1755
        %v1788 = vpack.c.b16 %v1764, %v1756
        %v1789 = vpack.c.b16 %v1765, %v1757
        %v1790 = vpack.c.b16 %v1766, %v1758
        %v1791 = vpack.c.b16 %v1767, %v1759
        %v1792 = vpack.c.b16 %v1768, %v1760
        %v1793 = vpack.c.b16 %v1777, %v1769
        %v1794 = vpack.c.b16 %v1778, %v1770
        %v1795 = vpack.c.b16 %v1779, %v1771
        %v1796 = vpack.c.b16 %v1780, %v1772
        %v1797 = vpack.c.b16 %v1781, %v1773
        %v1798 = vpack.c.b16 %v1782, %v1774
        %v1799 = vpack.c.b16 %v1783, %v1775
        %v1800 = vpack.c.b16 %v1784, %v1776
        %v1818 = vsel %vm724, %v1131, 0
        %1820 = vmatprep.subr.bf16.mxu0 %v1786
        %1821 = vmatpush1.bf16.msra.mxu0 %v1785
        %1822 = vmatprep.subr.bf16.mxu0 %v1794
        %1823 = vmatpush1.bf16.msra.mxu0 %v1793
        %1824 = vmatprep.subr.bf16.mxu0 0
        %1825 = vmatpush1.bf16.msra.mxu0 0
        %1826 = vmatprep.subr.bf16.mxu0 0
        %1827 = vmatpush1.bf16.msra.mxu0 0
        %1828 = vmatprep.subr.bf16.mxu0 0
        %1829 = vmatpush1.bf16.msra.mxu0 0
        %1830 = vmatprep.subr.bf16.mxu0 0
        %1831 = vmatpush1.bf16.msra.mxu0 0
        %1832 = vmatprep.subr.bf16.mxu0 0
        %1833 = vmatpush1.bf16.msra.mxu0 0
        %1834 = vmatprep.subr.bf16.mxu0 0
        %1835 = vmatpush1.bf16.msra.mxu0 0
        %1836 = vmatprep.subr.bf16.mxu0 0
        %1837 = vmatpush1.bf16.msra.mxu0 0
        %1838 = vmatprep.subr.bf16.mxu0 0
        %1839 = vmatpush1.bf16.msra.mxu0 0
        %1840 = vmatprep.subr.bf16.mxu0 0
        %1841 = vmatpush1.bf16.msra.mxu0 0
        %1842 = vmatprep.subr.bf16.mxu0 0
        %1843 = vmatpush1.bf16.msra.mxu0 0
        %1844 = vmatprep.subr.bf16.mxu0 0
        %1845 = vmatpush1.bf16.msra.mxu0 0
        %1846 = vmatprep.subr.bf16.mxu0 0
        %1847 = vmatpush1.bf16.msra.mxu0 0
        %1848 = vmatprep.subr.bf16.mxu0 0
        %1849 = vmatpush1.bf16.msra.mxu0 0
        %1850 = vmatprep.subr.bf16.mxu0 0
        %1851 = vmatpush1.bf16.msra.mxu0 0
        %1852 = vmatprep.mubr.bf16.mxu0 0
        %1853 = vmatmul.mubr.bf16.gmra.mrb[0].mxu0 %v1818
        %v1854 = vpop.f32.mrb[0].mxu0
        %v1855 = vadd.f32 0.0, %v1854
        %v1856 = vpop.f32.mrb[0].mxu0
        %v1857 = vadd.f32 0.0, %v1856
        %v1858 = vpop.f32.mrb[0].mxu0
        %v1859 = vpop.f32.mrb[0].mxu0
        %1860 = vdwg.mxu0
        %1861 = vmatprep.subr.bf16.mxu0 %v1788
        %1862 = vmatpush1.bf16.msra.mxu0 %v1787
        %1863 = vmatprep.subr.bf16.mxu0 %v1796
        %1864 = vmatpush1.bf16.msra.mxu0 %v1795
        %1865 = vmatprep.subr.bf16.mxu0 0
        %1866 = vmatpush1.bf16.msra.mxu0 0
        %1867 = vmatprep.subr.bf16.mxu0 0
        %1868 = vmatpush1.bf16.msra.mxu0 0
        %1869 = vmatprep.subr.bf16.mxu0 0
        %1870 = vmatpush1.bf16.msra.mxu0 0
        %1871 = vmatprep.subr.bf16.mxu0 0
        %1872 = vmatpush1.bf16.msra.mxu0 0
        %1873 = vmatprep.subr.bf16.mxu0 0
        %1874 = vmatpush1.bf16.msra.mxu0 0
        %1875 = vmatprep.subr.bf16.mxu0 0
        %1876 = vmatpush1.bf16.msra.mxu0 0
        %1877 = vmatprep.subr.bf16.mxu0 0
        %1878 = vmatpush1.bf16.msra.mxu0 0
        %1879 = vmatprep.subr.bf16.mxu0 0
        %1880 = vmatpush1.bf16.msra.mxu0 0
        %1881 = vmatprep.subr.bf16.mxu0 0
        %1882 = vmatpush1.bf16.msra.mxu0 0
        %1883 = vmatprep.subr.bf16.mxu0 0
        %1884 = vmatpush1.bf16.msra.mxu0 0
        %1885 = vmatprep.subr.bf16.mxu0 0
        %1886 = vmatpush1.bf16.msra.mxu0 0
        %1887 = vmatprep.subr.bf16.mxu0 0
        %1888 = vmatpush1.bf16.msra.mxu0 0
        %1889 = vmatprep.subr.bf16.mxu0 0
        %1890 = vmatpush1.bf16.msra.mxu0 0
        %1891 = vmatprep.subr.bf16.mxu0 0
        %1892 = vmatpush1.bf16.msra.mxu0 0
        %1893 = vmatprep.mubr.bf16.mxu0 0
        %1894 = vmatmul.mubr.bf16.gmra.mrb[0].mxu0 %v1818
        %v1895 = vpop.f32.mrb[0].mxu0
        %v1896 = vadd.f32 0.0, %v1895
        %v1897 = vpop.f32.mrb[0].mxu0
        %v1898 = vadd.f32 0.0, %v1897
        %v1899 = vpop.f32.mrb[0].mxu0
        %v1900 = vpop.f32.mrb[0].mxu0
        %1901 = vdwg.mxu0
        %1902 = vmatprep.subr.bf16.mxu0 %v1790
        %1903 = vmatpush1.bf16.msra.mxu0 %v1789
        %1904 = vmatprep.subr.bf16.mxu0 %v1798
        %1905 = vmatpush1.bf16.msra.mxu0 %v1797
        %1906 = vmatprep.subr.bf16.mxu0 0
        %1907 = vmatpush1.bf16.msra.mxu0 0
        %1908 = vmatprep.subr.bf16.mxu0 0
        %1909 = vmatpush1.bf16.msra.mxu0 0
        %1910 = vmatprep.subr.bf16.mxu0 0
        %1911 = vmatpush1.bf16.msra.mxu0 0
        %1912 = vmatprep.subr.bf16.mxu0 0
        %1913 = vmatpush1.bf16.msra.mxu0 0
        %1914 = vmatprep.subr.bf16.mxu0 0
        %1915 = vmatpush1.bf16.msra.mxu0 0
        %1916 = vmatprep.subr.bf16.mxu0 0
        %1917 = vmatpush1.bf16.msra.mxu0 0
        %1918 = vmatprep.subr.bf16.mxu0 0
        %1919 = vmatpush1.bf16.msra.mxu0 0
        %1920 = vmatprep.subr.bf16.mxu0 0
        %1921 = vmatpush1.bf16.msra.mxu0 0
        %1922 = vmatprep.subr.bf16.mxu0 0
        %1923 = vmatpush1.bf16.msra.mxu0 0
        %1924 = vmatprep.subr.bf16.mxu0 0
        %1925 = vmatpush1.bf16.msra.mxu0 0
        %1926 = vmatprep.subr.bf16.mxu0 0
        %1927 = vmatpush1.bf16.msra.mxu0 0
        %1928 = vmatprep.subr.bf16.mxu0 0
        %1929 = vmatpush1.bf16.msra.mxu0 0
        %1930 = vmatprep.subr.bf16.mxu0 0
        %1931 = vmatpush1.bf16.msra.mxu0 0
        %1932 = vmatprep.subr.bf16.mxu0 0
        %1933 = vmatpush1.bf16.msra.mxu0 0
        %1934 = vmatprep.mubr.bf16.mxu0 0
        %1935 = vmatmul.mubr.bf16.gmra.mrb[0].mxu0 %v1818
        %v1936 = vpop.f32.mrb[0].mxu0
        %v1937 = vadd.f32 0.0, %v1936
        %v1938 = vpop.f32.mrb[0].mxu0
        %v1939 = vadd.f32 0.0, %v1938
        %v1940 = vpop.f32.mrb[0].mxu0
        %v1941 = vpop.f32.mrb[0].mxu0
        %1942 = vdwg.mxu0
        %1943 = vmatprep.subr.bf16.mxu0 %v1792
        %1944 = vmatpush1.bf16.msra.mxu0 %v1791
        %1945 = vmatprep.subr.bf16.mxu0 %v1800
        %1946 = vmatpush1.bf16.msra.mxu0 %v1799
        %1947 = vmatprep.subr.bf16.mxu0 0
        %1948 = vmatpush1.bf16.msra.mxu0 0
        %1949 = vmatprep.subr.bf16.mxu0 0
        %1950 = vmatpush1.bf16.msra.mxu0 0
        %1951 = vmatprep.subr.bf16.mxu0 0
        %1952 = vmatpush1.bf16.msra.mxu0 0
        %1953 = vmatprep.subr.bf16.mxu0 0
        %1954 = vmatpush1.bf16.msra.mxu0 0
        %1955 = vmatprep.subr.bf16.mxu0 0
        %1956 = vmatpush1.bf16.msra.mxu0 0
        %1957 = vmatprep.subr.bf16.mxu0 0
        %1958 = vmatpush1.bf16.msra.mxu0 0
        %1959 = vmatprep.subr.bf16.mxu0 0
        %1960 = vmatpush1.bf16.msra.mxu0 0
        %1961 = vmatprep.subr.bf16.mxu0 0
        %1962 = vmatpush1.bf16.msra.mxu0 0
        %1963 = vmatprep.subr.bf16.mxu0 0
        %1964 = vmatpush1.bf16.msra.mxu0 0
        %1965 = vmatprep.subr.bf16.mxu0 0
        %1966 = vmatpush1.bf16.msra.mxu0 0
        %1967 = vmatprep.subr.bf16.mxu0 0
        %1968 = vmatpush1.bf16.msra.mxu0 0
        %1969 = vmatprep.subr.bf16.mxu0 0
        %1970 = vmatpush1.bf16.msra.mxu0 0
        %1971 = vmatprep.subr.bf16.mxu0 0
        %1972 = vmatpush1.bf16.msra.mxu0 0
        %1973 = vmatprep.subr.bf16.mxu0 0
        %1974 = vmatpush1.bf16.msra.mxu0 0
        %1975 = vmatprep.mubr.bf16.mxu0 0
        %1976 = vmatmul.mubr.bf16.gmra.mrb[0].mxu0 %v1818
        %v1977 = vpop.f32.mrb[0].mxu0
        %v1978 = vadd.f32 0.0, %v1977
        %v1979 = vpop.f32.mrb[0].mxu0
        %v1980 = vadd.f32 0.0, %v1979
        %v1981 = vpop.f32.mrb[0].mxu0
        %v1982 = vpop.f32.mrb[0].mxu0
        %1983 = vdwg.mxu0
        %v1984 = vpack.c.bf16 %v1855, %v1855
        %v1985 = vpack.c.bf16 %v1857, %v1857
        %v1986 = vpack.c.bf16 %v1896, %v1896
        %v1987 = vpack.c.bf16 %v1898, %v1898
        %v1988 = vpack.c.bf16 %v1937, %v1937
        %v1989 = vpack.c.bf16 %v1939, %v1939
        %v1990 = vpack.c.bf16 %v1978, %v1978
        %v1991 = vpack.c.bf16 %v1980, %v1980
        %v2000 = vunpack.c.l.b16 %v1114
        %v2001 = vunpack.c.l.b16 %v1115
        %v2002 = vunpack.c.l.b16 %v1116
        %v2003 = vunpack.c.l.b16 %v1117
        %v2004 = vunpack.c.l.b16 %v1118
        %v2005 = vunpack.c.l.b16 %v1119
        %v2006 = vunpack.c.l.b16 %v1120
        %v2007 = vunpack.c.l.b16 %v1121
        %v2008 = vpack.c.b16 %v2001, %v2000
        %v2009 = vpack.c.b16 %v2003, %v2002
        %v2010 = vpack.c.b16 %v2005, %v2004
        %v2011 = vpack.c.b16 %v2007, %v2006
        %v2013 = vsel %vm1407, %v2008, 0
        %v2016 = vsel %vm1407, %v2009, 0
        %v2019 = vsel %vm1407, %v2010, 0
        %v2022 = vsel %vm1407, %v2011, 0
        %v2025 = vsel %vm1420, %v1984, 0
        %v2028 = vsel %vm1420, %v1985, 0
        %v2031 = vsel %vm1420, %v1986, 0
        %v2034 = vsel %vm1420, %v1987, 0
        %v2037 = vsel %vm1420, %v1988, 0
        %v2040 = vsel %vm1420, %v1989, 0
        %v2043 = vsel %vm1420, %v1990, 0
        %v2046 = vsel %vm1420, %v1991, 0
        %2048 = vmatprep.subr.bf16.mxu0 %v2028
        %2049 = vmatpush1.bf16.msra.mxu0 %v2025
        %2050 = vmatprep.subr.bf16.mxu0 0
        %2051 = vmatpush1.bf16.msra.mxu0 0
        %2052 = vmatprep.subr.bf16.mxu0 0
        %2053 = vmatpush1.bf16.msra.mxu0 0
        %2054 = vmatprep.subr.bf16.mxu0 0
        %2055 = vmatpush1.bf16.msra.mxu0 0
        %2056 = vmatprep.subr.bf16.mxu0 0
        %2057 = vmatpush1.bf16.msra.mxu0 0
        %2058 = vmatprep.subr.bf16.mxu0 0
        %2059 = vmatpush1.bf16.msra.mxu0 0
        %2060 = vmatprep.subr.bf16.mxu0 0
        %2061 = vmatpush1.bf16.msra.mxu0 0
        %2062 = vmatprep.subr.bf16.mxu0 0
        %2063 = vmatpush1.bf16.msra.mxu0 0
        %2064 = vmatprep.subr.bf16.mxu0 0
        %2065 = vmatpush1.bf16.msra.mxu0 0
        %2066 = vmatprep.subr.bf16.mxu0 0
        %2067 = vmatpush1.bf16.msra.mxu0 0
        %2068 = vmatprep.subr.bf16.mxu0 0
        %2069 = vmatpush1.bf16.msra.mxu0 0
        %2070 = vmatprep.subr.bf16.mxu0 0
        %2071 = vmatpush1.bf16.msra.mxu0 0
        %2072 = vmatprep.subr.bf16.mxu0 0
        %2073 = vmatpush1.bf16.msra.mxu0 0
        %2074 = vmatprep.subr.bf16.mxu0 0
        %2075 = vmatpush1.bf16.msra.mxu0 0
        %2076 = vmatprep.subr.bf16.mxu0 0
        %2077 = vmatpush1.bf16.msra.mxu0 0
        %2078 = vmatprep.subr.bf16.mxu0 0
        %2079 = vmatpush1.bf16.msra.mxu0 0
        %2080 = vmatprep.mubr.bf16.mxu0 0
        %2081 = vmatmul.mubr.bf16.gmra.mrb[0].mxu0 %v2013
        %v2082 = vpop.f32.mrb[0].mxu0
        %v2083 = vadd.f32 0.0, %v2082
        %v2084 = vpop.f32.mrb[0].mxu0
        %v2085 = vadd.f32 0.0, %v2084
        %v2086 = vpop.f32.mrb[0].mxu0
        %v2087 = vadd.f32 0.0, %v2086
        %v2088 = vpop.f32.mrb[0].mxu0
        %v2089 = vadd.f32 0.0, %v2088
        %2090 = vmatprep.mubr.bf16.mxu0 0
        %2091 = vmatmul.mubr.bf16.gmra.mrb[0].mxu0 %v2016
        %v2092 = vpop.f32.mrb[0].mxu0
        %v2093 = vadd.f32 0.0, %v2092
        %v2094 = vpop.f32.mrb[0].mxu0
        %v2095 = vadd.f32 0.0, %v2094
        %v2096 = vpop.f32.mrb[0].mxu0
        %v2097 = vadd.f32 0.0, %v2096
        %v2098 = vpop.f32.mrb[0].mxu0
        %v2099 = vadd.f32 0.0, %v2098
        %2100 = vmatprep.mubr.bf16.mxu0 0
        %2101 = vmatmul.mubr.bf16.gmra.mrb[0].mxu0 %v2019
        %v2102 = vpop.f32.mrb[0].mxu0
        %v2103 = vadd.f32 0.0, %v2102
        %v2104 = vpop.f32.mrb[0].mxu0
        %v2105 = vadd.f32 0.0, %v2104
        %v2106 = vpop.f32.mrb[0].mxu0
        %v2107 = vadd.f32 0.0, %v2106
        %v2108 = vpop.f32.mrb[0].mxu0
        %v2109 = vadd.f32 0.0, %v2108
        %2110 = vmatprep.mubr.bf16.mxu0 0
        %2111 = vmatmul.mubr.bf16.gmra.mrb[0].mxu0 %v2022
        %v2112 = vpop.f32.mrb[0].mxu0
        %v2113 = vadd.f32 0.0, %v2112
        %v2114 = vpop.f32.mrb[0].mxu0
        %v2115 = vadd.f32 0.0, %v2114
        %v2116 = vpop.f32.mrb[0].mxu0
        %v2117 = vadd.f32 0.0, %v2116
        %v2118 = vpop.f32.mrb[0].mxu0
        %v2119 = vadd.f32 0.0, %v2118
        %2120 = vdwg.mxu0
        %2121 = vmatprep.subr.bf16.mxu0 %v2034
        %2122 = vmatpush1.bf16.msra.mxu0 %v2031
        %2123 = vmatprep.subr.bf16.mxu0 0
        %2124 = vmatpush1.bf16.msra.mxu0 0
        %2125 = vmatprep.subr.bf16.mxu0 0
        %2126 = vmatpush1.bf16.msra.mxu0 0
        %2127 = vmatprep.subr.bf16.mxu0 0
        %2128 = vmatpush1.bf16.msra.mxu0 0
        %2129 = vmatprep.subr.bf16.mxu0 0
        %2130 = vmatpush1.bf16.msra.mxu0 0
        %2131 = vmatprep.subr.bf16.mxu0 0
        %2132 = vmatpush1.bf16.msra.mxu0 0
        %2133 = vmatprep.subr.bf16.mxu0 0
        %2134 = vmatpush1.bf16.msra.mxu0 0
        %2135 = vmatprep.subr.bf16.mxu0 0
        %2136 = vmatpush1.bf16.msra.mxu0 0
        %2137 = vmatprep.subr.bf16.mxu0 0
        %2138 = vmatpush1.bf16.msra.mxu0 0
        %2139 = vmatprep.subr.bf16.mxu0 0
        %2140 = vmatpush1.bf16.msra.mxu0 0
        %2141 = vmatprep.subr.bf16.mxu0 0
        %2142 = vmatpush1.bf16.msra.mxu0 0
        %2143 = vmatprep.subr.bf16.mxu0 0
        %2144 = vmatpush1.bf16.msra.mxu0 0
        %2145 = vmatprep.subr.bf16.mxu0 0
        %2146 = vmatpush1.bf16.msra.mxu0 0
        %2147 = vmatprep.subr.bf16.mxu0 0
        %2148 = vmatpush1.bf16.msra.mxu0 0
        %2149 = vmatprep.subr.bf16.mxu0 0
        %2150 = vmatpush1.bf16.msra.mxu0 0
        %2151 = vmatprep.subr.bf16.mxu0 0
        %2152 = vmatpush1.bf16.msra.mxu0 0
        %2153 = vmatprep.mubr.bf16.mxu0 0
        %2154 = vmatmul.mubr.bf16.gmra.mrb[0].mxu0 %v2013
        %v2155 = vpop.f32.mrb[0].mxu0
        %v2156 = vadd.f32 0.0, %v2155
        %v2157 = vpop.f32.mrb[0].mxu0
        %v2158 = vadd.f32 0.0, %v2157
        %v2159 = vpop.f32.mrb[0].mxu0
        %v2160 = vadd.f32 0.0, %v2159
        %v2161 = vpop.f32.mrb[0].mxu0
        %v2162 = vadd.f32 0.0, %v2161
        %2163 = vmatprep.mubr.bf16.mxu0 0
        %2164 = vmatmul.mubr.bf16.gmra.mrb[0].mxu0 %v2016
        %v2165 = vpop.f32.mrb[0].mxu0
        %v2166 = vadd.f32 0.0, %v2165
        %v2167 = vpop.f32.mrb[0].mxu0
        %v2168 = vadd.f32 0.0, %v2167
        %v2169 = vpop.f32.mrb[0].mxu0
        %v2170 = vadd.f32 0.0, %v2169
        %v2171 = vpop.f32.mrb[0].mxu0
        %v2172 = vadd.f32 0.0, %v2171
        %2173 = vmatprep.mubr.bf16.mxu0 0
        %2174 = vmatmul.mubr.bf16.gmra.mrb[0].mxu0 %v2019
        %v2175 = vpop.f32.mrb[0].mxu0
        %v2176 = vadd.f32 0.0, %v2175
        %v2177 = vpop.f32.mrb[0].mxu0
        %v2178 = vadd.f32 0.0, %v2177
        %v2179 = vpop.f32.mrb[0].mxu0
        %v2180 = vadd.f32 0.0, %v2179
        %v2181 = vpop.f32.mrb[0].mxu0
        %v2182 = vadd.f32 0.0, %v2181
        %2183 = vmatprep.mubr.bf16.mxu0 0
        %2184 = vmatmul.mubr.bf16.gmra.mrb[0].mxu0 %v2022
        %v2185 = vpop.f32.mrb[0].mxu0
        %v2186 = vadd.f32 0.0, %v2185
        %v2187 = vpop.f32.mrb[0].mxu0
        %v2188 = vadd.f32 0.0, %v2187
        %v2189 = vpop.f32.mrb[0].mxu0
        %v2190 = vadd.f32 0.0, %v2189
        %v2191 = vpop.f32.mrb[0].mxu0
        %v2192 = vadd.f32 0.0, %v2191
        %2193 = vdwg.mxu0
        %2194 = vmatprep.subr.bf16.mxu0 %v2040
        %2195 = vmatpush1.bf16.msra.mxu0 %v2037
        %2196 = vmatprep.subr.bf16.mxu0 0
        %2197 = vmatpush1.bf16.msra.mxu0 0
        %2198 = vmatprep.subr.bf16.mxu0 0
        %2199 = vmatpush1.bf16.msra.mxu0 0
        %2200 = vmatprep.subr.bf16.mxu0 0
        %2201 = vmatpush1.bf16.msra.mxu0 0
        %2202 = vmatprep.subr.bf16.mxu0 0
        %2203 = vmatpush1.bf16.msra.mxu0 0
        %2204 = vmatprep.subr.bf16.mxu0 0
        %2205 = vmatpush1.bf16.msra.mxu0 0
        %2206 = vmatprep.subr.bf16.mxu0 0
        %2207 = vmatpush1.bf16.msra.mxu0 0
        %2208 = vmatprep.subr.bf16.mxu0 0
        %2209 = vmatpush1.bf16.msra.mxu0 0
        %2210 = vmatprep.subr.bf16.mxu0 0
        %2211 = vmatpush1.bf16.msra.mxu0 0
        %2212 = vmatprep.subr.bf16.mxu0 0
        %2213 = vmatpush1.bf16.msra.mxu0 0
        %2214 = vmatprep.subr.bf16.mxu0 0
        %2215 = vmatpush1.bf16.msra.mxu0 0
        %2216 = vmatprep.subr.bf16.mxu0 0
        %2217 = vmatpush1.bf16.msra.mxu0 0
        %2218 = vmatprep.subr.bf16.mxu0 0
        %2219 = vmatpush1.bf16.msra.mxu0 0
        %2220 = vmatprep.subr.bf16.mxu0 0
        %2221 = vmatpush1.bf16.msra.mxu0 0
        %2222 = vmatprep.subr.bf16.mxu0 0
        %2223 = vmatpush1.bf16.msra.mxu0 0
        %2224 = vmatprep.subr.bf16.mxu0 0
        %2225 = vmatpush1.bf16.msra.mxu0 0
        %2226 = vmatprep.mubr.bf16.mxu0 0
        %2227 = vmatmul.mubr.bf16.gmra.mrb[0].mxu0 %v2013
        %v2228 = vpop.f32.mrb[0].mxu0
        %v2229 = vadd.f32 0.0, %v2228
        %v2230 = vpop.f32.mrb[0].mxu0
        %v2231 = vadd.f32 0.0, %v2230
        %v2232 = vpop.f32.mrb[0].mxu0
        %v2233 = vadd.f32 0.0, %v2232
        %v2234 = vpop.f32.mrb[0].mxu0
        %v2235 = vadd.f32 0.0, %v2234
        %2236 = vmatprep.mubr.bf16.mxu0 0
        %2237 = vmatmul.mubr.bf16.gmra.mrb[0].mxu0 %v2016
        %v2238 = vpop.f32.mrb[0].mxu0
        %v2239 = vadd.f32 0.0, %v2238
        %v2240 = vpop.f32.mrb[0].mxu0
        %v2241 = vadd.f32 0.0, %v2240
        %v2242 = vpop.f32.mrb[0].mxu0
        %v2243 = vadd.f32 0.0, %v2242
        %v2244 = vpop.f32.mrb[0].mxu0
        %v2245 = vadd.f32 0.0, %v2244
        %2246 = vmatprep.mubr.bf16.mxu0 0
        %2247 = vmatmul.mubr.bf16.gmra.mrb[0].mxu0 %v2019
        %v2248 = vpop.f32.mrb[0].mxu0
        %v2249 = vadd.f32 0.0, %v2248
        %v2250 = vpop.f32.mrb[0].mxu0
        %v2251 = vadd.f32 0.0, %v2250
        %v2252 = vpop.f32.mrb[0].mxu0
        %v2253 = vadd.f32 0.0, %v2252
        %v2254 = vpop.f32.mrb[0].mxu0
        %v2255 = vadd.f32 0.0, %v2254
        %2256 = vmatprep.mubr.bf16.mxu0 0
        %2257 = vmatmul.mubr.bf16.gmra.mrb[0].mxu0 %v2022
        %v2258 = vpop.f32.mrb[0].mxu0
        %v2259 = vadd.f32 0.0, %v2258
        %v2260 = vpop.f32.mrb[0].mxu0
        %v2261 = vadd.f32 0.0, %v2260
        %v2262 = vpop.f32.mrb[0].mxu0
        %v2263 = vadd.f32 0.0, %v2262
        %v2264 = vpop.f32.mrb[0].mxu0
        %v2265 = vadd.f32 0.0, %v2264
        %2266 = vdwg.mxu0
        %2267 = vmatprep.subr.bf16.mxu0 %v2046
        %2268 = vmatpush1.bf16.msra.mxu0 %v2043
        %2269 = vmatprep.subr.bf16.mxu0 0
        %2270 = vmatpush1.bf16.msra.mxu0 0
        %2271 = vmatprep.subr.bf16.mxu0 0
        %2272 = vmatpush1.bf16.msra.mxu0 0
        %2273 = vmatprep.subr.bf16.mxu0 0
        %2274 = vmatpush1.bf16.msra.mxu0 0
        %2275 = vmatprep.subr.bf16.mxu0 0
        %2276 = vmatpush1.bf16.msra.mxu0 0
        %2277 = vmatprep.subr.bf16.mxu0 0
        %2278 = vmatpush1.bf16.msra.mxu0 0
        %2279 = vmatprep.subr.bf16.mxu0 0
        %2280 = vmatpush1.bf16.msra.mxu0 0
        %2281 = vmatprep.subr.bf16.mxu0 0
        %2282 = vmatpush1.bf16.msra.mxu0 0
        %2283 = vmatprep.subr.bf16.mxu0 0
        %2284 = vmatpush1.bf16.msra.mxu0 0
        %2285 = vmatprep.subr.bf16.mxu0 0
        %2286 = vmatpush1.bf16.msra.mxu0 0
        %2287 = vmatprep.subr.bf16.mxu0 0
        %2288 = vmatpush1.bf16.msra.mxu0 0
        %2289 = vmatprep.subr.bf16.mxu0 0
        %2290 = vmatpush1.bf16.msra.mxu0 0
        %2291 = vmatprep.subr.bf16.mxu0 0
        %2292 = vmatpush1.bf16.msra.mxu0 0
        %2293 = vmatprep.subr.bf16.mxu0 0
        %2294 = vmatpush1.bf16.msra.mxu0 0
        %2295 = vmatprep.subr.bf16.mxu0 0
        %2296 = vmatpush1.bf16.msra.mxu0 0
        %2297 = vmatprep.subr.bf16.mxu0 0
        %2298 = vmatpush1.bf16.msra.mxu0 0
        %2299 = vmatprep.mubr.bf16.mxu0 0
        %2300 = vmatmul.mubr.bf16.gmra.mrb[0].mxu0 %v2013
        %v2301 = vpop.f32.mrb[0].mxu0
        %v2302 = vadd.f32 0.0, %v2301
        %v2303 = vpop.f32.mrb[0].mxu0
        %v2304 = vadd.f32 0.0, %v2303
        %v2305 = vpop.f32.mrb[0].mxu0
        %v2306 = vadd.f32 0.0, %v2305
        %v2307 = vpop.f32.mrb[0].mxu0
        %v2308 = vadd.f32 0.0, %v2307
        %2309 = vmatprep.mubr.bf16.mxu0 0
        %2310 = vmatmul.mubr.bf16.gmra.mrb[0].mxu0 %v2016
        %v2311 = vpop.f32.mrb[0].mxu0
        %v2312 = vadd.f32 0.0, %v2311
        %v2313 = vpop.f32.mrb[0].mxu0
        %v2314 = vadd.f32 0.0, %v2313
        %v2315 = vpop.f32.mrb[0].mxu0
        %v2316 = vadd.f32 0.0, %v2315
        %v2317 = vpop.f32.mrb[0].mxu0
        %v2318 = vadd.f32 0.0, %v2317
        %2319 = vmatprep.mubr.bf16.mxu0 0
        %2320 = vmatmul.mubr.bf16.gmra.mrb[0].mxu0 %v2019
        %v2321 = vpop.f32.mrb[0].mxu0
        %v2322 = vadd.f32 0.0, %v2321
        %v2323 = vpop.f32.mrb[0].mxu0
        %v2324 = vadd.f32 0.0, %v2323
        %v2325 = vpop.f32.mrb[0].mxu0
        %v2326 = vadd.f32 0.0, %v2325
        %v2327 = vpop.f32.mrb[0].mxu0
        %v2328 = vadd.f32 0.0, %v2327
        %2329 = vmatprep.mubr.bf16.mxu0 0
        %2330 = vmatmul.mubr.bf16.gmra.mrb[0].mxu0 %v2022
        %v2331 = vpop.f32.mrb[0].mxu0
        %v2332 = vadd.f32 0.0, %v2331
        %v2333 = vpop.f32.mrb[0].mxu0
        %v2334 = vadd.f32 0.0, %v2333
        %v2335 = vpop.f32.mrb[0].mxu0
        %v2336 = vadd.f32 0.0, %v2335
        %v2337 = vpop.f32.mrb[0].mxu0
        %v2338 = vadd.f32 0.0, %v2337
        %2339 = vdwg.mxu0
        %v2340 = vmul.f32 %v1480, %v2083
        %v2341 = vmul.f32 %v1482, %v2085
        %v2342 = vmul.f32 %v1553, %v2156
        %v2343 = vmul.f32 %v1555, %v2158
        %v2344 = vmul.f32 %v1626, %v2229
        %v2345 = vmul.f32 %v1628, %v2231
        %v2346 = vmul.f32 %v1699, %v2302
        %v2347 = vmul.f32 %v1701, %v2304
        %v2348 = vmul.f32 %v1484, %v2087
        %v2349 = vmul.f32 %v1486, %v2089
        %v2350 = vmul.f32 %v1557, %v2160
        %v2351 = vmul.f32 %v1559, %v2162
        %v2352 = vmul.f32 %v1630, %v2233
        %v2353 = vmul.f32 %v1632, %v2235
        %v2354 = vmul.f32 %v1703, %v2306
        %v2355 = vmul.f32 %v1705, %v2308
        %v2356 = vmul.f32 %v1490, %v2093
        %v2357 = vmul.f32 %v1492, %v2095
        %v2358 = vmul.f32 %v1563, %v2166
        %v2359 = vmul.f32 %v1565, %v2168
        %v2360 = vmul.f32 %v1636, %v2239
        %v2361 = vmul.f32 %v1638, %v2241
        %v2362 = vmul.f32 %v1709, %v2312
        %v2363 = vmul.f32 %v1711, %v2314
        %v2364 = vmul.f32 %v1494, %v2097
        %v2365 = vmul.f32 %v1496, %v2099
        %v2366 = vmul.f32 %v1567, %v2170
        %v2367 = vmul.f32 %v1569, %v2172
        %v2368 = vmul.f32 %v1640, %v2243
        %v2369 = vmul.f32 %v1642, %v2245
        %v2370 = vmul.f32 %v1713, %v2316
        %v2371 = vmul.f32 %v1715, %v2318
        %v2372 = vmul.f32 %v1500, %v2103
        %v2373 = vmul.f32 %v1502, %v2105
        %v2374 = vmul.f32 %v1573, %v2176
        %v2375 = vmul.f32 %v1575, %v2178
        %v2376 = vmul.f32 %v1646, %v2249
        %v2377 = vmul.f32 %v1648, %v2251
        %v2378 = vmul.f32 %v1719, %v2322
        %v2379 = vmul.f32 %v1721, %v2324
        %v2380 = vmul.f32 %v1504, %v2107
        %v2381 = vmul.f32 %v1506, %v2109
        %v2382 = vmul.f32 %v1577, %v2180
        %v2383 = vmul.f32 %v1579, %v2182
        %v2384 = vmul.f32 %v1650, %v2253
        %v2385 = vmul.f32 %v1652, %v2255
        %v2386 = vmul.f32 %v1723, %v2326
        %v2387 = vmul.f32 %v1725, %v2328
        %v2388 = vmul.f32 %v1510, %v2113
        %v2389 = vmul.f32 %v1512, %v2115
        %v2390 = vmul.f32 %v1583, %v2186
        %v2391 = vmul.f32 %v1585, %v2188
        %v2392 = vmul.f32 %v1656, %v2259
        %v2393 = vmul.f32 %v1658, %v2261
        %v2394 = vmul.f32 %v1729, %v2332
        %v2395 = vmul.f32 %v1731, %v2334
        %v2396 = vmul.f32 %v1514, %v2117
        %v2397 = vmul.f32 %v1516, %v2119
        %v2398 = vmul.f32 %v1587, %v2190
        %v2399 = vmul.f32 %v1589, %v2192
        %v2400 = vmul.f32 %v1660, %v2263
        %v2401 = vmul.f32 %v1662, %v2265
        %v2402 = vmul.f32 %v1733, %v2336
        %v2403 = vmul.f32 %v1735, %v2338
        %2404 = vmatprep.subr.mxu0 %v2341
        %2405 = vmatpush1.xpose.msra.mxu0 %v2340
        %2406 = vmatprep.subr.mxu0 %v2349
        %2407 = vmatpush1.xpose.msra.mxu0 %v2348
        %2408 = vmatprep.subr.mxu0 %v2357
        %2409 = vmatpush1.xpose.msra.mxu0 %v2356
        %2410 = vmatprep.subr.mxu0 %v2365
        %2411 = vmatpush1.xpose.msra.mxu0 %v2364
        %2412 = vmatprep.subr.mxu0 %v2373
        %2413 = vmatpush1.xpose.msra.mxu0 %v2372
        %2414 = vmatprep.subr.mxu0 %v2381
        %2415 = vmatpush1.xpose.msra.mxu0 %v2380
        %2416 = vmatprep.subr.mxu0 %v2389
        %2417 = vmatpush1.xpose.msra.mxu0 %v2388
        %2418 = vmatprep.subr.mxu0 %v2397
        %2419 = vmatpush1.xpose.msra.mxu0 %v2396
        %2420 = vmatprep.subr.mxu0 0.0
        %2421 = vmatpush1.xpose.msra.mxu0 0.0
        %2422 = vmatprep.subr.mxu0 0.0
        %2423 = vmatpush1.xpose.msra.mxu0 0.0
        %2424 = vmatprep.subr.mxu0 0.0
        %2425 = vmatpush1.xpose.msra.mxu0 0.0
        %2426 = vmatprep.subr.mxu0 0.0
        %2427 = vmatpush1.xpose.msra.mxu0 0.0
        %2428 = vmatprep.subr.mxu0 0.0
        %2429 = vmatpush1.xpose.msra.mxu0 0.0
        %2430 = vmatprep.subr.mxu0 0.0
        %2431 = vmatpush1.xpose.msra.mxu0 0.0
        %2432 = vmatprep.subr.mxu0 0.0
        %2433 = vmatpush1.xpose.msra.mxu0 0.0
        %2434 = vmatprep.subr.mxu0 0.0
        %2435 = vmatpush1.xpose.msra.mxu0 0.0
        %2436 = vmatprep.subr.mxu0 0.0
        %2437 = vmatpush1.xpose.msra.mxu0 0.0
        %2438 = vmatprep.subr.mxu0 0.0
        %2439 = vmatpush1.xpose.msra.mxu0 0.0
        %2440 = vmatprep.subr.mxu0 0.0
        %2441 = vmatpush1.xpose.msra.mxu0 0.0
        %2442 = vmatprep.subr.mxu0 0.0
        %2443 = vmatpush1.xpose.msra.mxu0 0.0
        %2444 = vmatprep.subr.mxu0 0.0
        %2445 = vmatpush1.xpose.msra.mxu0 0.0
        %2446 = vmatprep.subr.mxu0 0.0
        %2447 = vmatpush1.xpose.msra.mxu0 0.0
        %2448 = vmatprep.subr.mxu0 0.0
        %2449 = vmatpush1.xpose.msra.mxu0 0.0
        %2450 = vmatprep.subr.mxu0 0.0
        %2451 = vmatpush1.xpose.msra.mxu0 0.0
        %2452 = vmatprep.subr.mxu0 0.0
        %2453 = vmatpush1.xpose.msra.mxu0 0.0
        %2454 = vmatprep.subr.mxu0 0.0
        %2455 = vmatpush1.xpose.msra.mxu0 0.0
        %2456 = vmatprep.subr.mxu0 0.0
        %2457 = vmatpush1.xpose.msra.mxu0 0.0
        %2458 = vmatprep.subr.mxu0 0.0
        %2459 = vmatpush1.xpose.msra.mxu0 0.0
        %2460 = vmatprep.subr.mxu0 0.0
        %2461 = vmatpush1.xpose.msra.mxu0 0.0
        %2462 = vmatprep.subr.mxu0 0.0
        %2463 = vmatpush1.xpose.msra.mxu0 0.0
        %2464 = vmatprep.subr.mxu0 0.0
        %2465 = vmatpush1.xpose.msra.mxu0 0.0
        %2466 = vmatprep.subr.mxu0 0.0
        %2467 = vmatpush1.xpose.msra.mxu0 0.0
        %2468 = vmatprep.mubr.f32.mxu0 %v765
        %2469 = vmatmul.mubr.f32.gmra.mrb[0].mxu0 %v763
        %v2470 = vpop.f32.mrb[0].mxu0
        %v2471 = vadd.f32 0.0, %v2470
        %v2472 = vpop.f32.mrb[0].mxu0
        %2473 = vdwg.mxu0
        %2474 = vmatprep.subr.mxu0 %v2343
        %2475 = vmatpush1.xpose.msra.mxu0 %v2342
        %2476 = vmatprep.subr.mxu0 %v2351
        %2477 = vmatpush1.xpose.msra.mxu0 %v2350
        %2478 = vmatprep.subr.mxu0 %v2359
        %2479 = vmatpush1.xpose.msra.mxu0 %v2358
        %2480 = vmatprep.subr.mxu0 %v2367
        %2481 = vmatpush1.xpose.msra.mxu0 %v2366
        %2482 = vmatprep.subr.mxu0 %v2375
        %2483 = vmatpush1.xpose.msra.mxu0 %v2374
        %2484 = vmatprep.subr.mxu0 %v2383
        %2485 = vmatpush1.xpose.msra.mxu0 %v2382
        %2486 = vmatprep.subr.mxu0 %v2391
        %2487 = vmatpush1.xpose.msra.mxu0 %v2390
        %2488 = vmatprep.subr.mxu0 %v2399
        %2489 = vmatpush1.xpose.msra.mxu0 %v2398
        %2490 = vmatprep.subr.mxu0 0.0
        %2491 = vmatpush1.xpose.msra.mxu0 0.0
        %2492 = vmatprep.subr.mxu0 0.0
        %2493 = vmatpush1.xpose.msra.mxu0 0.0
        %2494 = vmatprep.subr.mxu0 0.0
        %2495 = vmatpush1.xpose.msra.mxu0 0.0
        %2496 = vmatprep.subr.mxu0 0.0
        %2497 = vmatpush1.xpose.msra.mxu0 0.0
        %2498 = vmatprep.subr.mxu0 0.0
        %2499 = vmatpush1.xpose.msra.mxu0 0.0
        %2500 = vmatprep.subr.mxu0 0.0
        %2501 = vmatpush1.xpose.msra.mxu0 0.0
        %2502 = vmatprep.subr.mxu0 0.0
        %2503 = vmatpush1.xpose.msra.mxu0 0.0
        %2504 = vmatprep.subr.mxu0 0.0
        %2505 = vmatpush1.xpose.msra.mxu0 0.0
        %2506 = vmatprep.subr.mxu0 0.0
        %2507 = vmatpush1.xpose.msra.mxu0 0.0
        %2508 = vmatprep.subr.mxu0 0.0
        %2509 = vmatpush1.xpose.msra.mxu0 0.0
        %2510 = vmatprep.subr.mxu0 0.0
        %2511 = vmatpush1.xpose.msra.mxu0 0.0
        %2512 = vmatprep.subr.mxu0 0.0
        %2513 = vmatpush1.xpose.msra.mxu0 0.0
        %2514 = vmatprep.subr.mxu0 0.0
        %2515 = vmatpush1.xpose.msra.mxu0 0.0
        %2516 = vmatprep.subr.mxu0 0.0
        %2517 = vmatpush1.xpose.msra.mxu0 0.0
        %2518 = vmatprep.subr.mxu0 0.0
        %2519 = vmatpush1.xpose.msra.mxu0 0.0
        %2520 = vmatprep.subr.mxu0 0.0
        %2521 = vmatpush1.xpose.msra.mxu0 0.0
        %2522 = vmatprep.subr.mxu0 0.0
        %2523 = vmatpush1.xpose.msra.mxu0 0.0
        %2524 = vmatprep.subr.mxu0 0.0
        %2525 = vmatpush1.xpose.msra.mxu0 0.0
        %2526 = vmatprep.subr.mxu0 0.0
        %2527 = vmatpush1.xpose.msra.mxu0 0.0
        %2528 = vmatprep.subr.mxu0 0.0
        %2529 = vmatpush1.xpose.msra.mxu0 0.0
        %2530 = vmatprep.subr.mxu0 0.0
        %2531 = vmatpush1.xpose.msra.mxu0 0.0
        %2532 = vmatprep.subr.mxu0 0.0
        %2533 = vmatpush1.xpose.msra.mxu0 0.0
        %2534 = vmatprep.subr.mxu0 0.0
        %2535 = vmatpush1.xpose.msra.mxu0 0.0
        %2536 = vmatprep.subr.mxu0 0.0
        %2537 = vmatpush1.xpose.msra.mxu0 0.0
        %2538 = vmatprep.mubr.f32.mxu0 %v808
        %2539 = vmatmul.mubr.f32.gmra.mrb[0].mxu0 %v806
        %v2540 = vpop.f32.mrb[0].mxu0
        %v2541 = vadd.f32 %v2471, %v2540
        %v2542 = vpop.f32.mrb[0].mxu0
        %2543 = vdwg.mxu0
        %2544 = vmatprep.subr.mxu0 %v2345
        %2545 = vmatpush1.xpose.msra.mxu0 %v2344
        %2546 = vmatprep.subr.mxu0 %v2353
        %2547 = vmatpush1.xpose.msra.mxu0 %v2352
        %2548 = vmatprep.subr.mxu0 %v2361
        %2549 = vmatpush1.xpose.msra.mxu0 %v2360
        %2550 = vmatprep.subr.mxu0 %v2369
        %2551 = vmatpush1.xpose.msra.mxu0 %v2368
        %2552 = vmatprep.subr.mxu0 %v2377
        %2553 = vmatpush1.xpose.msra.mxu0 %v2376
        %2554 = vmatprep.subr.mxu0 %v2385
        %2555 = vmatpush1.xpose.msra.mxu0 %v2384
        %2556 = vmatprep.subr.mxu0 %v2393
        %2557 = vmatpush1.xpose.msra.mxu0 %v2392
        %2558 = vmatprep.subr.mxu0 %v2401
        %2559 = vmatpush1.xpose.msra.mxu0 %v2400
        %2560 = vmatprep.subr.mxu0 0.0
        %2561 = vmatpush1.xpose.msra.mxu0 0.0
        %2562 = vmatprep.subr.mxu0 0.0
        %2563 = vmatpush1.xpose.msra.mxu0 0.0
        %2564 = vmatprep.subr.mxu0 0.0
        %2565 = vmatpush1.xpose.msra.mxu0 0.0
        %2566 = vmatprep.subr.mxu0 0.0
        %2567 = vmatpush1.xpose.msra.mxu0 0.0
        %2568 = vmatprep.subr.mxu0 0.0
        %2569 = vmatpush1.xpose.msra.mxu0 0.0
        %2570 = vmatprep.subr.mxu0 0.0
        %2571 = vmatpush1.xpose.msra.mxu0 0.0
        %2572 = vmatprep.subr.mxu0 0.0
        %2573 = vmatpush1.xpose.msra.mxu0 0.0
        %2574 = vmatprep.subr.mxu0 0.0
        %2575 = vmatpush1.xpose.msra.mxu0 0.0
        %2576 = vmatprep.subr.mxu0 0.0
        %2577 = vmatpush1.xpose.msra.mxu0 0.0
        %2578 = vmatprep.subr.mxu0 0.0
        %2579 = vmatpush1.xpose.msra.mxu0 0.0
        %2580 = vmatprep.subr.mxu0 0.0
        %2581 = vmatpush1.xpose.msra.mxu0 0.0
        %2582 = vmatprep.subr.mxu0 0.0
        %2583 = vmatpush1.xpose.msra.mxu0 0.0
        %2584 = vmatprep.subr.mxu0 0.0
        %2585 = vmatpush1.xpose.msra.mxu0 0.0
        %2586 = vmatprep.subr.mxu0 0.0
        %2587 = vmatpush1.xpose.msra.mxu0 0.0
        %2588 = vmatprep.subr.mxu0 0.0
        %2589 = vmatpush1.xpose.msra.mxu0 0.0
        %2590 = vmatprep.subr.mxu0 0.0
        %2591 = vmatpush1.xpose.msra.mxu0 0.0
        %2592 = vmatprep.subr.mxu0 0.0
        %2593 = vmatpush1.xpose.msra.mxu0 0.0
        %2594 = vmatprep.subr.mxu0 0.0
        %2595 = vmatpush1.xpose.msra.mxu0 0.0
        %2596 = vmatprep.subr.mxu0 0.0
        %2597 = vmatpush1.xpose.msra.mxu0 0.0
        %2598 = vmatprep.subr.mxu0 0.0
        %2599 = vmatpush1.xpose.msra.mxu0 0.0
        %2600 = vmatprep.subr.mxu0 0.0
        %2601 = vmatpush1.xpose.msra.mxu0 0.0
        %2602 = vmatprep.subr.mxu0 0.0
        %2603 = vmatpush1.xpose.msra.mxu0 0.0
        %2604 = vmatprep.subr.mxu0 0.0
        %2605 = vmatpush1.xpose.msra.mxu0 0.0
        %2606 = vmatprep.subr.mxu0 0.0
        %2607 = vmatpush1.xpose.msra.mxu0 0.0
        %2608 = vmatprep.mubr.f32.mxu0 %v851
        %2609 = vmatmul.mubr.f32.gmra.mrb[0].mxu0 %v849
        %v2610 = vpop.f32.mrb[0].mxu0
        %v2611 = vadd.f32 %v2541, %v2610
        %v2612 = vpop.f32.mrb[0].mxu0
        %2613 = vdwg.mxu0
        %2614 = vmatprep.subr.mxu0 %v2347
        %2615 = vmatpush1.xpose.msra.mxu0 %v2346
        %2616 = vmatprep.subr.mxu0 %v2355
        %2617 = vmatpush1.xpose.msra.mxu0 %v2354
        %2618 = vmatprep.subr.mxu0 %v2363
        %2619 = vmatpush1.xpose.msra.mxu0 %v2362
        %2620 = vmatprep.subr.mxu0 %v2371
        %2621 = vmatpush1.xpose.msra.mxu0 %v2370
        %2622 = vmatprep.subr.mxu0 %v2379
        %2623 = vmatpush1.xpose.msra.mxu0 %v2378
        %2624 = vmatprep.subr.mxu0 %v2387
        %2625 = vmatpush1.xpose.msra.mxu0 %v2386
        %2626 = vmatprep.subr.mxu0 %v2395
        %2627 = vmatpush1.xpose.msra.mxu0 %v2394
        %2628 = vmatprep.subr.mxu0 %v2403
        %2629 = vmatpush1.xpose.msra.mxu0 %v2402
        %2630 = vmatprep.subr.mxu0 0.0
        %2631 = vmatpush1.xpose.msra.mxu0 0.0
        %2632 = vmatprep.subr.mxu0 0.0
        %2633 = vmatpush1.xpose.msra.mxu0 0.0
        %2634 = vmatprep.subr.mxu0 0.0
        %2635 = vmatpush1.xpose.msra.mxu0 0.0
        %2636 = vmatprep.subr.mxu0 0.0
        %2637 = vmatpush1.xpose.msra.mxu0 0.0
        %2638 = vmatprep.subr.mxu0 0.0
        %2639 = vmatpush1.xpose.msra.mxu0 0.0
        %2640 = vmatprep.subr.mxu0 0.0
        %2641 = vmatpush1.xpose.msra.mxu0 0.0
        %2642 = vmatprep.subr.mxu0 0.0
        %2643 = vmatpush1.xpose.msra.mxu0 0.0
        %2644 = vmatprep.subr.mxu0 0.0
        %2645 = vmatpush1.xpose.msra.mxu0 0.0
        %2646 = vmatprep.subr.mxu0 0.0
        %2647 = vmatpush1.xpose.msra.mxu0 0.0
        %2648 = vmatprep.subr.mxu0 0.0
        %2649 = vmatpush1.xpose.msra.mxu0 0.0
        %2650 = vmatprep.subr.mxu0 0.0
        %2651 = vmatpush1.xpose.msra.mxu0 0.0
        %2652 = vmatprep.subr.mxu0 0.0
        %2653 = vmatpush1.xpose.msra.mxu0 0.0
        %2654 = vmatprep.subr.mxu0 0.0
        %2655 = vmatpush1.xpose.msra.mxu0 0.0
        %2656 = vmatprep.subr.mxu0 0.0
        %2657 = vmatpush1.xpose.msra.mxu0 0.0
        %2658 = vmatprep.subr.mxu0 0.0
        %2659 = vmatpush1.xpose.msra.mxu0 0.0
        %2660 = vmatprep.subr.mxu0 0.0
        %2661 = vmatpush1.xpose.msra.mxu0 0.0
        %2662 = vmatprep.subr.mxu0 0.0
        %2663 = vmatpush1.xpose.msra.mxu0 0.0
        %2664 = vmatprep.subr.mxu0 0.0
        %2665 = vmatpush1.xpose.msra.mxu0 0.0
        %2666 = vmatprep.subr.mxu0 0.0
        %2667 = vmatpush1.xpose.msra.mxu0 0.0
        %2668 = vmatprep.subr.mxu0 0.0
        %2669 = vmatpush1.xpose.msra.mxu0 0.0
        %2670 = vmatprep.subr.mxu0 0.0
        %2671 = vmatpush1.xpose.msra.mxu0 0.0
        %2672 = vmatprep.subr.mxu0 0.0
        %2673 = vmatpush1.xpose.msra.mxu0 0.0
        %2674 = vmatprep.subr.mxu0 0.0
        %2675 = vmatpush1.xpose.msra.mxu0 0.0
        %2676 = vmatprep.subr.mxu0 0.0
        %2677 = vmatpush1.xpose.msra.mxu0 0.0
        %2678 = vmatprep.mubr.f32.mxu0 %v894
        %2679 = vmatmul.mubr.f32.gmra.mrb[0].mxu0 %v892
        %v2680 = vpop.f32.mrb[0].mxu0
        %v2681 = vadd.f32 %v2611, %v2680
        %v2682 = vpop.f32.mrb[0].mxu0
        %2683 = vdwg.mxu0
        %vm2684 = vcmask 523264
        %v2686 = vsel %vm2684, %v2681, 0
        %2688 = vmatprep.subr.mxu0 0.0
        %2689 = vmatpush1.msra.mxu0 %v1122
        %2690 = vmatprep.subr.mxu0 0.0
        %2691 = vmatpush1.msra.mxu0 %v1123
        %2692 = vmatprep.subr.mxu0 0.0
        %2693 = vmatpush1.msra.mxu0 %v1124
        %2694 = vmatprep.subr.mxu0 0.0
        %2695 = vmatpush1.msra.mxu0 %v1125
        %2696 = vmatprep.subr.mxu0 0.0
        %2697 = vmatpush1.msra.mxu0 %v1126
        %2698 = vmatprep.subr.mxu0 0.0
        %2699 = vmatpush1.msra.mxu0 %v1127
        %2700 = vmatprep.subr.mxu0 0.0
        %2701 = vmatpush1.msra.mxu0 %v1128
        %2702 = vmatprep.subr.mxu0 0.0
        %2703 = vmatpush1.msra.mxu0 %v1129
        %2704 = vmatprep.subr.mxu0 0.0
        %2705 = vmatpush1.msra.mxu0 0.0
        %2706 = vmatprep.subr.mxu0 0.0
        %2707 = vmatpush1.msra.mxu0 0.0
        %2708 = vmatprep.subr.mxu0 0.0
        %2709 = vmatpush1.msra.mxu0 0.0
        %2710 = vmatprep.subr.mxu0 0.0
        %2711 = vmatpush1.msra.mxu0 0.0
        %2712 = vmatprep.subr.mxu0 0.0
        %2713 = vmatpush1.msra.mxu0 0.0
        %2714 = vmatprep.subr.mxu0 0.0
        %2715 = vmatpush1.msra.mxu0 0.0
        %2716 = vmatprep.subr.mxu0 0.0
        %2717 = vmatpush1.msra.mxu0 0.0
        %2718 = vmatprep.subr.mxu0 0.0
        %2719 = vmatpush1.msra.mxu0 0.0
        %2720 = vmatprep.subr.mxu0 0.0
        %2721 = vmatpush1.msra.mxu0 0.0
        %2722 = vmatprep.subr.mxu0 0.0
        %2723 = vmatpush1.msra.mxu0 0.0
        %2724 = vmatprep.subr.mxu0 0.0
        %2725 = vmatpush1.msra.mxu0 0.0
        %2726 = vmatprep.subr.mxu0 0.0
        %2727 = vmatpush1.msra.mxu0 0.0
        %2728 = vmatprep.subr.mxu0 0.0
        %2729 = vmatpush1.msra.mxu0 0.0
        %2730 = vmatprep.subr.mxu0 0.0
        %2731 = vmatpush1.msra.mxu0 0.0
        %2732 = vmatprep.subr.mxu0 0.0
        %2733 = vmatpush1.msra.mxu0 0.0
        %2734 = vmatprep.subr.mxu0 0.0
        %2735 = vmatpush1.msra.mxu0 0.0
        %2736 = vmatprep.subr.mxu0 0.0
        %2737 = vmatpush1.msra.mxu0 0.0
        %2738 = vmatprep.subr.mxu0 0.0
        %2739 = vmatpush1.msra.mxu0 0.0
        %2740 = vmatprep.subr.mxu0 0.0
        %2741 = vmatpush1.msra.mxu0 0.0
        %2742 = vmatprep.subr.mxu0 0.0
        %2743 = vmatpush1.msra.mxu0 0.0
        %2744 = vmatprep.subr.mxu0 0.0
        %2745 = vmatpush1.msra.mxu0 0.0
        %2746 = vmatprep.subr.mxu0 0.0
        %2747 = vmatpush1.msra.mxu0 0.0
        %2748 = vmatprep.subr.mxu0 0.0
        %2749 = vmatpush1.msra.mxu0 0.0
        %2750 = vmatprep.subr.mxu0 0.0
        %2751 = vmatpush1.msra.mxu0 0.0
        %2752 = vmatprep.mubr.f32.mxu0 0.0
        %2753 = vmatmul.mubr.f32.gmra.mrb[0].mxu0 %v2686
        %v2754 = vpop.f32.mrb[0].mxu0
        %v2755 = vadd.f32 0.0, %v2754
        %v2756 = vpop.f32.mrb[0].mxu0
        %2757 = vdwg.mxu0
        %v2758 = vlaneseq
        %v2759 = vshrl.u32 %v2758, 7
        %v2760 = vsub.s32 0, %v2759
        %v2761 = vrot.slane %v1072, %v2760
        %v2762 = vmul.f32 %v2681, %v2761
        %v2763 = vlaneseq
        %v2764 = vshrl.u32 %v2763, 7
        %v2765 = vsub.s32 0, %v2764
        %v2766 = vrot.slane %v1073, %v2765
        %v2767 = vmul.f32 %v2755, %v2766
        %v2768 = vadd.f32 %v2762, %v2767
        %2769 = vmatprep.subr.mxu0 %v2341
        %2770 = vmatpush1.xpose.msra.mxu0 %v2340
        %2771 = vmatprep.subr.mxu0 %v2349
        %2772 = vmatpush1.xpose.msra.mxu0 %v2348
        %2773 = vmatprep.subr.mxu0 %v2357
        %2774 = vmatpush1.xpose.msra.mxu0 %v2356
        %2775 = vmatprep.subr.mxu0 %v2365
        %2776 = vmatpush1.xpose.msra.mxu0 %v2364
        %2777 = vmatprep.subr.mxu0 %v2373
        %2778 = vmatpush1.xpose.msra.mxu0 %v2372
        %2779 = vmatprep.subr.mxu0 %v2381
        %2780 = vmatpush1.xpose.msra.mxu0 %v2380
        %2781 = vmatprep.subr.mxu0 %v2389
        %2782 = vmatpush1.xpose.msra.mxu0 %v2388
        %2783 = vmatprep.subr.mxu0 %v2397
        %2784 = vmatpush1.xpose.msra.mxu0 %v2396
        %2785 = vmatprep.subr.mxu0 0.0
        %2786 = vmatpush1.xpose.msra.mxu0 0.0
        %2787 = vmatprep.subr.mxu0 0.0
        %2788 = vmatpush1.xpose.msra.mxu0 0.0
        %2789 = vmatprep.subr.mxu0 0.0
        %2790 = vmatpush1.xpose.msra.mxu0 0.0
        %2791 = vmatprep.subr.mxu0 0.0
        %2792 = vmatpush1.xpose.msra.mxu0 0.0
        %2793 = vmatprep.subr.mxu0 0.0
        %2794 = vmatpush1.xpose.msra.mxu0 0.0
        %2795 = vmatprep.subr.mxu0 0.0
        %2796 = vmatpush1.xpose.msra.mxu0 0.0
        %2797 = vmatprep.subr.mxu0 0.0
        %2798 = vmatpush1.xpose.msra.mxu0 0.0
        %2799 = vmatprep.subr.mxu0 0.0
        %2800 = vmatpush1.xpose.msra.mxu0 0.0
        %2801 = vmatprep.subr.mxu0 0.0
        %2802 = vmatpush1.xpose.msra.mxu0 0.0
        %2803 = vmatprep.subr.mxu0 0.0
        %2804 = vmatpush1.xpose.msra.mxu0 0.0
        %2805 = vmatprep.subr.mxu0 0.0
        %2806 = vmatpush1.xpose.msra.mxu0 0.0
        %2807 = vmatprep.subr.mxu0 0.0
        %2808 = vmatpush1.xpose.msra.mxu0 0.0
        %2809 = vmatprep.subr.mxu0 0.0
        %2810 = vmatpush1.xpose.msra.mxu0 0.0
        %2811 = vmatprep.subr.mxu0 0.0
        %2812 = vmatpush1.xpose.msra.mxu0 0.0
        %2813 = vmatprep.subr.mxu0 0.0
        %2814 = vmatpush1.xpose.msra.mxu0 0.0
        %2815 = vmatprep.subr.mxu0 0.0
        %2816 = vmatpush1.xpose.msra.mxu0 0.0
        %2817 = vmatprep.subr.mxu0 0.0
        %2818 = vmatpush1.xpose.msra.mxu0 0.0
        %2819 = vmatprep.subr.mxu0 0.0
        %2820 = vmatpush1.xpose.msra.mxu0 0.0
        %2821 = vmatprep.subr.mxu0 0.0
        %2822 = vmatpush1.xpose.msra.mxu0 0.0
        %2823 = vmatprep.subr.mxu0 0.0
        %2824 = vmatpush1.xpose.msra.mxu0 0.0
        %2825 = vmatprep.subr.mxu0 0.0
        %2826 = vmatpush1.xpose.msra.mxu0 0.0
        %2827 = vmatprep.subr.mxu0 0.0
        %2828 = vmatpush1.xpose.msra.mxu0 0.0
        %2829 = vmatprep.subr.mxu0 0.0
        %2830 = vmatpush1.xpose.msra.mxu0 0.0
        %2831 = vmatprep.subr.mxu0 0.0
        %2832 = vmatpush1.xpose.msra.mxu0 0.0
        %2833 = vmatprep.mubr.f32.mxu0 %v937
        %2834 = vmatmul.mubr.f32.gmra.mrb[0].mxu0 %v935
        %v2835 = vpop.f32.mrb[0].mxu0
        %v2836 = vadd.f32 0.0, %v2835
        %v2837 = vpop.f32.mrb[0].mxu0
        %2838 = vdwg.mxu0
        %2839 = vmatprep.subr.mxu0 %v2343
        %2840 = vmatpush1.xpose.msra.mxu0 %v2342
        %2841 = vmatprep.subr.mxu0 %v2351
        %2842 = vmatpush1.xpose.msra.mxu0 %v2350
        %2843 = vmatprep.subr.mxu0 %v2359
        %2844 = vmatpush1.xpose.msra.mxu0 %v2358
        %2845 = vmatprep.subr.mxu0 %v2367
        %2846 = vmatpush1.xpose.msra.mxu0 %v2366
        %2847 = vmatprep.subr.mxu0 %v2375
        %2848 = vmatpush1.xpose.msra.mxu0 %v2374
        %2849 = vmatprep.subr.mxu0 %v2383
        %2850 = vmatpush1.xpose.msra.mxu0 %v2382
        %2851 = vmatprep.subr.mxu0 %v2391
        %2852 = vmatpush1.xpose.msra.mxu0 %v2390
        %2853 = vmatprep.subr.mxu0 %v2399
        %2854 = vmatpush1.xpose.msra.mxu0 %v2398
        %2855 = vmatprep.subr.mxu0 0.0
        %2856 = vmatpush1.xpose.msra.mxu0 0.0
        %2857 = vmatprep.subr.mxu0 0.0
        %2858 = vmatpush1.xpose.msra.mxu0 0.0
        %2859 = vmatprep.subr.mxu0 0.0
        %2860 = vmatpush1.xpose.msra.mxu0 0.0
        %2861 = vmatprep.subr.mxu0 0.0
        %2862 = vmatpush1.xpose.msra.mxu0 0.0
        %2863 = vmatprep.subr.mxu0 0.0
        %2864 = vmatpush1.xpose.msra.mxu0 0.0
        %2865 = vmatprep.subr.mxu0 0.0
        %2866 = vmatpush1.xpose.msra.mxu0 0.0
        %2867 = vmatprep.subr.mxu0 0.0
        %2868 = vmatpush1.xpose.msra.mxu0 0.0
        %2869 = vmatprep.subr.mxu0 0.0
        %2870 = vmatpush1.xpose.msra.mxu0 0.0
        %2871 = vmatprep.subr.mxu0 0.0
        %2872 = vmatpush1.xpose.msra.mxu0 0.0
        %2873 = vmatprep.subr.mxu0 0.0
        %2874 = vmatpush1.xpose.msra.mxu0 0.0
        %2875 = vmatprep.subr.mxu0 0.0
        %2876 = vmatpush1.xpose.msra.mxu0 0.0
        %2877 = vmatprep.subr.mxu0 0.0
        %2878 = vmatpush1.xpose.msra.mxu0 0.0
        %2879 = vmatprep.subr.mxu0 0.0
        %2880 = vmatpush1.xpose.msra.mxu0 0.0
        %2881 = vmatprep.subr.mxu0 0.0
        %2882 = vmatpush1.xpose.msra.mxu0 0.0
        %2883 = vmatprep.subr.mxu0 0.0
        %2884 = vmatpush1.xpose.msra.mxu0 0.0
        %2885 = vmatprep.subr.mxu0 0.0
        %2886 = vmatpush1.xpose.msra.mxu0 0.0
        %2887 = vmatprep.subr.mxu0 0.0
        %2888 = vmatpush1.xpose.msra.mxu0 0.0
        %2889 = vmatprep.subr.mxu0 0.0
        %2890 = vmatpush1.xpose.msra.mxu0 0.0
        %2891 = vmatprep.subr.mxu0 0.0
        %2892 = vmatpush1.xpose.msra.mxu0 0.0
        %2893 = vmatprep.subr.mxu0 0.0
        %2894 = vmatpush1.xpose.msra.mxu0 0.0
        %2895 = vmatprep.subr.mxu0 0.0
        %2896 = vmatpush1.xpose.msra.mxu0 0.0
        %2897 = vmatprep.subr.mxu0 0.0
        %2898 = vmatpush1.xpose.msra.mxu0 0.0
        %2899 = vmatprep.subr.mxu0 0.0
        %2900 = vmatpush1.xpose.msra.mxu0 0.0
        %2901 = vmatprep.subr.mxu0 0.0
        %2902 = vmatpush1.xpose.msra.mxu0 0.0
        %2903 = vmatprep.mubr.f32.mxu0 %v980
        %2904 = vmatmul.mubr.f32.gmra.mrb[0].mxu0 %v978
        %v2905 = vpop.f32.mrb[0].mxu0
        %v2906 = vadd.f32 %v2836, %v2905
        %v2907 = vpop.f32.mrb[0].mxu0
        %2908 = vdwg.mxu0
        %2909 = vmatprep.subr.mxu0 %v2345
        %2910 = vmatpush1.xpose.msra.mxu0 %v2344
        %2911 = vmatprep.subr.mxu0 %v2353
        %2912 = vmatpush1.xpose.msra.mxu0 %v2352
        %2913 = vmatprep.subr.mxu0 %v2361
        %2914 = vmatpush1.xpose.msra.mxu0 %v2360
        %2915 = vmatprep.subr.mxu0 %v2369
        %2916 = vmatpush1.xpose.msra.mxu0 %v2368
        %2917 = vmatprep.subr.mxu0 %v2377
        %2918 = vmatpush1.xpose.msra.mxu0 %v2376
        %2919 = vmatprep.subr.mxu0 %v2385
        %2920 = vmatpush1.xpose.msra.mxu0 %v2384
        %2921 = vmatprep.subr.mxu0 %v2393
        %2922 = vmatpush1.xpose.msra.mxu0 %v2392
        %2923 = vmatprep.subr.mxu0 %v2401
        %2924 = vmatpush1.xpose.msra.mxu0 %v2400
        %2925 = vmatprep.subr.mxu0 0.0
        %2926 = vmatpush1.xpose.msra.mxu0 0.0
        %2927 = vmatprep.subr.mxu0 0.0
        %2928 = vmatpush1.xpose.msra.mxu0 0.0
        %2929 = vmatprep.subr.mxu0 0.0
        %2930 = vmatpush1.xpose.msra.mxu0 0.0
        %2931 = vmatprep.subr.mxu0 0.0
        %2932 = vmatpush1.xpose.msra.mxu0 0.0
        %2933 = vmatprep.subr.mxu0 0.0
        %2934 = vmatpush1.xpose.msra.mxu0 0.0
        %2935 = vmatprep.subr.mxu0 0.0
        %2936 = vmatpush1.xpose.msra.mxu0 0.0
        %2937 = vmatprep.subr.mxu0 0.0
        %2938 = vmatpush1.xpose.msra.mxu0 0.0
        %2939 = vmatprep.subr.mxu0 0.0
        %2940 = vmatpush1.xpose.msra.mxu0 0.0
        %2941 = vmatprep.subr.mxu0 0.0
        %2942 = vmatpush1.xpose.msra.mxu0 0.0
        %2943 = vmatprep.subr.mxu0 0.0
        %2944 = vmatpush1.xpose.msra.mxu0 0.0
        %2945 = vmatprep.subr.mxu0 0.0
        %2946 = vmatpush1.xpose.msra.mxu0 0.0
        %2947 = vmatprep.subr.mxu0 0.0
        %2948 = vmatpush1.xpose.msra.mxu0 0.0
        %2949 = vmatprep.subr.mxu0 0.0
        %2950 = vmatpush1.xpose.msra.mxu0 0.0
        %2951 = vmatprep.subr.mxu0 0.0
        %2952 = vmatpush1.xpose.msra.mxu0 0.0
        %2953 = vmatprep.subr.mxu0 0.0
        %2954 = vmatpush1.xpose.msra.mxu0 0.0
        %2955 = vmatprep.subr.mxu0 0.0
        %2956 = vmatpush1.xpose.msra.mxu0 0.0
        %2957 = vmatprep.subr.mxu0 0.0
        %2958 = vmatpush1.xpose.msra.mxu0 0.0
        %2959 = vmatprep.subr.mxu0 0.0
        %2960 = vmatpush1.xpose.msra.mxu0 0.0
        %2961 = vmatprep.subr.mxu0 0.0
        %2962 = vmatpush1.xpose.msra.mxu0 0.0
        %2963 = vmatprep.subr.mxu0 0.0
        %2964 = vmatpush1.xpose.msra.mxu0 0.0
        %2965 = vmatprep.subr.mxu0 0.0
        %2966 = vmatpush1.xpose.msra.mxu0 0.0
        %2967 = vmatprep.subr.mxu0 0.0
        %2968 = vmatpush1.xpose.msra.mxu0 0.0
        %2969 = vmatprep.subr.mxu0 0.0
        %2970 = vmatpush1.xpose.msra.mxu0 0.0
        %2971 = vmatprep.subr.mxu0 0.0
        %2972 = vmatpush1.xpose.msra.mxu0 0.0
        %2973 = vmatprep.mubr.f32.mxu0 %v1023
        %2974 = vmatmul.mubr.f32.gmra.mrb[0].mxu0 %v1021
        %v2975 = vpop.f32.mrb[0].mxu0
        %v2976 = vadd.f32 %v2906, %v2975
        %v2977 = vpop.f32.mrb[0].mxu0
        %2978 = vdwg.mxu0
        %2979 = vmatprep.subr.mxu0 %v2347
        %2980 = vmatpush1.xpose.msra.mxu0 %v2346
        %2981 = vmatprep.subr.mxu0 %v2355
        %2982 = vmatpush1.xpose.msra.mxu0 %v2354
        %2983 = vmatprep.subr.mxu0 %v2363
        %2984 = vmatpush1.xpose.msra.mxu0 %v2362
        %2985 = vmatprep.subr.mxu0 %v2371
        %2986 = vmatpush1.xpose.msra.mxu0 %v2370
        %2987 = vmatprep.subr.mxu0 %v2379
        %2988 = vmatpush1.xpose.msra.mxu0 %v2378
        %2989 = vmatprep.subr.mxu0 %v2387
        %2990 = vmatpush1.xpose.msra.mxu0 %v2386
        %2991 = vmatprep.subr.mxu0 %v2395
        %2992 = vmatpush1.xpose.msra.mxu0 %v2394
        %2993 = vmatprep.subr.mxu0 %v2403
        %2994 = vmatpush1.xpose.msra.mxu0 %v2402
        %2995 = vmatprep.subr.mxu0 0.0
        %2996 = vmatpush1.xpose.msra.mxu0 0.0
        %2997 = vmatprep.subr.mxu0 0.0
        %2998 = vmatpush1.xpose.msra.mxu0 0.0
        %2999 = vmatprep.subr.mxu0 0.0
        %3000 = vmatpush1.xpose.msra.mxu0 0.0
        %3001 = vmatprep.subr.mxu0 0.0
        %3002 = vmatpush1.xpose.msra.mxu0 0.0
        %3003 = vmatprep.subr.mxu0 0.0
        %3004 = vmatpush1.xpose.msra.mxu0 0.0
        %3005 = vmatprep.subr.mxu0 0.0
        %3006 = vmatpush1.xpose.msra.mxu0 0.0
        %3007 = vmatprep.subr.mxu0 0.0
        %3008 = vmatpush1.xpose.msra.mxu0 0.0
        %3009 = vmatprep.subr.mxu0 0.0
        %3010 = vmatpush1.xpose.msra.mxu0 0.0
        %3011 = vmatprep.subr.mxu0 0.0
        %3012 = vmatpush1.xpose.msra.mxu0 0.0
        %3013 = vmatprep.subr.mxu0 0.0
        %3014 = vmatpush1.xpose.msra.mxu0 0.0
        %3015 = vmatprep.subr.mxu0 0.0
        %3016 = vmatpush1.xpose.msra.mxu0 0.0
        %3017 = vmatprep.subr.mxu0 0.0
        %3018 = vmatpush1.xpose.msra.mxu0 0.0
        %3019 = vmatprep.subr.mxu0 0.0
        %3020 = vmatpush1.xpose.msra.mxu0 0.0
        %3021 = vmatprep.subr.mxu0 0.0
        %3022 = vmatpush1.xpose.msra.mxu0 0.0
        %3023 = vmatprep.subr.mxu0 0.0
        %3024 = vmatpush1.xpose.msra.mxu0 0.0
        %3025 = vmatprep.subr.mxu0 0.0
        %3026 = vmatpush1.xpose.msra.mxu0 0.0
        %3027 = vmatprep.subr.mxu0 0.0
        %3028 = vmatpush1.xpose.msra.mxu0 0.0
        %3029 = vmatprep.subr.mxu0 0.0
        %3030 = vmatpush1.xpose.msra.mxu0 0.0
        %3031 = vmatprep.subr.mxu0 0.0
        %3032 = vmatpush1.xpose.msra.mxu0 0.0
        %3033 = vmatprep.subr.mxu0 0.0
        %3034 = vmatpush1.xpose.msra.mxu0 0.0
        %3035 = vmatprep.subr.mxu0 0.0
        %3036 = vmatpush1.xpose.msra.mxu0 0.0
        %3037 = vmatprep.subr.mxu0 0.0
        %3038 = vmatpush1.xpose.msra.mxu0 0.0
        %3039 = vmatprep.subr.mxu0 0.0
        %3040 = vmatpush1.xpose.msra.mxu0 0.0
        %3041 = vmatprep.subr.mxu0 0.0
        %3042 = vmatpush1.xpose.msra.mxu0 0.0
        %3043 = vmatprep.mubr.f32.mxu0 %v1066
        %3044 = vmatmul.mubr.f32.gmra.mrb[0].mxu0 %v1064
        %v3045 = vpop.f32.mrb[0].mxu0
        %v3046 = vadd.f32 %v2976, %v3045
        %v3047 = vpop.f32.mrb[0].mxu0
        %3048 = vdwg.mxu0
        %v3050 = vsel %vm2684, %v3046, 0
        %3052 = vmatprep.subr.mxu0 0.0
        %3053 = vmatpush1.msra.mxu0 %v1122
        %3054 = vmatprep.subr.mxu0 0.0
        %3055 = vmatpush1.msra.mxu0 %v1123
        %3056 = vmatprep.subr.mxu0 0.0
        %3057 = vmatpush1.msra.mxu0 %v1124
        %3058 = vmatprep.subr.mxu0 0.0
        %3059 = vmatpush1.msra.mxu0 %v1125
        %3060 = vmatprep.subr.mxu0 0.0
        %3061 = vmatpush1.msra.mxu0 %v1126
        %3062 = vmatprep.subr.mxu0 0.0
        %3063 = vmatpush1.msra.mxu0 %v1127
        %3064 = vmatprep.subr.mxu0 0.0
        %3065 = vmatpush1.msra.mxu0 %v1128
        %3066 = vmatprep.subr.mxu0 0.0
        %3067 = vmatpush1.msra.mxu0 %v1129
        %3068 = vmatprep.subr.mxu0 0.0
        %3069 = vmatpush1.msra.mxu0 0.0
        %3070 = vmatprep.subr.mxu0 0.0
        %3071 = vmatpush1.msra.mxu0 0.0
        %3072 = vmatprep.subr.mxu0 0.0
        %3073 = vmatpush1.msra.mxu0 0.0
        %3074 = vmatprep.subr.mxu0 0.0
        %3075 = vmatpush1.msra.mxu0 0.0
        %3076 = vmatprep.subr.mxu0 0.0
        %3077 = vmatpush1.msra.mxu0 0.0
        %3078 = vmatprep.subr.mxu0 0.0
        %3079 = vmatpush1.msra.mxu0 0.0
        %3080 = vmatprep.subr.mxu0 0.0
        %3081 = vmatpush1.msra.mxu0 0.0
        %3082 = vmatprep.subr.mxu0 0.0
        %3083 = vmatpush1.msra.mxu0 0.0
        %3084 = vmatprep.subr.mxu0 0.0
        %3085 = vmatpush1.msra.mxu0 0.0
        %3086 = vmatprep.subr.mxu0 0.0
        %3087 = vmatpush1.msra.mxu0 0.0
        %3088 = vmatprep.subr.mxu0 0.0
        %3089 = vmatpush1.msra.mxu0 0.0
        %3090 = vmatprep.subr.mxu0 0.0
        %3091 = vmatpush1.msra.mxu0 0.0
        %3092 = vmatprep.subr.mxu0 0.0
        %3093 = vmatpush1.msra.mxu0 0.0
        %3094 = vmatprep.subr.mxu0 0.0
        %3095 = vmatpush1.msra.mxu0 0.0
        %3096 = vmatprep.subr.mxu0 0.0
        %3097 = vmatpush1.msra.mxu0 0.0
        %3098 = vmatprep.subr.mxu0 0.0
        %3099 = vmatpush1.msra.mxu0 0.0
        %3100 = vmatprep.subr.mxu0 0.0
        %3101 = vmatpush1.msra.mxu0 0.0
        %3102 = vmatprep.subr.mxu0 0.0
        %3103 = vmatpush1.msra.mxu0 0.0
        %3104 = vmatprep.subr.mxu0 0.0
        %3105 = vmatpush1.msra.mxu0 0.0
        %3106 = vmatprep.subr.mxu0 0.0
        %3107 = vmatpush1.msra.mxu0 0.0
        %3108 = vmatprep.subr.mxu0 0.0
        %3109 = vmatpush1.msra.mxu0 0.0
        %3110 = vmatprep.subr.mxu0 0.0
        %3111 = vmatpush1.msra.mxu0 0.0
        %3112 = vmatprep.subr.mxu0 0.0
        %3113 = vmatpush1.msra.mxu0 0.0
        %3114 = vmatprep.subr.mxu0 0.0
        %3115 = vmatpush1.msra.mxu0 0.0
        %3116 = vmatprep.mubr.f32.mxu0 0.0
        %3117 = vmatmul.mubr.f32.gmra.mrb[0].mxu0 %v3050
        %v3118 = vpop.f32.mrb[0].mxu0
        %v3119 = vadd.f32 0.0, %v3118
        %v3120 = vpop.f32.mrb[0].mxu0
        %3121 = vdwg.mxu0
        %v3122 = vmul.f32 %v3046, %v2761
        %v3123 = vmul.f32 %v3119, %v2766
        %v3124 = vadd.f32 %v3122, %v3123
        %3126 = vrot.lane.b32.xlu0 %v3124, 64
        %v3127 = vpop.permute.xlu0 %3126
        %v3129 = vsel %vm2684, %v2768, %v3127
        %3130 = vst [vmem:[%s523] sm:$0xff] %v3129
        %v3131 = vld [vmem:[%s499 + $0x4] sm:$0xf]
        %v3132 = vld [vmem:[%s506 + $0x4] sm:$0xf]
        %v3134 = vsel %vm724, %v3131, 0
        %3136 = vmatprep.subr.bf16.mxu0 %v1181
        %3137 = vmatpush1.bf16.msra.mxu0 %v1180
        %3138 = vmatprep.subr.bf16.mxu0 %v1189
        %3139 = vmatpush1.bf16.msra.mxu0 %v1188
        %3140 = vmatprep.subr.bf16.mxu0 0
        %3141 = vmatpush1.bf16.msra.mxu0 0
        %3142 = vmatprep.subr.bf16.mxu0 0
        %3143 = vmatpush1.bf16.msra.mxu0 0
        %3144 = vmatprep.subr.bf16.mxu0 0
        %3145 = vmatpush1.bf16.msra.mxu0 0
        %3146 = vmatprep.subr.bf16.mxu0 0
        %3147 = vmatpush1.bf16.msra.mxu0 0
        %3148 = vmatprep.subr.bf16.mxu0 0
        %3149 = vmatpush1.bf16.msra.mxu0 0
        %3150 = vmatprep.subr.bf16.mxu0 0
        %3151 = vmatpush1.bf16.msra.mxu0 0
        %3152 = vmatprep.subr.bf16.mxu0 0
        %3153 = vmatpush1.bf16.msra.mxu0 0
        %3154 = vmatprep.subr.bf16.mxu0 0
        %3155 = vmatpush1.bf16.msra.mxu0 0
        %3156 = vmatprep.subr.bf16.mxu0 0
        %3157 = vmatpush1.bf16.msra.mxu0 0
        %3158 = vmatprep.subr.bf16.mxu0 0
        %3159 = vmatpush1.bf16.msra.mxu0 0
        %3160 = vmatprep.subr.bf16.mxu0 0
        %3161 = vmatpush1.bf16.msra.mxu0 0
        %3162 = vmatprep.subr.bf16.mxu0 0
        %3163 = vmatpush1.bf16.msra.mxu0 0
        %3164 = vmatprep.subr.bf16.mxu0 0
        %3165 = vmatpush1.bf16.msra.mxu0 0
        %3166 = vmatprep.subr.bf16.mxu0 0
        %3167 = vmatpush1.bf16.msra.mxu0 0
        %3168 = vmatprep.mubr.bf16.mxu0 0
        %3169 = vmatmul.mubr.bf16.gmra.mrb[0].mxu0 %v3134
        %v3170 = vpop.f32.mrb[0].mxu0
        %v3171 = vadd.f32 0.0, %v3170
        %v3172 = vpop.f32.mrb[0].mxu0
        %v3173 = vadd.f32 0.0, %v3172
        %v3174 = vpop.f32.mrb[0].mxu0
        %v3175 = vpop.f32.mrb[0].mxu0
        %3176 = vdwg.mxu0
        %3177 = vmatprep.subr.bf16.mxu0 %v1183
        %3178 = vmatpush1.bf16.msra.mxu0 %v1182
        %3179 = vmatprep.subr.bf16.mxu0 %v1191
        %3180 = vmatpush1.bf16.msra.mxu0 %v1190
        %3181 = vmatprep.subr.bf16.mxu0 0
        %3182 = vmatpush1.bf16.msra.mxu0 0
        %3183 = vmatprep.subr.bf16.mxu0 0
        %3184 = vmatpush1.bf16.msra.mxu0 0
        %3185 = vmatprep.subr.bf16.mxu0 0
        %3186 = vmatpush1.bf16.msra.mxu0 0
        %3187 = vmatprep.subr.bf16.mxu0 0
        %3188 = vmatpush1.bf16.msra.mxu0 0
        %3189 = vmatprep.subr.bf16.mxu0 0
        %3190 = vmatpush1.bf16.msra.mxu0 0
        %3191 = vmatprep.subr.bf16.mxu0 0
        %3192 = vmatpush1.bf16.msra.mxu0 0
        %3193 = vmatprep.subr.bf16.mxu0 0
        %3194 = vmatpush1.bf16.msra.mxu0 0
        %3195 = vmatprep.subr.bf16.mxu0 0
        %3196 = vmatpush1.bf16.msra.mxu0 0
        %3197 = vmatprep.subr.bf16.mxu0 0
        %3198 = vmatpush1.bf16.msra.mxu0 0
        %3199 = vmatprep.subr.bf16.mxu0 0
        %3200 = vmatpush1.bf16.msra.mxu0 0
        %3201 = vmatprep.subr.bf16.mxu0 0
        %3202 = vmatpush1.bf16.msra.mxu0 0
        %3203 = vmatprep.subr.bf16.mxu0 0
        %3204 = vmatpush1.bf16.msra.mxu0 0
        %3205 = vmatprep.subr.bf16.mxu0 0
        %3206 = vmatpush1.bf16.msra.mxu0 0
        %3207 = vmatprep.subr.bf16.mxu0 0
        %3208 = vmatpush1.bf16.msra.mxu0 0
        %3209 = vmatprep.mubr.bf16.mxu0 0
        %3210 = vmatmul.mubr.bf16.gmra.mrb[0].mxu0 %v3134
        %v3211 = vpop.f32.mrb[0].mxu0
        %v3212 = vadd.f32 0.0, %v3211
        %v3213 = vpop.f32.mrb[0].mxu0
        %v3214 = vadd.f32 0.0, %v3213
        %v3215 = vpop.f32.mrb[0].mxu0
        %v3216 = vpop.f32.mrb[0].mxu0
        %3217 = vdwg.mxu0
        %3218 = vmatprep.subr.bf16.mxu0 %v1185
        %3219 = vmatpush1.bf16.msra.mxu0 %v1184
        %3220 = vmatprep.subr.bf16.mxu0 %v1193
        %3221 = vmatpush1.bf16.msra.mxu0 %v1192
        %3222 = vmatprep.subr.bf16.mxu0 0
        %3223 = vmatpush1.bf16.msra.mxu0 0
        %3224 = vmatprep.subr.bf16.mxu0 0
        %3225 = vmatpush1.bf16.msra.mxu0 0
        %3226 = vmatprep.subr.bf16.mxu0 0
        %3227 = vmatpush1.bf16.msra.mxu0 0
        %3228 = vmatprep.subr.bf16.mxu0 0
        %3229 = vmatpush1.bf16.msra.mxu0 0
        %3230 = vmatprep.subr.bf16.mxu0 0
        %3231 = vmatpush1.bf16.msra.mxu0 0
        %3232 = vmatprep.subr.bf16.mxu0 0
        %3233 = vmatpush1.bf16.msra.mxu0 0
        %3234 = vmatprep.subr.bf16.mxu0 0
        %3235 = vmatpush1.bf16.msra.mxu0 0
        %3236 = vmatprep.subr.bf16.mxu0 0
        %3237 = vmatpush1.bf16.msra.mxu0 0
        %3238 = vmatprep.subr.bf16.mxu0 0
        %3239 = vmatpush1.bf16.msra.mxu0 0
        %3240 = vmatprep.subr.bf16.mxu0 0
        %3241 = vmatpush1.bf16.msra.mxu0 0
        %3242 = vmatprep.subr.bf16.mxu0 0
        %3243 = vmatpush1.bf16.msra.mxu0 0
        %3244 = vmatprep.subr.bf16.mxu0 0
        %3245 = vmatpush1.bf16.msra.mxu0 0
        %3246 = vmatprep.subr.bf16.mxu0 0
        %3247 = vmatpush1.bf16.msra.mxu0 0
        %3248 = vmatprep.subr.bf16.mxu0 0
        %3249 = vmatpush1.bf16.msra.mxu0 0
        %3250 = vmatprep.mubr.bf16.mxu0 0
        %3251 = vmatmul.mubr.bf16.gmra.mrb[0].mxu0 %v3134
        %v3252 = vpop.f32.mrb[0].mxu0
        %v3253 = vadd.f32 0.0, %v3252
        %v3254 = vpop.f32.mrb[0].mxu0
        %v3255 = vadd.f32 0.0, %v3254
        %v3256 = vpop.f32.mrb[0].mxu0
        %v3257 = vpop.f32.mrb[0].mxu0
        %3258 = vdwg.mxu0
        %3259 = vmatprep.subr.bf16.mxu0 %v1187
        %3260 = vmatpush1.bf16.msra.mxu0 %v1186
        %3261 = vmatprep.subr.bf16.mxu0 %v1195
        %3262 = vmatpush1.bf16.msra.mxu0 %v1194
        %3263 = vmatprep.subr.bf16.mxu0 0
        %3264 = vmatpush1.bf16.msra.mxu0 0
        %3265 = vmatprep.subr.bf16.mxu0 0
        %3266 = vmatpush1.bf16.msra.mxu0 0
        %3267 = vmatprep.subr.bf16.mxu0 0
        %3268 = vmatpush1.bf16.msra.mxu0 0
        %3269 = vmatprep.subr.bf16.mxu0 0
        %3270 = vmatpush1.bf16.msra.mxu0 0
        %3271 = vmatprep.subr.bf16.mxu0 0
        %3272 = vmatpush1.bf16.msra.mxu0 0
        %3273 = vmatprep.subr.bf16.mxu0 0
        %3274 = vmatpush1.bf16.msra.mxu0 0
        %3275 = vmatprep.subr.bf16.mxu0 0
        %3276 = vmatpush1.bf16.msra.mxu0 0
        %3277 = vmatprep.subr.bf16.mxu0 0
        %3278 = vmatpush1.bf16.msra.mxu0 0
        %3279 = vmatprep.subr.bf16.mxu0 0
        %3280 = vmatpush1.bf16.msra.mxu0 0
        %3281 = vmatprep.subr.bf16.mxu0 0
        %3282 = vmatpush1.bf16.msra.mxu0 0
        %3283 = vmatprep.subr.bf16.mxu0 0
        %3284 = vmatpush1.bf16.msra.mxu0 0
        %3285 = vmatprep.subr.bf16.mxu0 0
        %3286 = vmatpush1.bf16.msra.mxu0 0
        %3287 = vmatprep.subr.bf16.mxu0 0
        %3288 = vmatpush1.bf16.msra.mxu0 0
        %3289 = vmatprep.subr.bf16.mxu0 0
        %3290 = vmatpush1.bf16.msra.mxu0 0
        %3291 = vmatprep.mubr.bf16.mxu0 0
        %3292 = vmatmul.mubr.bf16.gmra.mrb[0].mxu0 %v3134
        %v3293 = vpop.f32.mrb[0].mxu0
        %v3294 = vadd.f32 0.0, %v3293
        %v3295 = vpop.f32.mrb[0].mxu0
        %v3296 = vadd.f32 0.0, %v3295
        %v3297 = vpop.f32.mrb[0].mxu0
        %v3298 = vpop.f32.mrb[0].mxu0
        %3299 = vdwg.mxu0
        %v3300 = vpack.c.bf16 %v3171, %v3171
        %v3301 = vpack.c.bf16 %v3173, %v3173
        %v3302 = vpack.c.bf16 %v3212, %v3212
        %v3303 = vpack.c.bf16 %v3214, %v3214
        %v3304 = vpack.c.bf16 %v3253, %v3253
        %v3305 = vpack.c.bf16 %v3255, %v3255
        %v3306 = vpack.c.bf16 %v3294, %v3294
        %v3307 = vpack.c.bf16 %v3296, %v3296
        %v3309 = vsel %vm1420, %v3300, 0
        %v3312 = vsel %vm1420, %v3301, 0
        %v3315 = vsel %vm1420, %v3302, 0
        %v3318 = vsel %vm1420, %v3303, 0
        %v3321 = vsel %vm1420, %v3304, 0
        %v3324 = vsel %vm1420, %v3305, 0
        %v3327 = vsel %vm1420, %v3306, 0
        %v3330 = vsel %vm1420, %v3307, 0
        %3332 = vmatprep.subr.bf16.mxu0 %v3312
        %3333 = vmatpush1.bf16.msra.mxu0 %v3309
        %3334 = vmatprep.subr.bf16.mxu0 0
        %3335 = vmatpush1.bf16.msra.mxu0 0
        %3336 = vmatprep.subr.bf16.mxu0 0
        %3337 = vmatpush1.bf16.msra.mxu0 0
        %3338 = vmatprep.subr.bf16.mxu0 0
        %3339 = vmatpush1.bf16.msra.mxu0 0
        %3340 = vmatprep.subr.bf16.mxu0 0
        %3341 = vmatpush1.bf16.msra.mxu0 0
        %3342 = vmatprep.subr.bf16.mxu0 0
        %3343 = vmatpush1.bf16.msra.mxu0 0
        %3344 = vmatprep.subr.bf16.mxu0 0
        %3345 = vmatpush1.bf16.msra.mxu0 0
        %3346 = vmatprep.subr.bf16.mxu0 0
        %3347 = vmatpush1.bf16.msra.mxu0 0
        %3348 = vmatprep.subr.bf16.mxu0 0
        %3349 = vmatpush1.bf16.msra.mxu0 0
        %3350 = vmatprep.subr.bf16.mxu0 0
        %3351 = vmatpush1.bf16.msra.mxu0 0
        %3352 = vmatprep.subr.bf16.mxu0 0
        %3353 = vmatpush1.bf16.msra.mxu0 0
        %3354 = vmatprep.subr.bf16.mxu0 0
        %3355 = vmatpush1.bf16.msra.mxu0 0
        %3356 = vmatprep.subr.bf16.mxu0 0
        %3357 = vmatpush1.bf16.msra.mxu0 0
        %3358 = vmatprep.subr.bf16.mxu0 0
        %3359 = vmatpush1.bf16.msra.mxu0 0
        %3360 = vmatprep.subr.bf16.mxu0 0
        %3361 = vmatpush1.bf16.msra.mxu0 0
        %3362 = vmatprep.subr.bf16.mxu0 0
        %3363 = vmatpush1.bf16.msra.mxu0 0
        %3364 = vmatprep.mubr.bf16.mxu0 0
        %3365 = vmatmul.mubr.bf16.gmra.mrb[0].mxu0 %v1409
        %v3366 = vpop.f32.mrb[0].mxu0
        %v3367 = vadd.f32 0.0, %v3366
        %v3368 = vpop.f32.mrb[0].mxu0
        %v3369 = vadd.f32 0.0, %v3368
        %v3370 = vpop.f32.mrb[0].mxu0
        %v3371 = vadd.f32 0.0, %v3370
        %v3372 = vpop.f32.mrb[0].mxu0
        %v3373 = vadd.f32 0.0, %v3372
        %3374 = vmatprep.mubr.bf16.mxu0 0
        %3375 = vmatmul.mubr.bf16.gmra.mrb[0].mxu0 %v1412
        %v3376 = vpop.f32.mrb[0].mxu0
        %v3377 = vadd.f32 0.0, %v3376
        %v3378 = vpop.f32.mrb[0].mxu0
        %v3379 = vadd.f32 0.0, %v3378
        %v3380 = vpop.f32.mrb[0].mxu0
        %v3381 = vadd.f32 0.0, %v3380
        %v3382 = vpop.f32.mrb[0].mxu0
        %v3383 = vadd.f32 0.0, %v3382
        %3384 = vmatprep.mubr.bf16.mxu0 0
        %3385 = vmatmul.mubr.bf16.gmra.mrb[0].mxu0 %v1415
        %v3386 = vpop.f32.mrb[0].mxu0
        %v3387 = vadd.f32 0.0, %v3386
        %v3388 = vpop.f32.mrb[0].mxu0
        %v3389 = vadd.f32 0.0, %v3388
        %v3390 = vpop.f32.mrb[0].mxu0
        %v3391 = vadd.f32 0.0, %v3390
        %v3392 = vpop.f32.mrb[0].mxu0
        %v3393 = vadd.f32 0.0, %v3392
        %3394 = vmatprep.mubr.bf16.mxu0 0
        %3395 = vmatmul.mubr.bf16.gmra.mrb[0].mxu0 %v1418
        %v3396 = vpop.f32.mrb[0].mxu0
        %v3397 = vadd.f32 0.0, %v3396
        %v3398 = vpop.f32.mrb[0].mxu0
        %v3399 = vadd.f32 0.0, %v3398
        %v3400 = vpop.f32.mrb[0].mxu0
        %v3401 = vadd.f32 0.0, %v3400
        %v3402 = vpop.f32.mrb[0].mxu0
        %v3403 = vadd.f32 0.0, %v3402
        %3404 = vdwg.mxu0
        %3405 = vmatprep.subr.bf16.mxu0 %v3318
        %3406 = vmatpush1.bf16.msra.mxu0 %v3315
        %3407 = vmatprep.subr.bf16.mxu0 0
        %3408 = vmatpush1.bf16.msra.mxu0 0
        %3409 = vmatprep.subr.bf16.mxu0 0
        %3410 = vmatpush1.bf16.msra.mxu0 0
        %3411 = vmatprep.subr.bf16.mxu0 0
        %3412 = vmatpush1.bf16.msra.mxu0 0
        %3413 = vmatprep.subr.bf16.mxu0 0
        %3414 = vmatpush1.bf16.msra.mxu0 0
        %3415 = vmatprep.subr.bf16.mxu0 0
        %3416 = vmatpush1.bf16.msra.mxu0 0
        %3417 = vmatprep.subr.bf16.mxu0 0
        %3418 = vmatpush1.bf16.msra.mxu0 0
        %3419 = vmatprep.subr.bf16.mxu0 0
        %3420 = vmatpush1.bf16.msra.mxu0 0
        %3421 = vmatprep.subr.bf16.mxu0 0
        %3422 = vmatpush1.bf16.msra.mxu0 0
        %3423 = vmatprep.subr.bf16.mxu0 0
        %3424 = vmatpush1.bf16.msra.mxu0 0
        %3425 = vmatprep.subr.bf16.mxu0 0
        %3426 = vmatpush1.bf16.msra.mxu0 0
        %3427 = vmatprep.subr.bf16.mxu0 0
        %3428 = vmatpush1.bf16.msra.mxu0 0
        %3429 = vmatprep.subr.bf16.mxu0 0
        %3430 = vmatpush1.bf16.msra.mxu0 0
        %3431 = vmatprep.subr.bf16.mxu0 0
        %3432 = vmatpush1.bf16.msra.mxu0 0
        %3433 = vmatprep.subr.bf16.mxu0 0
        %3434 = vmatpush1.bf16.msra.mxu0 0
        %3435 = vmatprep.subr.bf16.mxu0 0
        %3436 = vmatpush1.bf16.msra.mxu0 0
        %3437 = vmatprep.mubr.bf16.mxu0 0
        %3438 = vmatmul.mubr.bf16.gmra.mrb[0].mxu0 %v1409
        %v3439 = vpop.f32.mrb[0].mxu0
        %v3440 = vadd.f32 0.0, %v3439
        %v3441 = vpop.f32.mrb[0].mxu0
        %v3442 = vadd.f32 0.0, %v3441
        %v3443 = vpop.f32.mrb[0].mxu0
        %v3444 = vadd.f32 0.0, %v3443
        %v3445 = vpop.f32.mrb[0].mxu0
        %v3446 = vadd.f32 0.0, %v3445
        %3447 = vmatprep.mubr.bf16.mxu0 0
        %3448 = vmatmul.mubr.bf16.gmra.mrb[0].mxu0 %v1412
        %v3449 = vpop.f32.mrb[0].mxu0
        %v3450 = vadd.f32 0.0, %v3449
        %v3451 = vpop.f32.mrb[0].mxu0
        %v3452 = vadd.f32 0.0, %v3451
        %v3453 = vpop.f32.mrb[0].mxu0
        %v3454 = vadd.f32 0.0, %v3453
        %v3455 = vpop.f32.mrb[0].mxu0
        %v3456 = vadd.f32 0.0, %v3455
        %3457 = vmatprep.mubr.bf16.mxu0 0
        %3458 = vmatmul.mubr.bf16.gmra.mrb[0].mxu0 %v1415
        %v3459 = vpop.f32.mrb[0].mxu0
        %v3460 = vadd.f32 0.0, %v3459
        %v3461 = vpop.f32.mrb[0].mxu0
        %v3462 = vadd.f32 0.0, %v3461
        %v3463 = vpop.f32.mrb[0].mxu0
        %v3464 = vadd.f32 0.0, %v3463
        %v3465 = vpop.f32.mrb[0].mxu0
        %v3466 = vadd.f32 0.0, %v3465
        %3467 = vmatprep.mubr.bf16.mxu0 0
        %3468 = vmatmul.mubr.bf16.gmra.mrb[0].mxu0 %v1418
        %v3469 = vpop.f32.mrb[0].mxu0
        %v3470 = vadd.f32 0.0, %v3469
        %v3471 = vpop.f32.mrb[0].mxu0
        %v3472 = vadd.f32 0.0, %v3471
        %v3473 = vpop.f32.mrb[0].mxu0
        %v3474 = vadd.f32 0.0, %v3473
        %v3475 = vpop.f32.mrb[0].mxu0
        %v3476 = vadd.f32 0.0, %v3475
        %3477 = vdwg.mxu0
        %3478 = vmatprep.subr.bf16.mxu0 %v3324
        %3479 = vmatpush1.bf16.msra.mxu0 %v3321
        %3480 = vmatprep.subr.bf16.mxu0 0
        %3481 = vmatpush1.bf16.msra.mxu0 0
        %3482 = vmatprep.subr.bf16.mxu0 0
        %3483 = vmatpush1.bf16.msra.mxu0 0
        %3484 = vmatprep.subr.bf16.mxu0 0
        %3485 = vmatpush1.bf16.msra.mxu0 0
        %3486 = vmatprep.subr.bf16.mxu0 0
        %3487 = vmatpush1.bf16.msra.mxu0 0
        %3488 = vmatprep.subr.bf16.mxu0 0
        %3489 = vmatpush1.bf16.msra.mxu0 0
        %3490 = vmatprep.subr.bf16.mxu0 0
        %3491 = vmatpush1.bf16.msra.mxu0 0
        %3492 = vmatprep.subr.bf16.mxu0 0
        %3493 = vmatpush1.bf16.msra.mxu0 0
        %3494 = vmatprep.subr.bf16.mxu0 0
        %3495 = vmatpush1.bf16.msra.mxu0 0
        %3496 = vmatprep.subr.bf16.mxu0 0
        %3497 = vmatpush1.bf16.msra.mxu0 0
        %3498 = vmatprep.subr.bf16.mxu0 0
        %3499 = vmatpush1.bf16.msra.mxu0 0
        %3500 = vmatprep.subr.bf16.mxu0 0
        %3501 = vmatpush1.bf16.msra.mxu0 0
        %3502 = vmatprep.subr.bf16.mxu0 0
        %3503 = vmatpush1.bf16.msra.mxu0 0
        %3504 = vmatprep.subr.bf16.mxu0 0
        %3505 = vmatpush1.bf16.msra.mxu0 0
        %3506 = vmatprep.subr.bf16.mxu0 0
        %3507 = vmatpush1.bf16.msra.mxu0 0
        %3508 = vmatprep.subr.bf16.mxu0 0
        %3509 = vmatpush1.bf16.msra.mxu0 0
        %3510 = vmatprep.mubr.bf16.mxu0 0
        %3511 = vmatmul.mubr.bf16.gmra.mrb[0].mxu0 %v1409
        %v3512 = vpop.f32.mrb[0].mxu0
        %v3513 = vadd.f32 0.0, %v3512
        %v3514 = vpop.f32.mrb[0].mxu0
        %v3515 = vadd.f32 0.0, %v3514
        %v3516 = vpop.f32.mrb[0].mxu0
        %v3517 = vadd.f32 0.0, %v3516
        %v3518 = vpop.f32.mrb[0].mxu0
        %v3519 = vadd.f32 0.0, %v3518
        %3520 = vmatprep.mubr.bf16.mxu0 0
        %3521 = vmatmul.mubr.bf16.gmra.mrb[0].mxu0 %v1412
        %v3522 = vpop.f32.mrb[0].mxu0
        %v3523 = vadd.f32 0.0, %v3522
        %v3524 = vpop.f32.mrb[0].mxu0
        %v3525 = vadd.f32 0.0, %v3524
        %v3526 = vpop.f32.mrb[0].mxu0
        %v3527 = vadd.f32 0.0, %v3526
        %v3528 = vpop.f32.mrb[0].mxu0
        %v3529 = vadd.f32 0.0, %v3528
        %3530 = vmatprep.mubr.bf16.mxu0 0
        %3531 = vmatmul.mubr.bf16.gmra.mrb[0].mxu0 %v1415
        %v3532 = vpop.f32.mrb[0].mxu0
        %v3533 = vadd.f32 0.0, %v3532
        %v3534 = vpop.f32.mrb[0].mxu0
        %v3535 = vadd.f32 0.0, %v3534
        %v3536 = vpop.f32.mrb[0].mxu0
        %v3537 = vadd.f32 0.0, %v3536
        %v3538 = vpop.f32.mrb[0].mxu0
        %v3539 = vadd.f32 0.0, %v3538
        %3540 = vmatprep.mubr.bf16.mxu0 0
        %3541 = vmatmul.mubr.bf16.gmra.mrb[0].mxu0 %v1418
        %v3542 = vpop.f32.mrb[0].mxu0
        %v3543 = vadd.f32 0.0, %v3542
        %v3544 = vpop.f32.mrb[0].mxu0
        %v3545 = vadd.f32 0.0, %v3544
        %v3546 = vpop.f32.mrb[0].mxu0
        %v3547 = vadd.f32 0.0, %v3546
        %v3548 = vpop.f32.mrb[0].mxu0
        %v3549 = vadd.f32 0.0, %v3548
        %3550 = vdwg.mxu0
        %3551 = vmatprep.subr.bf16.mxu0 %v3330
        %3552 = vmatpush1.bf16.msra.mxu0 %v3327
        %3553 = vmatprep.subr.bf16.mxu0 0
        %3554 = vmatpush1.bf16.msra.mxu0 0
        %3555 = vmatprep.subr.bf16.mxu0 0
        %3556 = vmatpush1.bf16.msra.mxu0 0
        %3557 = vmatprep.subr.bf16.mxu0 0
        %3558 = vmatpush1.bf16.msra.mxu0 0
        %3559 = vmatprep.subr.bf16.mxu0 0
        %3560 = vmatpush1.bf16.msra.mxu0 0
        %3561 = vmatprep.subr.bf16.mxu0 0
        %3562 = vmatpush1.bf16.msra.mxu0 0
        %3563 = vmatprep.subr.bf16.mxu0 0
        %3564 = vmatpush1.bf16.msra.mxu0 0
        %3565 = vmatprep.subr.bf16.mxu0 0
        %3566 = vmatpush1.bf16.msra.mxu0 0
        %3567 = vmatprep.subr.bf16.mxu0 0
        %3568 = vmatpush1.bf16.msra.mxu0 0
        %3569 = vmatprep.subr.bf16.mxu0 0
        %3570 = vmatpush1.bf16.msra.mxu0 0
        %3571 = vmatprep.subr.bf16.mxu0 0
        %3572 = vmatpush1.bf16.msra.mxu0 0
        %3573 = vmatprep.subr.bf16.mxu0 0
        %3574 = vmatpush1.bf16.msra.mxu0 0
        %3575 = vmatprep.subr.bf16.mxu0 0
        %3576 = vmatpush1.bf16.msra.mxu0 0
        %3577 = vmatprep.subr.bf16.mxu0 0
        %3578 = vmatpush1.bf16.msra.mxu0 0
        %3579 = vmatprep.subr.bf16.mxu0 0
        %3580 = vmatpush1.bf16.msra.mxu0 0
        %3581 = vmatprep.subr.bf16.mxu0 0
        %3582 = vmatpush1.bf16.msra.mxu0 0
        %3583 = vmatprep.mubr.bf16.mxu0 0
        %3584 = vmatmul.mubr.bf16.gmra.mrb[0].mxu0 %v1409
        %v3585 = vpop.f32.mrb[0].mxu0
        %v3586 = vadd.f32 0.0, %v3585
        %v3587 = vpop.f32.mrb[0].mxu0
        %v3588 = vadd.f32 0.0, %v3587
        %v3589 = vpop.f32.mrb[0].mxu0
        %v3590 = vadd.f32 0.0, %v3589
        %v3591 = vpop.f32.mrb[0].mxu0
        %v3592 = vadd.f32 0.0, %v3591
        %3593 = vmatprep.mubr.bf16.mxu0 0
        %3594 = vmatmul.mubr.bf16.gmra.mrb[0].mxu0 %v1412
        %v3595 = vpop.f32.mrb[0].mxu0
        %v3596 = vadd.f32 0.0, %v3595
        %v3597 = vpop.f32.mrb[0].mxu0
        %v3598 = vadd.f32 0.0, %v3597
        %v3599 = vpop.f32.mrb[0].mxu0
        %v3600 = vadd.f32 0.0, %v3599
        %v3601 = vpop.f32.mrb[0].mxu0
        %v3602 = vadd.f32 0.0, %v3601
        %3603 = vmatprep.mubr.bf16.mxu0 0
        %3604 = vmatmul.mubr.bf16.gmra.mrb[0].mxu0 %v1415
        %v3605 = vpop.f32.mrb[0].mxu0
        %v3606 = vadd.f32 0.0, %v3605
        %v3607 = vpop.f32.mrb[0].mxu0
        %v3608 = vadd.f32 0.0, %v3607
        %v3609 = vpop.f32.mrb[0].mxu0
        %v3610 = vadd.f32 0.0, %v3609
        %v3611 = vpop.f32.mrb[0].mxu0
        %v3612 = vadd.f32 0.0, %v3611
        %3613 = vmatprep.mubr.bf16.mxu0 0
        %3614 = vmatmul.mubr.bf16.gmra.mrb[0].mxu0 %v1418
        %v3615 = vpop.f32.mrb[0].mxu0
        %v3616 = vadd.f32 0.0, %v3615
        %v3617 = vpop.f32.mrb[0].mxu0
        %v3618 = vadd.f32 0.0, %v3617
        %v3619 = vpop.f32.mrb[0].mxu0
        %v3620 = vadd.f32 0.0, %v3619
        %v3621 = vpop.f32.mrb[0].mxu0
        %v3622 = vadd.f32 0.0, %v3621
        %3623 = vdwg.mxu0
        %v3625 = vsel %vm724, %v3132, 0
        %3627 = vmatprep.subr.bf16.mxu0 %v1786
        %3628 = vmatpush1.bf16.msra.mxu0 %v1785
        %3629 = vmatprep.subr.bf16.mxu0 %v1794
        %3630 = vmatpush1.bf16.msra.mxu0 %v1793
        %3631 = vmatprep.subr.bf16.mxu0 0
        %3632 = vmatpush1.bf16.msra.mxu0 0
        %3633 = vmatprep.subr.bf16.mxu0 0
        %3634 = vmatpush1.bf16.msra.mxu0 0
        %3635 = vmatprep.subr.bf16.mxu0 0
        %3636 = vmatpush1.bf16.msra.mxu0 0
        %3637 = vmatprep.subr.bf16.mxu0 0
        %3638 = vmatpush1.bf16.msra.mxu0 0
        %3639 = vmatprep.subr.bf16.mxu0 0
        %3640 = vmatpush1.bf16.msra.mxu0 0
        %3641 = vmatprep.subr.bf16.mxu0 0
        %3642 = vmatpush1.bf16.msra.mxu0 0
        %3643 = vmatprep.subr.bf16.mxu0 0
        %3644 = vmatpush1.bf16.msra.mxu0 0
        %3645 = vmatprep.subr.bf16.mxu0 0
        %3646 = vmatpush1.bf16.msra.mxu0 0
        %3647 = vmatprep.subr.bf16.mxu0 0
        %3648 = vmatpush1.bf16.msra.mxu0 0
        %3649 = vmatprep.subr.bf16.mxu0 0
        %3650 = vmatpush1.bf16.msra.mxu0 0
        %3651 = vmatprep.subr.bf16.mxu0 0
        %3652 = vmatpush1.bf16.msra.mxu0 0
        %3653 = vmatprep.subr.bf16.mxu0 0
        %3654 = vmatpush1.bf16.msra.mxu0 0
        %3655 = vmatprep.subr.bf16.mxu0 0
        %3656 = vmatpush1.bf16.msra.mxu0 0
        %3657 = vmatprep.subr.bf16.mxu0 0
        %3658 = vmatpush1.bf16.msra.mxu0 0
        %3659 = vmatprep.mubr.bf16.mxu0 0
        %3660 = vmatmul.mubr.bf16.gmra.mrb[0].mxu0 %v3625
        %v3661 = vpop.f32.mrb[0].mxu0
        %v3662 = vadd.f32 0.0, %v3661
        %v3663 = vpop.f32.mrb[0].mxu0
        %v3664 = vadd.f32 0.0, %v3663
        %v3665 = vpop.f32.mrb[0].mxu0
        %v3666 = vpop.f32.mrb[0].mxu0
        %3667 = vdwg.mxu0
        %3668 = vmatprep.subr.bf16.mxu0 %v1788
        %3669 = vmatpush1.bf16.msra.mxu0 %v1787
        %3670 = vmatprep.subr.bf16.mxu0 %v1796
        %3671 = vmatpush1.bf16.msra.mxu0 %v1795
        %3672 = vmatprep.subr.bf16.mxu0 0
        %3673 = vmatpush1.bf16.msra.mxu0 0
        %3674 = vmatprep.subr.bf16.mxu0 0
        %3675 = vmatpush1.bf16.msra.mxu0 0
        %3676 = vmatprep.subr.bf16.mxu0 0
        %3677 = vmatpush1.bf16.msra.mxu0 0
        %3678 = vmatprep.subr.bf16.mxu0 0
        %3679 = vmatpush1.bf16.msra.mxu0 0
        %3680 = vmatprep.subr.bf16.mxu0 0
        %3681 = vmatpush1.bf16.msra.mxu0 0
        %3682 = vmatprep.subr.bf16.mxu0 0
        %3683 = vmatpush1.bf16.msra.mxu0 0
        %3684 = vmatprep.subr.bf16.mxu0 0
        %3685 = vmatpush1.bf16.msra.mxu0 0
        %3686 = vmatprep.subr.bf16.mxu0 0
        %3687 = vmatpush1.bf16.msra.mxu0 0
        %3688 = vmatprep.subr.bf16.mxu0 0
        %3689 = vmatpush1.bf16.msra.mxu0 0
        %3690 = vmatprep.subr.bf16.mxu0 0
        %3691 = vmatpush1.bf16.msra.mxu0 0
        %3692 = vmatprep.subr.bf16.mxu0 0
        %3693 = vmatpush1.bf16.msra.mxu0 0
        %3694 = vmatprep.subr.bf16.mxu0 0
        %3695 = vmatpush1.bf16.msra.mxu0 0
        %3696 = vmatprep.subr.bf16.mxu0 0
        %3697 = vmatpush1.bf16.msra.mxu0 0
        %3698 = vmatprep.subr.bf16.mxu0 0
        %3699 = vmatpush1.bf16.msra.mxu0 0
        %3700 = vmatprep.mubr.bf16.mxu0 0
        %3701 = vmatmul.mubr.bf16.gmra.mrb[0].mxu0 %v3625
        %v3702 = vpop.f32.mrb[0].mxu0
        %v3703 = vadd.f32 0.0, %v3702
        %v3704 = vpop.f32.mrb[0].mxu0
        %v3705 = vadd.f32 0.0, %v3704
        %v3706 = vpop.f32.mrb[0].mxu0
        %v3707 = vpop.f32.mrb[0].mxu0
        %3708 = vdwg.mxu0
        %3709 = vmatprep.subr.bf16.mxu0 %v1790
        %3710 = vmatpush1.bf16.msra.mxu0 %v1789
        %3711 = vmatprep.subr.bf16.mxu0 %v1798
        %3712 = vmatpush1.bf16.msra.mxu0 %v1797
        %3713 = vmatprep.subr.bf16.mxu0 0
        %3714 = vmatpush1.bf16.msra.mxu0 0
        %3715 = vmatprep.subr.bf16.mxu0 0
        %3716 = vmatpush1.bf16.msra.mxu0 0
        %3717 = vmatprep.subr.bf16.mxu0 0
        %3718 = vmatpush1.bf16.msra.mxu0 0
        %3719 = vmatprep.subr.bf16.mxu0 0
        %3720 = vmatpush1.bf16.msra.mxu0 0
        %3721 = vmatprep.subr.bf16.mxu0 0
        %3722 = vmatpush1.bf16.msra.mxu0 0
        %3723 = vmatprep.subr.bf16.mxu0 0
        %3724 = vmatpush1.bf16.msra.mxu0 0
        %3725 = vmatprep.subr.bf16.mxu0 0
        %3726 = vmatpush1.bf16.msra.mxu0 0
        %3727 = vmatprep.subr.bf16.mxu0 0
        %3728 = vmatpush1.bf16.msra.mxu0 0
        %3729 = vmatprep.subr.bf16.mxu0 0
        %3730 = vmatpush1.bf16.msra.mxu0 0
        %3731 = vmatprep.subr.bf16.mxu0 0
        %3732 = vmatpush1.bf16.msra.mxu0 0
        %3733 = vmatprep.subr.bf16.mxu0 0
        %3734 = vmatpush1.bf16.msra.mxu0 0
        %3735 = vmatprep.subr.bf16.mxu0 0
        %3736 = vmatpush1.bf16.msra.mxu0 0
        %3737 = vmatprep.subr.bf16.mxu0 0
        %3738 = vmatpush1.bf16.msra.mxu0 0
        %3739 = vmatprep.subr.bf16.mxu0 0
        %3740 = vmatpush1.bf16.msra.mxu0 0
        %3741 = vmatprep.mubr.bf16.mxu0 0
        %3742 = vmatmul.mubr.bf16.gmra.mrb[0].mxu0 %v3625
        %v3743 = vpop.f32.mrb[0].mxu0
        %v3744 = vadd.f32 0.0, %v3743
        %v3745 = vpop.f32.mrb[0].mxu0
        %v3746 = vadd.f32 0.0, %v3745
        %v3747 = vpop.f32.mrb[0].mxu0
        %v3748 = vpop.f32.mrb[0].mxu0
        %3749 = vdwg.mxu0
        %3750 = vmatprep.subr.bf16.mxu0 %v1792
        %3751 = vmatpush1.bf16.msra.mxu0 %v1791
        %3752 = vmatprep.subr.bf16.mxu0 %v1800
        %3753 = vmatpush1.bf16.msra.mxu0 %v1799
        %3754 = vmatprep.subr.bf16.mxu0 0
        %3755 = vmatpush1.bf16.msra.mxu0 0
        %3756 = vmatprep.subr.bf16.mxu0 0
        %3757 = vmatpush1.bf16.msra.mxu0 0
        %3758 = vmatprep.subr.bf16.mxu0 0
        %3759 = vmatpush1.bf16.msra.mxu0 0
        %3760 = vmatprep.subr.bf16.mxu0 0
        %3761 = vmatpush1.bf16.msra.mxu0 0
        %3762 = vmatprep.subr.bf16.mxu0 0
        %3763 = vmatpush1.bf16.msra.mxu0 0
        %3764 = vmatprep.subr.bf16.mxu0 0
        %3765 = vmatpush1.bf16.msra.mxu0 0
        %3766 = vmatprep.subr.bf16.mxu0 0
        %3767 = vmatpush1.bf16.msra.mxu0 0
        %3768 = vmatprep.subr.bf16.mxu0 0
        %3769 = vmatpush1.bf16.msra.mxu0 0
        %3770 = vmatprep.subr.bf16.mxu0 0
        %3771 = vmatpush1.bf16.msra.mxu0 0
        %3772 = vmatprep.subr.bf16.mxu0 0
        %3773 = vmatpush1.bf16.msra.mxu0 0
        %3774 = vmatprep.subr.bf16.mxu0 0
        %3775 = vmatpush1.bf16.msra.mxu0 0
        %3776 = vmatprep.subr.bf16.mxu0 0
        %3777 = vmatpush1.bf16.msra.mxu0 0
        %3778 = vmatprep.subr.bf16.mxu0 0
        %3779 = vmatpush1.bf16.msra.mxu0 0
        %3780 = vmatprep.subr.bf16.mxu0 0
        %3781 = vmatpush1.bf16.msra.mxu0 0
        %3782 = vmatprep.mubr.bf16.mxu0 0
        %3783 = vmatmul.mubr.bf16.gmra.mrb[0].mxu0 %v3625
        %v3784 = vpop.f32.mrb[0].mxu0
        %v3785 = vadd.f32 0.0, %v3784
        %v3786 = vpop.f32.mrb[0].mxu0
        %v3787 = vadd.f32 0.0, %v3786
        %v3788 = vpop.f32.mrb[0].mxu0
        %v3789 = vpop.f32.mrb[0].mxu0
        %3790 = vdwg.mxu0
        %v3791 = vpack.c.bf16 %v3662, %v3662
        %v3792 = vpack.c.bf16 %v3664, %v3664
        %v3793 = vpack.c.bf16 %v3703, %v3703
        %v3794 = vpack.c.bf16 %v3705, %v3705
        %v3795 = vpack.c.bf16 %v3744, %v3744
        %v3796 = vpack.c.bf16 %v3746, %v3746
        %v3797 = vpack.c.bf16 %v3785, %v3785
        %v3798 = vpack.c.bf16 %v3787, %v3787
        %v3800 = vsel %vm1420, %v3791, 0
        %v3803 = vsel %vm1420, %v3792, 0
        %v3806 = vsel %vm1420, %v3793, 0
        %v3809 = vsel %vm1420, %v3794, 0
        %v3812 = vsel %vm1420, %v3795, 0
        %v3815 = vsel %vm1420, %v3796, 0
        %v3818 = vsel %vm1420, %v3797, 0
        %v3821 = vsel %vm1420, %v3798, 0
        %3823 = vmatprep.subr.bf16.mxu0 %v3803
        %3824 = vmatpush1.bf16.msra.mxu0 %v3800
        %3825 = vmatprep.subr.bf16.mxu0 0
        %3826 = vmatpush1.bf16.msra.mxu0 0
        %3827 = vmatprep.subr.bf16.mxu0 0
        %3828 = vmatpush1.bf16.msra.mxu0 0
        %3829 = vmatprep.subr.bf16.mxu0 0
        %3830 = vmatpush1.bf16.msra.mxu0 0
        %3831 = vmatprep.subr.bf16.mxu0 0
        %3832 = vmatpush1.bf16.msra.mxu0 0
        %3833 = vmatprep.subr.bf16.mxu0 0
        %3834 = vmatpush1.bf16.msra.mxu0 0
        %3835 = vmatprep.subr.bf16.mxu0 0
        %3836 = vmatpush1.bf16.msra.mxu0 0
        %3837 = vmatprep.subr.bf16.mxu0 0
        %3838 = vmatpush1.bf16.msra.mxu0 0
        %3839 = vmatprep.subr.bf16.mxu0 0
        %3840 = vmatpush1.bf16.msra.mxu0 0
        %3841 = vmatprep.subr.bf16.mxu0 0
        %3842 = vmatpush1.bf16.msra.mxu0 0
        %3843 = vmatprep.subr.bf16.mxu0 0
        %3844 = vmatpush1.bf16.msra.mxu0 0
        %3845 = vmatprep.subr.bf16.mxu0 0
        %3846 = vmatpush1.bf16.msra.mxu0 0
        %3847 = vmatprep.subr.bf16.mxu0 0
        %3848 = vmatpush1.bf16.msra.mxu0 0
        %3849 = vmatprep.subr.bf16.mxu0 0
        %3850 = vmatpush1.bf16.msra.mxu0 0
        %3851 = vmatprep.subr.bf16.mxu0 0
        %3852 = vmatpush1.bf16.msra.mxu0 0
        %3853 = vmatprep.subr.bf16.mxu0 0
        %3854 = vmatpush1.bf16.msra.mxu0 0
        %3855 = vmatprep.mubr.bf16.mxu0 0
        %3856 = vmatmul.mubr.bf16.gmra.mrb[0].mxu0 %v2013
        %v3857 = vpop.f32.mrb[0].mxu0
        %v3858 = vadd.f32 0.0, %v3857
        %v3859 = vpop.f32.mrb[0].mxu0
        %v3860 = vadd.f32 0.0, %v3859
        %v3861 = vpop.f32.mrb[0].mxu0
        %v3862 = vadd.f32 0.0, %v3861
        %v3863 = vpop.f32.mrb[0].mxu0
        %v3864 = vadd.f32 0.0, %v3863
        %3865 = vmatprep.mubr.bf16.mxu0 0
        %3866 = vmatmul.mubr.bf16.gmra.mrb[0].mxu0 %v2016
        %v3867 = vpop.f32.mrb[0].mxu0
        %v3868 = vadd.f32 0.0, %v3867
        %v3869 = vpop.f32.mrb[0].mxu0
        %v3870 = vadd.f32 0.0, %v3869
        %v3871 = vpop.f32.mrb[0].mxu0
        %v3872 = vadd.f32 0.0, %v3871
        %v3873 = vpop.f32.mrb[0].mxu0
        %v3874 = vadd.f32 0.0, %v3873
        %3875 = vmatprep.mubr.bf16.mxu0 0
        %3876 = vmatmul.mubr.bf16.gmra.mrb[0].mxu0 %v2019
        %v3877 = vpop.f32.mrb[0].mxu0
        %v3878 = vadd.f32 0.0, %v3877
        %v3879 = vpop.f32.mrb[0].mxu0
        %v3880 = vadd.f32 0.0, %v3879
        %v3881 = vpop.f32.mrb[0].mxu0
        %v3882 = vadd.f32 0.0, %v3881
        %v3883 = vpop.f32.mrb[0].mxu0
        %v3884 = vadd.f32 0.0, %v3883
        %3885 = vmatprep.mubr.bf16.mxu0 0
        %3886 = vmatmul.mubr.bf16.gmra.mrb[0].mxu0 %v2022
        %v3887 = vpop.f32.mrb[0].mxu0
        %v3888 = vadd.f32 0.0, %v3887
        %v3889 = vpop.f32.mrb[0].mxu0
        %v3890 = vadd.f32 0.0, %v3889
        %v3891 = vpop.f32.mrb[0].mxu0
        %v3892 = vadd.f32 0.0, %v3891
        %v3893 = vpop.f32.mrb[0].mxu0
        %v3894 = vadd.f32 0.0, %v3893
        %3895 = vdwg.mxu0
        %3896 = vmatprep.subr.bf16.mxu0 %v3809
        %3897 = vmatpush1.bf16.msra.mxu0 %v3806
        %3898 = vmatprep.subr.bf16.mxu0 0
        %3899 = vmatpush1.bf16.msra.mxu0 0
        %3900 = vmatprep.subr.bf16.mxu0 0
        %3901 = vmatpush1.bf16.msra.mxu0 0
        %3902 = vmatprep.subr.bf16.mxu0 0
        %3903 = vmatpush1.bf16.msra.mxu0 0
        %3904 = vmatprep.subr.bf16.mxu0 0
        %3905 = vmatpush1.bf16.msra.mxu0 0
        %3906 = vmatprep.subr.bf16.mxu0 0
        %3907 = vmatpush1.bf16.msra.mxu0 0
        %3908 = vmatprep.subr.bf16.mxu0 0
        %3909 = vmatpush1.bf16.msra.mxu0 0
        %3910 = vmatprep.subr.bf16.mxu0 0
        %3911 = vmatpush1.bf16.msra.mxu0 0
        %3912 = vmatprep.subr.bf16.mxu0 0
        %3913 = vmatpush1.bf16.msra.mxu0 0
        %3914 = vmatprep.subr.bf16.mxu0 0
        %3915 = vmatpush1.bf16.msra.mxu0 0
        %3916 = vmatprep.subr.bf16.mxu0 0
        %3917 = vmatpush1.bf16.msra.mxu0 0
        %3918 = vmatprep.subr.bf16.mxu0 0
        %3919 = vmatpush1.bf16.msra.mxu0 0
        %3920 = vmatprep.subr.bf16.mxu0 0
        %3921 = vmatpush1.bf16.msra.mxu0 0
        %3922 = vmatprep.subr.bf16.mxu0 0
        %3923 = vmatpush1.bf16.msra.mxu0 0
        %3924 = vmatprep.subr.bf16.mxu0 0
        %3925 = vmatpush1.bf16.msra.mxu0 0
        %3926 = vmatprep.subr.bf16.mxu0 0
        %3927 = vmatpush1.bf16.msra.mxu0 0
        %3928 = vmatprep.mubr.bf16.mxu0 0
        %3929 = vmatmul.mubr.bf16.gmra.mrb[0].mxu0 %v2013
        %v3930 = vpop.f32.mrb[0].mxu0
        %v3931 = vadd.f32 0.0, %v3930
        %v3932 = vpop.f32.mrb[0].mxu0
        %v3933 = vadd.f32 0.0, %v3932
        %v3934 = vpop.f32.mrb[0].mxu0
        %v3935 = vadd.f32 0.0, %v3934
        %v3936 = vpop.f32.mrb[0].mxu0
        %v3937 = vadd.f32 0.0, %v3936
        %3938 = vmatprep.mubr.bf16.mxu0 0
        %3939 = vmatmul.mubr.bf16.gmra.mrb[0].mxu0 %v2016
        %v3940 = vpop.f32.mrb[0].mxu0
        %v3941 = vadd.f32 0.0, %v3940
        %v3942 = vpop.f32.mrb[0].mxu0
        %v3943 = vadd.f32 0.0, %v3942
        %v3944 = vpop.f32.mrb[0].mxu0
        %v3945 = vadd.f32 0.0, %v3944
        %v3946 = vpop.f32.mrb[0].mxu0
        %v3947 = vadd.f32 0.0, %v3946
        %3948 = vmatprep.mubr.bf16.mxu0 0
        %3949 = vmatmul.mubr.bf16.gmra.mrb[0].mxu0 %v2019
        %v3950 = vpop.f32.mrb[0].mxu0
        %v3951 = vadd.f32 0.0, %v3950
        %v3952 = vpop.f32.mrb[0].mxu0
        %v3953 = vadd.f32 0.0, %v3952
        %v3954 = vpop.f32.mrb[0].mxu0
        %v3955 = vadd.f32 0.0, %v3954
        %v3956 = vpop.f32.mrb[0].mxu0
        %v3957 = vadd.f32 0.0, %v3956
        %3958 = vmatprep.mubr.bf16.mxu0 0
        %3959 = vmatmul.mubr.bf16.gmra.mrb[0].mxu0 %v2022
        %v3960 = vpop.f32.mrb[0].mxu0
        %v3961 = vadd.f32 0.0, %v3960
        %v3962 = vpop.f32.mrb[0].mxu0
        %v3963 = vadd.f32 0.0, %v3962
        %v3964 = vpop.f32.mrb[0].mxu0
        %v3965 = vadd.f32 0.0, %v3964
        %v3966 = vpop.f32.mrb[0].mxu0
        %v3967 = vadd.f32 0.0, %v3966
        %3968 = vdwg.mxu0
        %3969 = vmatprep.subr.bf16.mxu0 %v3815
        %3970 = vmatpush1.bf16.msra.mxu0 %v3812
        %3971 = vmatprep.subr.bf16.mxu0 0
        %3972 = vmatpush1.bf16.msra.mxu0 0
        %3973 = vmatprep.subr.bf16.mxu0 0
        %3974 = vmatpush1.bf16.msra.mxu0 0
        %3975 = vmatprep.subr.bf16.mxu0 0
        %3976 = vmatpush1.bf16.msra.mxu0 0
        %3977 = vmatprep.subr.bf16.mxu0 0
        %3978 = vmatpush1.bf16.msra.mxu0 0
        %3979 = vmatprep.subr.bf16.mxu0 0
        %3980 = vmatpush1.bf16.msra.mxu0 0
        %3981 = vmatprep.subr.bf16.mxu0 0
        %3982 = vmatpush1.bf16.msra.mxu0 0
        %3983 = vmatprep.subr.bf16.mxu0 0
        %3984 = vmatpush1.bf16.msra.mxu0 0
        %3985 = vmatprep.subr.bf16.mxu0 0
        %3986 = vmatpush1.bf16.msra.mxu0 0
        %3987 = vmatprep.subr.bf16.mxu0 0
        %3988 = vmatpush1.bf16.msra.mxu0 0
        %3989 = vmatprep.subr.bf16.mxu0 0
        %3990 = vmatpush1.bf16.msra.mxu0 0
        %3991 = vmatprep.subr.bf16.mxu0 0
        %3992 = vmatpush1.bf16.msra.mxu0 0
        %3993 = vmatprep.subr.bf16.mxu0 0
        %3994 = vmatpush1.bf16.msra.mxu0 0
        %3995 = vmatprep.subr.bf16.mxu0 0
        %3996 = vmatpush1.bf16.msra.mxu0 0
        %3997 = vmatprep.subr.bf16.mxu0 0
        %3998 = vmatpush1.bf16.msra.mxu0 0
        %3999 = vmatprep.subr.bf16.mxu0 0
        %4000 = vmatpush1.bf16.msra.mxu0 0
        %4001 = vmatprep.mubr.bf16.mxu0 0
        %4002 = vmatmul.mubr.bf16.gmra.mrb[0].mxu0 %v2013
        %v4003 = vpop.f32.mrb[0].mxu0
        %v4004 = vadd.f32 0.0, %v4003
        %v4005 = vpop.f32.mrb[0].mxu0
        %v4006 = vadd.f32 0.0, %v4005
        %v4007 = vpop.f32.mrb[0].mxu0
        %v4008 = vadd.f32 0.0, %v4007
        %v4009 = vpop.f32.mrb[0].mxu0
        %v4010 = vadd.f32 0.0, %v4009
        %4011 = vmatprep.mubr.bf16.mxu0 0
        %4012 = vmatmul.mubr.bf16.gmra.mrb[0].mxu0 %v2016
        %v4013 = vpop.f32.mrb[0].mxu0
        %v4014 = vadd.f32 0.0, %v4013
        %v4015 = vpop.f32.mrb[0].mxu0
        %v4016 = vadd.f32 0.0, %v4015
        %v4017 = vpop.f32.mrb[0].mxu0
        %v4018 = vadd.f32 0.0, %v4017
        %v4019 = vpop.f32.mrb[0].mxu0
        %v4020 = vadd.f32 0.0, %v4019
        %4021 = vmatprep.mubr.bf16.mxu0 0
        %4022 = vmatmul.mubr.bf16.gmra.mrb[0].mxu0 %v2019
        %v4023 = vpop.f32.mrb[0].mxu0
        %v4024 = vadd.f32 0.0, %v4023
        %v4025 = vpop.f32.mrb[0].mxu0
        %v4026 = vadd.f32 0.0, %v4025
        %v4027 = vpop.f32.mrb[0].mxu0
        %v4028 = vadd.f32 0.0, %v4027
        %v4029 = vpop.f32.mrb[0].mxu0
        %v4030 = vadd.f32 0.0, %v4029
        %4031 = vmatprep.mubr.bf16.mxu0 0
        %4032 = vmatmul.mubr.bf16.gmra.mrb[0].mxu0 %v2022
        %v4033 = vpop.f32.mrb[0].mxu0
        %v4034 = vadd.f32 0.0, %v4033
        %v4035 = vpop.f32.mrb[0].mxu0
        %v4036 = vadd.f32 0.0, %v4035
        %v4037 = vpop.f32.mrb[0].mxu0
        %v4038 = vadd.f32 0.0, %v4037
        %v4039 = vpop.f32.mrb[0].mxu0
        %v4040 = vadd.f32 0.0, %v4039
        %4041 = vdwg.mxu0
        %4042 = vmatprep.subr.bf16.mxu0 %v3821
        %4043 = vmatpush1.bf16.msra.mxu0 %v3818
        %4044 = vmatprep.subr.bf16.mxu0 0
        %4045 = vmatpush1.bf16.msra.mxu0 0
        %4046 = vmatprep.subr.bf16.mxu0 0
        %4047 = vmatpush1.bf16.msra.mxu0 0
        %4048 = vmatprep.subr.bf16.mxu0 0
        %4049 = vmatpush1.bf16.msra.mxu0 0
        %4050 = vmatprep.subr.bf16.mxu0 0
        %4051 = vmatpush1.bf16.msra.mxu0 0
        %4052 = vmatprep.subr.bf16.mxu0 0
        %4053 = vmatpush1.bf16.msra.mxu0 0
        %4054 = vmatprep.subr.bf16.mxu0 0
        %4055 = vmatpush1.bf16.msra.mxu0 0
        %4056 = vmatprep.subr.bf16.mxu0 0
        %4057 = vmatpush1.bf16.msra.mxu0 0
        %4058 = vmatprep.subr.bf16.mxu0 0
        %4059 = vmatpush1.bf16.msra.mxu0 0
        %4060 = vmatprep.subr.bf16.mxu0 0
        %4061 = vmatpush1.bf16.msra.mxu0 0
        %4062 = vmatprep.subr.bf16.mxu0 0
        %4063 = vmatpush1.bf16.msra.mxu0 0
        %4064 = vmatprep.subr.bf16.mxu0 0
        %4065 = vmatpush1.bf16.msra.mxu0 0
        %4066 = vmatprep.subr.bf16.mxu0 0
        %4067 = vmatpush1.bf16.msra.mxu0 0
        %4068 = vmatprep.subr.bf16.mxu0 0
        %4069 = vmatpush1.bf16.msra.mxu0 0
        %4070 = vmatprep.subr.bf16.mxu0 0
        %4071 = vmatpush1.bf16.msra.mxu0 0
        %4072 = vmatprep.subr.bf16.mxu0 0
        %4073 = vmatpush1.bf16.msra.mxu0 0
        %4074 = vmatprep.mubr.bf16.mxu0 0
        %4075 = vmatmul.mubr.bf16.gmra.mrb[0].mxu0 %v2013
        %v4076 = vpop.f32.mrb[0].mxu0
        %v4077 = vadd.f32 0.0, %v4076
        %v4078 = vpop.f32.mrb[0].mxu0
        %v4079 = vadd.f32 0.0, %v4078
        %v4080 = vpop.f32.mrb[0].mxu0
        %v4081 = vadd.f32 0.0, %v4080
        %v4082 = vpop.f32.mrb[0].mxu0
        %v4083 = vadd.f32 0.0, %v4082
        %4084 = vmatprep.mubr.bf16.mxu0 0
        %4085 = vmatmul.mubr.bf16.gmra.mrb[0].mxu0 %v2016
        %v4086 = vpop.f32.mrb[0].mxu0
        %v4087 = vadd.f32 0.0, %v4086
        %v4088 = vpop.f32.mrb[0].mxu0
        %v4089 = vadd.f32 0.0, %v4088
        %v4090 = vpop.f32.mrb[0].mxu0
        %v4091 = vadd.f32 0.0, %v4090
        %v4092 = vpop.f32.mrb[0].mxu0
        %v4093 = vadd.f32 0.0, %v4092
        %4094 = vmatprep.mubr.bf16.mxu0 0
        %4095 = vmatmul.mubr.bf16.gmra.mrb[0].mxu0 %v2019
        %v4096 = vpop.f32.mrb[0].mxu0
        %v4097 = vadd.f32 0.0, %v4096
        %v4098 = vpop.f32.mrb[0].mxu0
        %v4099 = vadd.f32 0.0, %v4098
        %v4100 = vpop.f32.mrb[0].mxu0
        %v4101 = vadd.f32 0.0, %v4100
        %v4102 = vpop.f32.mrb[0].mxu0
        %v4103 = vadd.f32 0.0, %v4102
        %4104 = vmatprep.mubr.bf16.mxu0 0
        %4105 = vmatmul.mubr.bf16.gmra.mrb[0].mxu0 %v2022
        %v4106 = vpop.f32.mrb[0].mxu0
        %v4107 = vadd.f32 0.0, %v4106
        %v4108 = vpop.f32.mrb[0].mxu0
        %v4109 = vadd.f32 0.0, %v4108
        %v4110 = vpop.f32.mrb[0].mxu0
        %v4111 = vadd.f32 0.0, %v4110
        %v4112 = vpop.f32.mrb[0].mxu0
        %v4113 = vadd.f32 0.0, %v4112
        %4114 = vdwg.mxu0
        %v4115 = vmul.f32 %v3367, %v3858
        %v4116 = vmul.f32 %v3369, %v3860
        %v4117 = vmul.f32 %v3440, %v3931
        %v4118 = vmul.f32 %v3442, %v3933
        %v4119 = vmul.f32 %v3513, %v4004
        %v4120 = vmul.f32 %v3515, %v4006
        %v4121 = vmul.f32 %v3586, %v4077
        %v4122 = vmul.f32 %v3588, %v4079
        %v4123 = vmul.f32 %v3371, %v3862
        %v4124 = vmul.f32 %v3373, %v3864
        %v4125 = vmul.f32 %v3444, %v3935
        %v4126 = vmul.f32 %v3446, %v3937
        %v4127 = vmul.f32 %v3517, %v4008
        %v4128 = vmul.f32 %v3519, %v4010
        %v4129 = vmul.f32 %v3590, %v4081
        %v4130 = vmul.f32 %v3592, %v4083
        %v4131 = vmul.f32 %v3377, %v3868
        %v4132 = vmul.f32 %v3379, %v3870
        %v4133 = vmul.f32 %v3450, %v3941
        %v4134 = vmul.f32 %v3452, %v3943
        %v4135 = vmul.f32 %v3523, %v4014
        %v4136 = vmul.f32 %v3525, %v4016
        %v4137 = vmul.f32 %v3596, %v4087
        %v4138 = vmul.f32 %v3598, %v4089
        %v4139 = vmul.f32 %v3381, %v3872
        %v4140 = vmul.f32 %v3383, %v3874
        %v4141 = vmul.f32 %v3454, %v3945
        %v4142 = vmul.f32 %v3456, %v3947
        %v4143 = vmul.f32 %v3527, %v4018
        %v4144 = vmul.f32 %v3529, %v4020
        %v4145 = vmul.f32 %v3600, %v4091
        %v4146 = vmul.f32 %v3602, %v4093
        %v4147 = vmul.f32 %v3387, %v3878
        %v4148 = vmul.f32 %v3389, %v3880
        %v4149 = vmul.f32 %v3460, %v3951
        %v4150 = vmul.f32 %v3462, %v3953
        %v4151 = vmul.f32 %v3533, %v4024
        %v4152 = vmul.f32 %v3535, %v4026
        %v4153 = vmul.f32 %v3606, %v4097
        %v4154 = vmul.f32 %v3608, %v4099
        %v4155 = vmul.f32 %v3391, %v3882
        %v4156 = vmul.f32 %v3393, %v3884
        %v4157 = vmul.f32 %v3464, %v3955
        %v4158 = vmul.f32 %v3466, %v3957
        %v4159 = vmul.f32 %v3537, %v4028
        %v4160 = vmul.f32 %v3539, %v4030
        %v4161 = vmul.f32 %v3610, %v4101
        %v4162 = vmul.f32 %v3612, %v4103
        %v4163 = vmul.f32 %v3397, %v3888
        %v4164 = vmul.f32 %v3399, %v3890
        %v4165 = vmul.f32 %v3470, %v3961
        %v4166 = vmul.f32 %v3472, %v3963
        %v4167 = vmul.f32 %v3543, %v4034
        %v4168 = vmul.f32 %v3545, %v4036
        %v4169 = vmul.f32 %v3616, %v4107
        %v4170 = vmul.f32 %v3618, %v4109
        %v4171 = vmul.f32 %v3401, %v3892
        %v4172 = vmul.f32 %v3403, %v3894
        %v4173 = vmul.f32 %v3474, %v3965
        %v4174 = vmul.f32 %v3476, %v3967
        %v4175 = vmul.f32 %v3547, %v4038
        %v4176 = vmul.f32 %v3549, %v4040
        %v4177 = vmul.f32 %v3620, %v4111
        %v4178 = vmul.f32 %v3622, %v4113
        %4179 = vmatprep.subr.mxu0 %v4116
        %4180 = vmatpush1.xpose.msra.mxu0 %v4115
        %4181 = vmatprep.subr.mxu0 %v4124
        %4182 = vmatpush1.xpose.msra.mxu0 %v4123
        %4183 = vmatprep.subr.mxu0 %v4132
        %4184 = vmatpush1.xpose.msra.mxu0 %v4131
        %4185 = vmatprep.subr.mxu0 %v4140
        %4186 = vmatpush1.xpose.msra.mxu0 %v4139
        %4187 = vmatprep.subr.mxu0 %v4148
        %4188 = vmatpush1.xpose.msra.mxu0 %v4147
        %4189 = vmatprep.subr.mxu0 %v4156
        %4190 = vmatpush1.xpose.msra.mxu0 %v4155
        %4191 = vmatprep.subr.mxu0 %v4164
        %4192 = vmatpush1.xpose.msra.mxu0 %v4163
        %4193 = vmatprep.subr.mxu0 %v4172
        %4194 = vmatpush1.xpose.msra.mxu0 %v4171
        %4195 = vmatprep.subr.mxu0 0.0
        %4196 = vmatpush1.xpose.msra.mxu0 0.0
        %4197 = vmatprep.subr.mxu0 0.0
        %4198 = vmatpush1.xpose.msra.mxu0 0.0
        %4199 = vmatprep.subr.mxu0 0.0
        %4200 = vmatpush1.xpose.msra.mxu0 0.0
        %4201 = vmatprep.subr.mxu0 0.0
        %4202 = vmatpush1.xpose.msra.mxu0 0.0
        %4203 = vmatprep.subr.mxu0 0.0
        %4204 = vmatpush1.xpose.msra.mxu0 0.0
        %4205 = vmatprep.subr.mxu0 0.0
        %4206 = vmatpush1.xpose.msra.mxu0 0.0
        %4207 = vmatprep.subr.mxu0 0.0
        %4208 = vmatpush1.xpose.msra.mxu0 0.0
        %4209 = vmatprep.subr.mxu0 0.0
        %4210 = vmatpush1.xpose.msra.mxu0 0.0
        %4211 = vmatprep.subr.mxu0 0.0
        %4212 = vmatpush1.xpose.msra.mxu0 0.0
        %4213 = vmatprep.subr.mxu0 0.0
        %4214 = vmatpush1.xpose.msra.mxu0 0.0
        %4215 = vmatprep.subr.mxu0 0.0
        %4216 = vmatpush1.xpose.msra.mxu0 0.0
        %4217 = vmatprep.subr.mxu0 0.0
        %4218 = vmatpush1.xpose.msra.mxu0 0.0
        %4219 = vmatprep.subr.mxu0 0.0
        %4220 = vmatpush1.xpose.msra.mxu0 0.0
        %4221 = vmatprep.subr.mxu0 0.0
        %4222 = vmatpush1.xpose.msra.mxu0 0.0
        %4223 = vmatprep.subr.mxu0 0.0
        %4224 = vmatpush1.xpose.msra.mxu0 0.0
        %4225 = vmatprep.subr.mxu0 0.0
        %4226 = vmatpush1.xpose.msra.mxu0 0.0
        %4227 = vmatprep.subr.mxu0 0.0
        %4228 = vmatpush1.xpose.msra.mxu0 0.0
        %4229 = vmatprep.subr.mxu0 0.0
        %4230 = vmatpush1.xpose.msra.mxu0 0.0
        %4231 = vmatprep.subr.mxu0 0.0
        %4232 = vmatpush1.xpose.msra.mxu0 0.0
        %4233 = vmatprep.subr.mxu0 0.0
        %4234 = vmatpush1.xpose.msra.mxu0 0.0
        %4235 = vmatprep.subr.mxu0 0.0
        %4236 = vmatpush1.xpose.msra.mxu0 0.0
        %4237 = vmatprep.subr.mxu0 0.0
        %4238 = vmatpush1.xpose.msra.mxu0 0.0
        %4239 = vmatprep.subr.mxu0 0.0
        %4240 = vmatpush1.xpose.msra.mxu0 0.0
        %4241 = vmatprep.subr.mxu0 0.0
        %4242 = vmatpush1.xpose.msra.mxu0 0.0
        %4243 = vmatprep.mubr.f32.mxu0 %v769
        %4244 = vmatmul.mubr.f32.gmra.mrb[0].mxu0 %v767
        %v4245 = vpop.f32.mrb[0].mxu0
        %v4246 = vadd.f32 0.0, %v4245
        %v4247 = vpop.f32.mrb[0].mxu0
        %4248 = vdwg.mxu0
        %4249 = vmatprep.subr.mxu0 %v4118
        %4250 = vmatpush1.xpose.msra.mxu0 %v4117
        %4251 = vmatprep.subr.mxu0 %v4126
        %4252 = vmatpush1.xpose.msra.mxu0 %v4125
        %4253 = vmatprep.subr.mxu0 %v4134
        %4254 = vmatpush1.xpose.msra.mxu0 %v4133
        %4255 = vmatprep.subr.mxu0 %v4142
        %4256 = vmatpush1.xpose.msra.mxu0 %v4141
        %4257 = vmatprep.subr.mxu0 %v4150
        %4258 = vmatpush1.xpose.msra.mxu0 %v4149
        %4259 = vmatprep.subr.mxu0 %v4158
        %4260 = vmatpush1.xpose.msra.mxu0 %v4157
        %4261 = vmatprep.subr.mxu0 %v4166
        %4262 = vmatpush1.xpose.msra.mxu0 %v4165
        %4263 = vmatprep.subr.mxu0 %v4174
        %4264 = vmatpush1.xpose.msra.mxu0 %v4173
        %4265 = vmatprep.subr.mxu0 0.0
        %4266 = vmatpush1.xpose.msra.mxu0 0.0
        %4267 = vmatprep.subr.mxu0 0.0
        %4268 = vmatpush1.xpose.msra.mxu0 0.0
        %4269 = vmatprep.subr.mxu0 0.0
        %4270 = vmatpush1.xpose.msra.mxu0 0.0
        %4271 = vmatprep.subr.mxu0 0.0
        %4272 = vmatpush1.xpose.msra.mxu0 0.0
        %4273 = vmatprep.subr.mxu0 0.0
        %4274 = vmatpush1.xpose.msra.mxu0 0.0
        %4275 = vmatprep.subr.mxu0 0.0
        %4276 = vmatpush1.xpose.msra.mxu0 0.0
        %4277 = vmatprep.subr.mxu0 0.0
        %4278 = vmatpush1.xpose.msra.mxu0 0.0
        %4279 = vmatprep.subr.mxu0 0.0
        %4280 = vmatpush1.xpose.msra.mxu0 0.0
        %4281 = vmatprep.subr.mxu0 0.0
        %4282 = vmatpush1.xpose.msra.mxu0 0.0
        %4283 = vmatprep.subr.mxu0 0.0
        %4284 = vmatpush1.xpose.msra.mxu0 0.0
        %4285 = vmatprep.subr.mxu0 0.0
        %4286 = vmatpush1.xpose.msra.mxu0 0.0
        %4287 = vmatprep.subr.mxu0 0.0
        %4288 = vmatpush1.xpose.msra.mxu0 0.0
        %4289 = vmatprep.subr.mxu0 0.0
        %4290 = vmatpush1.xpose.msra.mxu0 0.0
        %4291 = vmatprep.subr.mxu0 0.0
        %4292 = vmatpush1.xpose.msra.mxu0 0.0
        %4293 = vmatprep.subr.mxu0 0.0
        %4294 = vmatpush1.xpose.msra.mxu0 0.0
        %4295 = vmatprep.subr.mxu0 0.0
        %4296 = vmatpush1.xpose.msra.mxu0 0.0
        %4297 = vmatprep.subr.mxu0 0.0
        %4298 = vmatpush1.xpose.msra.mxu0 0.0
        %4299 = vmatprep.subr.mxu0 0.0
        %4300 = vmatpush1.xpose.msra.mxu0 0.0
        %4301 = vmatprep.subr.mxu0 0.0
        %4302 = vmatpush1.xpose.msra.mxu0 0.0
        %4303 = vmatprep.subr.mxu0 0.0
        %4304 = vmatpush1.xpose.msra.mxu0 0.0
        %4305 = vmatprep.subr.mxu0 0.0
        %4306 = vmatpush1.xpose.msra.mxu0 0.0
        %4307 = vmatprep.subr.mxu0 0.0
        %4308 = vmatpush1.xpose.msra.mxu0 0.0
        %4309 = vmatprep.subr.mxu0 0.0
        %4310 = vmatpush1.xpose.msra.mxu0 0.0
        %4311 = vmatprep.subr.mxu0 0.0
        %4312 = vmatpush1.xpose.msra.mxu0 0.0
        %4313 = vmatprep.mubr.f32.mxu0 %v812
        %4314 = vmatmul.mubr.f32.gmra.mrb[0].mxu0 %v810
        %v4315 = vpop.f32.mrb[0].mxu0
        %v4316 = vadd.f32 %v4246, %v4315
        %v4317 = vpop.f32.mrb[0].mxu0
        %4318 = vdwg.mxu0
        %4319 = vmatprep.subr.mxu0 %v4120
        %4320 = vmatpush1.xpose.msra.mxu0 %v4119
        %4321 = vmatprep.subr.mxu0 %v4128
        %4322 = vmatpush1.xpose.msra.mxu0 %v4127
        %4323 = vmatprep.subr.mxu0 %v4136
        %4324 = vmatpush1.xpose.msra.mxu0 %v4135
        %4325 = vmatprep.subr.mxu0 %v4144
        %4326 = vmatpush1.xpose.msra.mxu0 %v4143
        %4327 = vmatprep.subr.mxu0 %v4152
        %4328 = vmatpush1.xpose.msra.mxu0 %v4151
        %4329 = vmatprep.subr.mxu0 %v4160
        %4330 = vmatpush1.xpose.msra.mxu0 %v4159
        %4331 = vmatprep.subr.mxu0 %v4168
        %4332 = vmatpush1.xpose.msra.mxu0 %v4167
        %4333 = vmatprep.subr.mxu0 %v4176
        %4334 = vmatpush1.xpose.msra.mxu0 %v4175
        %4335 = vmatprep.subr.mxu0 0.0
        %4336 = vmatpush1.xpose.msra.mxu0 0.0
        %4337 = vmatprep.subr.mxu0 0.0
        %4338 = vmatpush1.xpose.msra.mxu0 0.0
        %4339 = vmatprep.subr.mxu0 0.0
        %4340 = vmatpush1.xpose.msra.mxu0 0.0
        %4341 = vmatprep.subr.mxu0 0.0
        %4342 = vmatpush1.xpose.msra.mxu0 0.0
        %4343 = vmatprep.subr.mxu0 0.0
        %4344 = vmatpush1.xpose.msra.mxu0 0.0
        %4345 = vmatprep.subr.mxu0 0.0
        %4346 = vmatpush1.xpose.msra.mxu0 0.0
        %4347 = vmatprep.subr.mxu0 0.0
        %4348 = vmatpush1.xpose.msra.mxu0 0.0
        %4349 = vmatprep.subr.mxu0 0.0
        %4350 = vmatpush1.xpose.msra.mxu0 0.0
        %4351 = vmatprep.subr.mxu0 0.0
        %4352 = vmatpush1.xpose.msra.mxu0 0.0
        %4353 = vmatprep.subr.mxu0 0.0
        %4354 = vmatpush1.xpose.msra.mxu0 0.0
        %4355 = vmatprep.subr.mxu0 0.0
        %4356 = vmatpush1.xpose.msra.mxu0 0.0
        %4357 = vmatprep.subr.mxu0 0.0
        %4358 = vmatpush1.xpose.msra.mxu0 0.0
        %4359 = vmatprep.subr.mxu0 0.0
        %4360 = vmatpush1.xpose.msra.mxu0 0.0
        %4361 = vmatprep.subr.mxu0 0.0
        %4362 = vmatpush1.xpose.msra.mxu0 0.0
        %4363 = vmatprep.subr.mxu0 0.0
        %4364 = vmatpush1.xpose.msra.mxu0 0.0
        %4365 = vmatprep.subr.mxu0 0.0
        %4366 = vmatpush1.xpose.msra.mxu0 0.0
        %4367 = vmatprep.subr.mxu0 0.0
        %4368 = vmatpush1.xpose.msra.mxu0 0.0
        %4369 = vmatprep.subr.mxu0 0.0
        %4370 = vmatpush1.xpose.msra.mxu0 0.0
        %4371 = vmatprep.subr.mxu0 0.0
        %4372 = vmatpush1.xpose.msra.mxu0 0.0
        %4373 = vmatprep.subr.mxu0 0.0
        %4374 = vmatpush1.xpose.msra.mxu0 0.0
        %4375 = vmatprep.subr.mxu0 0.0
        %4376 = vmatpush1.xpose.msra.mxu0 0.0
        %4377 = vmatprep.subr.mxu0 0.0
        %4378 = vmatpush1.xpose.msra.mxu0 0.0
        %4379 = vmatprep.subr.mxu0 0.0
        %4380 = vmatpush1.xpose.msra.mxu0 0.0
        %4381 = vmatprep.subr.mxu0 0.0
        %4382 = vmatpush1.xpose.msra.mxu0 0.0
        %4383 = vmatprep.mubr.f32.mxu0 %v855
        %4384 = vmatmul.mubr.f32.gmra.mrb[0].mxu0 %v853
        %v4385 = vpop.f32.mrb[0].mxu0
        %v4386 = vadd.f32 %v4316, %v4385
        %v4387 = vpop.f32.mrb[0].mxu0
        %4388 = vdwg.mxu0
        %4389 = vmatprep.subr.mxu0 %v4122
        %4390 = vmatpush1.xpose.msra.mxu0 %v4121
        %4391 = vmatprep.subr.mxu0 %v4130
        %4392 = vmatpush1.xpose.msra.mxu0 %v4129
        %4393 = vmatprep.subr.mxu0 %v4138
        %4394 = vmatpush1.xpose.msra.mxu0 %v4137
        %4395 = vmatprep.subr.mxu0 %v4146
        %4396 = vmatpush1.xpose.msra.mxu0 %v4145
        %4397 = vmatprep.subr.mxu0 %v4154
        %4398 = vmatpush1.xpose.msra.mxu0 %v4153
        %4399 = vmatprep.subr.mxu0 %v4162
        %4400 = vmatpush1.xpose.msra.mxu0 %v4161
        %4401 = vmatprep.subr.mxu0 %v4170
        %4402 = vmatpush1.xpose.msra.mxu0 %v4169
        %4403 = vmatprep.subr.mxu0 %v4178
        %4404 = vmatpush1.xpose.msra.mxu0 %v4177
        %4405 = vmatprep.subr.mxu0 0.0
        %4406 = vmatpush1.xpose.msra.mxu0 0.0
        %4407 = vmatprep.subr.mxu0 0.0
        %4408 = vmatpush1.xpose.msra.mxu0 0.0
        %4409 = vmatprep.subr.mxu0 0.0
        %4410 = vmatpush1.xpose.msra.mxu0 0.0
        %4411 = vmatprep.subr.mxu0 0.0
        %4412 = vmatpush1.xpose.msra.mxu0 0.0
        %4413 = vmatprep.subr.mxu0 0.0
        %4414 = vmatpush1.xpose.msra.mxu0 0.0
        %4415 = vmatprep.subr.mxu0 0.0
        %4416 = vmatpush1.xpose.msra.mxu0 0.0
        %4417 = vmatprep.subr.mxu0 0.0
        %4418 = vmatpush1.xpose.msra.mxu0 0.0
        %4419 = vmatprep.subr.mxu0 0.0
        %4420 = vmatpush1.xpose.msra.mxu0 0.0
        %4421 = vmatprep.subr.mxu0 0.0
        %4422 = vmatpush1.xpose.msra.mxu0 0.0
        %4423 = vmatprep.subr.mxu0 0.0
        %4424 = vmatpush1.xpose.msra.mxu0 0.0
        %4425 = vmatprep.subr.mxu0 0.0
        %4426 = vmatpush1.xpose.msra.mxu0 0.0
        %4427 = vmatprep.subr.mxu0 0.0
        %4428 = vmatpush1.xpose.msra.mxu0 0.0
        %4429 = vmatprep.subr.mxu0 0.0
        %4430 = vmatpush1.xpose.msra.mxu0 0.0
        %4431 = vmatprep.subr.mxu0 0.0
        %4432 = vmatpush1.xpose.msra.mxu0 0.0
        %4433 = vmatprep.subr.mxu0 0.0
        %4434 = vmatpush1.xpose.msra.mxu0 0.0
        %4435 = vmatprep.subr.mxu0 0.0
        %4436 = vmatpush1.xpose.msra.mxu0 0.0
        %4437 = vmatprep.subr.mxu0 0.0
        %4438 = vmatpush1.xpose.msra.mxu0 0.0
        %4439 = vmatprep.subr.mxu0 0.0
        %4440 = vmatpush1.xpose.msra.mxu0 0.0
        %4441 = vmatprep.subr.mxu0 0.0
        %4442 = vmatpush1.xpose.msra.mxu0 0.0
        %4443 = vmatprep.subr.mxu0 0.0
        %4444 = vmatpush1.xpose.msra.mxu0 0.0
        %4445 = vmatprep.subr.mxu0 0.0
        %4446 = vmatpush1.xpose.msra.mxu0 0.0
        %4447 = vmatprep.subr.mxu0 0.0
        %4448 = vmatpush1.xpose.msra.mxu0 0.0
        %4449 = vmatprep.subr.mxu0 0.0
        %4450 = vmatpush1.xpose.msra.mxu0 0.0
        %4451 = vmatprep.subr.mxu0 0.0
        %4452 = vmatpush1.xpose.msra.mxu0 0.0
        %4453 = vmatprep.mubr.f32.mxu0 %v898
        %4454 = vmatmul.mubr.f32.gmra.mrb[0].mxu0 %v896
        %v4455 = vpop.f32.mrb[0].mxu0
        %v4456 = vadd.f32 %v4386, %v4455
        %v4457 = vpop.f32.mrb[0].mxu0
        %4458 = vdwg.mxu0
        %v4460 = vsel %vm2684, %v4456, 0
        %4462 = vmatprep.subr.mxu0 0.0
        %4463 = vmatpush1.msra.mxu0 %v1122
        %4464 = vmatprep.subr.mxu0 0.0
        %4465 = vmatpush1.msra.mxu0 %v1123
        %4466 = vmatprep.subr.mxu0 0.0
        %4467 = vmatpush1.msra.mxu0 %v1124
        %4468 = vmatprep.subr.mxu0 0.0
        %4469 = vmatpush1.msra.mxu0 %v1125
        %4470 = vmatprep.subr.mxu0 0.0
        %4471 = vmatpush1.msra.mxu0 %v1126
        %4472 = vmatprep.subr.mxu0 0.0
        %4473 = vmatpush1.msra.mxu0 %v1127
        %4474 = vmatprep.subr.mxu0 0.0
        %4475 = vmatpush1.msra.mxu0 %v1128
        %4476 = vmatprep.subr.mxu0 0.0
        %4477 = vmatpush1.msra.mxu0 %v1129
        %4478 = vmatprep.subr.mxu0 0.0
        %4479 = vmatpush1.msra.mxu0 0.0
        %4480 = vmatprep.subr.mxu0 0.0
        %4481 = vmatpush1.msra.mxu0 0.0
        %4482 = vmatprep.subr.mxu0 0.0
        %4483 = vmatpush1.msra.mxu0 0.0
        %4484 = vmatprep.subr.mxu0 0.0
        %4485 = vmatpush1.msra.mxu0 0.0
        %4486 = vmatprep.subr.mxu0 0.0
        %4487 = vmatpush1.msra.mxu0 0.0
        %4488 = vmatprep.subr.mxu0 0.0
        %4489 = vmatpush1.msra.mxu0 0.0
        %4490 = vmatprep.subr.mxu0 0.0
        %4491 = vmatpush1.msra.mxu0 0.0
        %4492 = vmatprep.subr.mxu0 0.0
        %4493 = vmatpush1.msra.mxu0 0.0
        %4494 = vmatprep.subr.mxu0 0.0
        %4495 = vmatpush1.msra.mxu0 0.0
        %4496 = vmatprep.subr.mxu0 0.0
        %4497 = vmatpush1.msra.mxu0 0.0
        %4498 = vmatprep.subr.mxu0 0.0
        %4499 = vmatpush1.msra.mxu0 0.0
        %4500 = vmatprep.subr.mxu0 0.0
        %4501 = vmatpush1.msra.mxu0 0.0
        %4502 = vmatprep.subr.mxu0 0.0
        %4503 = vmatpush1.msra.mxu0 0.0
        %4504 = vmatprep.subr.mxu0 0.0
        %4505 = vmatpush1.msra.mxu0 0.0
        %4506 = vmatprep.subr.mxu0 0.0
        %4507 = vmatpush1.msra.mxu0 0.0
        %4508 = vmatprep.subr.mxu0 0.0
        %4509 = vmatpush1.msra.mxu0 0.0
        %4510 = vmatprep.subr.mxu0 0.0
        %4511 = vmatpush1.msra.mxu0 0.0
        %4512 = vmatprep.subr.mxu0 0.0
        %4513 = vmatpush1.msra.mxu0 0.0
        %4514 = vmatprep.subr.mxu0 0.0
        %4515 = vmatpush1.msra.mxu0 0.0
        %4516 = vmatprep.subr.mxu0 0.0
        %4517 = vmatpush1.msra.mxu0 0.0
        %4518 = vmatprep.subr.mxu0 0.0
        %4519 = vmatpush1.msra.mxu0 0.0
        %4520 = vmatprep.subr.mxu0 0.0
        %4521 = vmatpush1.msra.mxu0 0.0
        %4522 = vmatprep.subr.mxu0 0.0
        %4523 = vmatpush1.msra.mxu0 0.0
        %4524 = vmatprep.subr.mxu0 0.0
        %4525 = vmatpush1.msra.mxu0 0.0
        %4526 = vmatprep.mubr.f32.mxu0 0.0
        %4527 = vmatmul.mubr.f32.gmra.mrb[0].mxu0 %v4460
        %v4528 = vpop.f32.mrb[0].mxu0
        %v4529 = vadd.f32 0.0, %v4528
        %v4530 = vpop.f32.mrb[0].mxu0
        %4531 = vdwg.mxu0
        %v4532 = vmul.f32 %v4456, %v2761
        %v4533 = vmul.f32 %v4529, %v2766
        %v4534 = vadd.f32 %v4532, %v4533
        %4535 = vmatprep.subr.mxu0 %v4116
        %4536 = vmatpush1.xpose.msra.mxu0 %v4115
        %4537 = vmatprep.subr.mxu0 %v4124
        %4538 = vmatpush1.xpose.msra.mxu0 %v4123
        %4539 = vmatprep.subr.mxu0 %v4132
        %4540 = vmatpush1.xpose.msra.mxu0 %v4131
        %4541 = vmatprep.subr.mxu0 %v4140
        %4542 = vmatpush1.xpose.msra.mxu0 %v4139
        %4543 = vmatprep.subr.mxu0 %v4148
        %4544 = vmatpush1.xpose.msra.mxu0 %v4147
        %4545 = vmatprep.subr.mxu0 %v4156
        %4546 = vmatpush1.xpose.msra.mxu0 %v4155
        %4547 = vmatprep.subr.mxu0 %v4164
        %4548 = vmatpush1.xpose.msra.mxu0 %v4163
        %4549 = vmatprep.subr.mxu0 %v4172
        %4550 = vmatpush1.xpose.msra.mxu0 %v4171
        %4551 = vmatprep.subr.mxu0 0.0
        %4552 = vmatpush1.xpose.msra.mxu0 0.0
        %4553 = vmatprep.subr.mxu0 0.0
        %4554 = vmatpush1.xpose.msra.mxu0 0.0
        %4555 = vmatprep.subr.mxu0 0.0
        %4556 = vmatpush1.xpose.msra.mxu0 0.0
        %4557 = vmatprep.subr.mxu0 0.0
        %4558 = vmatpush1.xpose.msra.mxu0 0.0
        %4559 = vmatprep.subr.mxu0 0.0
        %4560 = vmatpush1.xpose.msra.mxu0 0.0
        %4561 = vmatprep.subr.mxu0 0.0
        %4562 = vmatpush1.xpose.msra.mxu0 0.0
        %4563 = vmatprep.subr.mxu0 0.0
        %4564 = vmatpush1.xpose.msra.mxu0 0.0
        %4565 = vmatprep.subr.mxu0 0.0
        %4566 = vmatpush1.xpose.msra.mxu0 0.0
        %4567 = vmatprep.subr.mxu0 0.0
        %4568 = vmatpush1.xpose.msra.mxu0 0.0
        %4569 = vmatprep.subr.mxu0 0.0
        %4570 = vmatpush1.xpose.msra.mxu0 0.0
        %4571 = vmatprep.subr.mxu0 0.0
        %4572 = vmatpush1.xpose.msra.mxu0 0.0
        %4573 = vmatprep.subr.mxu0 0.0
        %4574 = vmatpush1.xpose.msra.mxu0 0.0
        %4575 = vmatprep.subr.mxu0 0.0
        %4576 = vmatpush1.xpose.msra.mxu0 0.0
        %4577 = vmatprep.subr.mxu0 0.0
        %4578 = vmatpush1.xpose.msra.mxu0 0.0
        %4579 = vmatprep.subr.mxu0 0.0
        %4580 = vmatpush1.xpose.msra.mxu0 0.0
        %4581 = vmatprep.subr.mxu0 0.0
        %4582 = vmatpush1.xpose.msra.mxu0 0.0
        %4583 = vmatprep.subr.mxu0 0.0
        %4584 = vmatpush1.xpose.msra.mxu0 0.0
        %4585 = vmatprep.subr.mxu0 0.0
        %4586 = vmatpush1.xpose.msra.mxu0 0.0
        %4587 = vmatprep.subr.mxu0 0.0
        %4588 = vmatpush1.xpose.msra.mxu0 0.0
        %4589 = vmatprep.subr.mxu0 0.0
        %4590 = vmatpush1.xpose.msra.mxu0 0.0
        %4591 = vmatprep.subr.mxu0 0.0
        %4592 = vmatpush1.xpose.msra.mxu0 0.0
        %4593 = vmatprep.subr.mxu0 0.0
        %4594 = vmatpush1.xpose.msra.mxu0 0.0
        %4595 = vmatprep.subr.mxu0 0.0
        %4596 = vmatpush1.xpose.msra.mxu0 0.0
        %4597 = vmatprep.subr.mxu0 0.0
        %4598 = vmatpush1.xpose.msra.mxu0 0.0
        %4599 = vmatprep.mubr.f32.mxu0 %v941
        %4600 = vmatmul.mubr.f32.gmra.mrb[0].mxu0 %v939
        %v4601 = vpop.f32.mrb[0].mxu0
        %v4602 = vadd.f32 0.0, %v4601
        %v4603 = vpop.f32.mrb[0].mxu0
        %4604 = vdwg.mxu0
        %4605 = vmatprep.subr.mxu0 %v4118
        %4606 = vmatpush1.xpose.msra.mxu0 %v4117
        %4607 = vmatprep.subr.mxu0 %v4126
        %4608 = vmatpush1.xpose.msra.mxu0 %v4125
        %4609 = vmatprep.subr.mxu0 %v4134
        %4610 = vmatpush1.xpose.msra.mxu0 %v4133
        %4611 = vmatprep.subr.mxu0 %v4142
        %4612 = vmatpush1.xpose.msra.mxu0 %v4141
        %4613 = vmatprep.subr.mxu0 %v4150
        %4614 = vmatpush1.xpose.msra.mxu0 %v4149
        %4615 = vmatprep.subr.mxu0 %v4158
        %4616 = vmatpush1.xpose.msra.mxu0 %v4157
        %4617 = vmatprep.subr.mxu0 %v4166
        %4618 = vmatpush1.xpose.msra.mxu0 %v4165
        %4619 = vmatprep.subr.mxu0 %v4174
        %4620 = vmatpush1.xpose.msra.mxu0 %v4173
        %4621 = vmatprep.subr.mxu0 0.0
        %4622 = vmatpush1.xpose.msra.mxu0 0.0
        %4623 = vmatprep.subr.mxu0 0.0
        %4624 = vmatpush1.xpose.msra.mxu0 0.0
        %4625 = vmatprep.subr.mxu0 0.0
        %4626 = vmatpush1.xpose.msra.mxu0 0.0
        %4627 = vmatprep.subr.mxu0 0.0
        %4628 = vmatpush1.xpose.msra.mxu0 0.0
        %4629 = vmatprep.subr.mxu0 0.0
        %4630 = vmatpush1.xpose.msra.mxu0 0.0
        %4631 = vmatprep.subr.mxu0 0.0
        %4632 = vmatpush1.xpose.msra.mxu0 0.0
        %4633 = vmatprep.subr.mxu0 0.0
        %4634 = vmatpush1.xpose.msra.mxu0 0.0
        %4635 = vmatprep.subr.mxu0 0.0
        %4636 = vmatpush1.xpose.msra.mxu0 0.0
        %4637 = vmatprep.subr.mxu0 0.0
        %4638 = vmatpush1.xpose.msra.mxu0 0.0
        %4639 = vmatprep.subr.mxu0 0.0
        %4640 = vmatpush1.xpose.msra.mxu0 0.0
        %4641 = vmatprep.subr.mxu0 0.0
        %4642 = vmatpush1.xpose.msra.mxu0 0.0
        %4643 = vmatprep.subr.mxu0 0.0
        %4644 = vmatpush1.xpose.msra.mxu0 0.0
        %4645 = vmatprep.subr.mxu0 0.0
        %4646 = vmatpush1.xpose.msra.mxu0 0.0
        %4647 = vmatprep.subr.mxu0 0.0
        %4648 = vmatpush1.xpose.msra.mxu0 0.0
        %4649 = vmatprep.subr.mxu0 0.0
        %4650 = vmatpush1.xpose.msra.mxu0 0.0
        %4651 = vmatprep.subr.mxu0 0.0
        %4652 = vmatpush1.xpose.msra.mxu0 0.0
        %4653 = vmatprep.subr.mxu0 0.0
        %4654 = vmatpush1.xpose.msra.mxu0 0.0
        %4655 = vmatprep.subr.mxu0 0.0
        %4656 = vmatpush1.xpose.msra.mxu0 0.0
        %4657 = vmatprep.subr.mxu0 0.0
        %4658 = vmatpush1.xpose.msra.mxu0 0.0
        %4659 = vmatprep.subr.mxu0 0.0
        %4660 = vmatpush1.xpose.msra.mxu0 0.0
        %4661 = vmatprep.subr.mxu0 0.0
        %4662 = vmatpush1.xpose.msra.mxu0 0.0
        %4663 = vmatprep.subr.mxu0 0.0
        %4664 = vmatpush1.xpose.msra.mxu0 0.0
        %4665 = vmatprep.subr.mxu0 0.0
        %4666 = vmatpush1.xpose.msra.mxu0 0.0
        %4667 = vmatprep.subr.mxu0 0.0
        %4668 = vmatpush1.xpose.msra.mxu0 0.0
        %4669 = vmatprep.mubr.f32.mxu0 %v984
        %4670 = vmatmul.mubr.f32.gmra.mrb[0].mxu0 %v982
        %v4671 = vpop.f32.mrb[0].mxu0
        %v4672 = vadd.f32 %v4602, %v4671
        %v4673 = vpop.f32.mrb[0].mxu0
        %4674 = vdwg.mxu0
        %4675 = vmatprep.subr.mxu0 %v4120
        %4676 = vmatpush1.xpose.msra.mxu0 %v4119
        %4677 = vmatprep.subr.mxu0 %v4128
        %4678 = vmatpush1.xpose.msra.mxu0 %v4127
        %4679 = vmatprep.subr.mxu0 %v4136
        %4680 = vmatpush1.xpose.msra.mxu0 %v4135
        %4681 = vmatprep.subr.mxu0 %v4144
        %4682 = vmatpush1.xpose.msra.mxu0 %v4143
        %4683 = vmatprep.subr.mxu0 %v4152
        %4684 = vmatpush1.xpose.msra.mxu0 %v4151
        %4685 = vmatprep.subr.mxu0 %v4160
        %4686 = vmatpush1.xpose.msra.mxu0 %v4159
        %4687 = vmatprep.subr.mxu0 %v4168
        %4688 = vmatpush1.xpose.msra.mxu0 %v4167
        %4689 = vmatprep.subr.mxu0 %v4176
        %4690 = vmatpush1.xpose.msra.mxu0 %v4175
        %4691 = vmatprep.subr.mxu0 0.0
        %4692 = vmatpush1.xpose.msra.mxu0 0.0
        %4693 = vmatprep.subr.mxu0 0.0
        %4694 = vmatpush1.xpose.msra.mxu0 0.0
        %4695 = vmatprep.subr.mxu0 0.0
        %4696 = vmatpush1.xpose.msra.mxu0 0.0
        %4697 = vmatprep.subr.mxu0 0.0
        %4698 = vmatpush1.xpose.msra.mxu0 0.0
        %4699 = vmatprep.subr.mxu0 0.0
        %4700 = vmatpush1.xpose.msra.mxu0 0.0
        %4701 = vmatprep.subr.mxu0 0.0
        %4702 = vmatpush1.xpose.msra.mxu0 0.0
        %4703 = vmatprep.subr.mxu0 0.0
        %4704 = vmatpush1.xpose.msra.mxu0 0.0
        %4705 = vmatprep.subr.mxu0 0.0
        %4706 = vmatpush1.xpose.msra.mxu0 0.0
        %4707 = vmatprep.subr.mxu0 0.0
        %4708 = vmatpush1.xpose.msra.mxu0 0.0
        %4709 = vmatprep.subr.mxu0 0.0
        %4710 = vmatpush1.xpose.msra.mxu0 0.0
        %4711 = vmatprep.subr.mxu0 0.0
        %4712 = vmatpush1.xpose.msra.mxu0 0.0
        %4713 = vmatprep.subr.mxu0 0.0
        %4714 = vmatpush1.xpose.msra.mxu0 0.0
        %4715 = vmatprep.subr.mxu0 0.0
        %4716 = vmatpush1.xpose.msra.mxu0 0.0
        %4717 = vmatprep.subr.mxu0 0.0
        %4718 = vmatpush1.xpose.msra.mxu0 0.0
        %4719 = vmatprep.subr.mxu0 0.0
        %4720 = vmatpush1.xpose.msra.mxu0 0.0
        %4721 = vmatprep.subr.mxu0 0.0
        %4722 = vmatpush1.xpose.msra.mxu0 0.0
        %4723 = vmatprep.subr.mxu0 0.0
        %4724 = vmatpush1.xpose.msra.mxu0 0.0
        %4725 = vmatprep.subr.mxu0 0.0
        %4726 = vmatpush1.xpose.msra.mxu0 0.0
        %4727 = vmatprep.subr.mxu0 0.0
        %4728 = vmatpush1.xpose.msra.mxu0 0.0
        %4729 = vmatprep.subr.mxu0 0.0
        %4730 = vmatpush1.xpose.msra.mxu0 0.0
        %4731 = vmatprep.subr.mxu0 0.0
        %4732 = vmatpush1.xpose.msra.mxu0 0.0
        %4733 = vmatprep.subr.mxu0 0.0
        %4734 = vmatpush1.xpose.msra.mxu0 0.0
        %4735 = vmatprep.subr.mxu0 0.0
        %4736 = vmatpush1.xpose.msra.mxu0 0.0
        %4737 = vmatprep.subr.mxu0 0.0
        %4738 = vmatpush1.xpose.msra.mxu0 0.0
        %4739 = vmatprep.mubr.f32.mxu0 %v1027
        %4740 = vmatmul.mubr.f32.gmra.mrb[0].mxu0 %v1025
        %v4741 = vpop.f32.mrb[0].mxu0
        %v4742 = vadd.f32 %v4672, %v4741
        %v4743 = vpop.f32.mrb[0].mxu0
        %4744 = vdwg.mxu0
        %4745 = vmatprep.subr.mxu0 %v4122
        %4746 = vmatpush1.xpose.msra.mxu0 %v4121
        %4747 = vmatprep.subr.mxu0 %v4130
        %4748 = vmatpush1.xpose.msra.mxu0 %v4129
        %4749 = vmatprep.subr.mxu0 %v4138
        %4750 = vmatpush1.xpose.msra.mxu0 %v4137
        %4751 = vmatprep.subr.mxu0 %v4146
        %4752 = vmatpush1.xpose.msra.mxu0 %v4145
        %4753 = vmatprep.subr.mxu0 %v4154
        %4754 = vmatpush1.xpose.msra.mxu0 %v4153
        %4755 = vmatprep.subr.mxu0 %v4162
        %4756 = vmatpush1.xpose.msra.mxu0 %v4161
        %4757 = vmatprep.subr.mxu0 %v4170
        %4758 = vmatpush1.xpose.msra.mxu0 %v4169
        %4759 = vmatprep.subr.mxu0 %v4178
        %4760 = vmatpush1.xpose.msra.mxu0 %v4177
        %4761 = vmatprep.subr.mxu0 0.0
        %4762 = vmatpush1.xpose.msra.mxu0 0.0
        %4763 = vmatprep.subr.mxu0 0.0
        %4764 = vmatpush1.xpose.msra.mxu0 0.0
        %4765 = vmatprep.subr.mxu0 0.0
        %4766 = vmatpush1.xpose.msra.mxu0 0.0
        %4767 = vmatprep.subr.mxu0 0.0
        %4768 = vmatpush1.xpose.msra.mxu0 0.0
        %4769 = vmatprep.subr.mxu0 0.0
        %4770 = vmatpush1.xpose.msra.mxu0 0.0
        %4771 = vmatprep.subr.mxu0 0.0
        %4772 = vmatpush1.xpose.msra.mxu0 0.0
        %4773 = vmatprep.subr.mxu0 0.0
        %4774 = vmatpush1.xpose.msra.mxu0 0.0
        %4775 = vmatprep.subr.mxu0 0.0
        %4776 = vmatpush1.xpose.msra.mxu0 0.0
        %4777 = vmatprep.subr.mxu0 0.0
        %4778 = vmatpush1.xpose.msra.mxu0 0.0
        %4779 = vmatprep.subr.mxu0 0.0
        %4780 = vmatpush1.xpose.msra.mxu0 0.0
        %4781 = vmatprep.subr.mxu0 0.0
        %4782 = vmatpush1.xpose.msra.mxu0 0.0
        %4783 = vmatprep.subr.mxu0 0.0
        %4784 = vmatpush1.xpose.msra.mxu0 0.0
        %4785 = vmatprep.subr.mxu0 0.0
        %4786 = vmatpush1.xpose.msra.mxu0 0.0
        %4787 = vmatprep.subr.mxu0 0.0
        %4788 = vmatpush1.xpose.msra.mxu0 0.0
        %4789 = vmatprep.subr.mxu0 0.0
        %4790 = vmatpush1.xpose.msra.mxu0 0.0
        %4791 = vmatprep.subr.mxu0 0.0
        %4792 = vmatpush1.xpose.msra.mxu0 0.0
        %4793 = vmatprep.subr.mxu0 0.0
        %4794 = vmatpush1.xpose.msra.mxu0 0.0
        %4795 = vmatprep.subr.mxu0 0.0
        %4796 = vmatpush1.xpose.msra.mxu0 0.0
        %4797 = vmatprep.subr.mxu0 0.0
        %4798 = vmatpush1.xpose.msra.mxu0 0.0
        %4799 = vmatprep.subr.mxu0 0.0
        %4800 = vmatpush1.xpose.msra.mxu0 0.0
        %4801 = vmatprep.subr.mxu0 0.0
        %4802 = vmatpush1.xpose.msra.mxu0 0.0
        %4803 = vmatprep.subr.mxu0 0.0
        %4804 = vmatpush1.xpose.msra.mxu0 0.0
        %4805 = vmatprep.subr.mxu0 0.0
        %4806 = vmatpush1.xpose.msra.mxu0 0.0
        %4807 = vmatprep.subr.mxu0 0.0
        %4808 = vmatpush1.xpose.msra.mxu0 0.0
        %4809 = vmatprep.mubr.f32.mxu0 %v1070
        %4810 = vmatmul.mubr.f32.gmra.mrb[0].mxu0 %v1068
        %v4811 = vpop.f32.mrb[0].mxu0
        %v4812 = vadd.f32 %v4742, %v4811
        %v4813 = vpop.f32.mrb[0].mxu0
        %4814 = vdwg.mxu0
        %v4816 = vsel %vm2684, %v4812, 0
        %4818 = vmatprep.subr.mxu0 0.0
        %4819 = vmatpush1.msra.mxu0 %v1122
        %4820 = vmatprep.subr.mxu0 0.0
        %4821 = vmatpush1.msra.mxu0 %v1123
        %4822 = vmatprep.subr.mxu0 0.0
        %4823 = vmatpush1.msra.mxu0 %v1124
        %4824 = vmatprep.subr.mxu0 0.0
        %4825 = vmatpush1.msra.mxu0 %v1125
        %4826 = vmatprep.subr.mxu0 0.0
        %4827 = vmatpush1.msra.mxu0 %v1126
        %4828 = vmatprep.subr.mxu0 0.0
        %4829 = vmatpush1.msra.mxu0 %v1127
        %4830 = vmatprep.subr.mxu0 0.0
        %4831 = vmatpush1.msra.mxu0 %v1128
        %4832 = vmatprep.subr.mxu0 0.0
        %4833 = vmatpush1.msra.mxu0 %v1129
        %4834 = vmatprep.subr.mxu0 0.0
        %4835 = vmatpush1.msra.mxu0 0.0
        %4836 = vmatprep.subr.mxu0 0.0
        %4837 = vmatpush1.msra.mxu0 0.0
        %4838 = vmatprep.subr.mxu0 0.0
        %4839 = vmatpush1.msra.mxu0 0.0
        %4840 = vmatprep.subr.mxu0 0.0
        %4841 = vmatpush1.msra.mxu0 0.0
        %4842 = vmatprep.subr.mxu0 0.0
        %4843 = vmatpush1.msra.mxu0 0.0
        %4844 = vmatprep.subr.mxu0 0.0
        %4845 = vmatpush1.msra.mxu0 0.0
        %4846 = vmatprep.subr.mxu0 0.0
        %4847 = vmatpush1.msra.mxu0 0.0
        %4848 = vmatprep.subr.mxu0 0.0
        %4849 = vmatpush1.msra.mxu0 0.0
        %4850 = vmatprep.subr.mxu0 0.0
        %4851 = vmatpush1.msra.mxu0 0.0
        %4852 = vmatprep.subr.mxu0 0.0
        %4853 = vmatpush1.msra.mxu0 0.0
        %4854 = vmatprep.subr.mxu0 0.0
        %4855 = vmatpush1.msra.mxu0 0.0
        %4856 = vmatprep.subr.mxu0 0.0
        %4857 = vmatpush1.msra.mxu0 0.0
        %4858 = vmatprep.subr.mxu0 0.0
        %4859 = vmatpush1.msra.mxu0 0.0
        %4860 = vmatprep.subr.mxu0 0.0
        %4861 = vmatpush1.msra.mxu0 0.0
        %4862 = vmatprep.subr.mxu0 0.0
        %4863 = vmatpush1.msra.mxu0 0.0
        %4864 = vmatprep.subr.mxu0 0.0
        %4865 = vmatpush1.msra.mxu0 0.0
        %4866 = vmatprep.subr.mxu0 0.0
        %4867 = vmatpush1.msra.mxu0 0.0
        %4868 = vmatprep.subr.mxu0 0.0
        %4869 = vmatpush1.msra.mxu0 0.0
        %4870 = vmatprep.subr.mxu0 0.0
        %4871 = vmatpush1.msra.mxu0 0.0
        %4872 = vmatprep.subr.mxu0 0.0
        %4873 = vmatpush1.msra.mxu0 0.0
        %4874 = vmatprep.subr.mxu0 0.0
        %4875 = vmatpush1.msra.mxu0 0.0
        %4876 = vmatprep.subr.mxu0 0.0
        %4877 = vmatpush1.msra.mxu0 0.0
        %4878 = vmatprep.subr.mxu0 0.0
        %4879 = vmatpush1.msra.mxu0 0.0
        %4880 = vmatprep.subr.mxu0 0.0
        %4881 = vmatpush1.msra.mxu0 0.0
        %4882 = vmatprep.mubr.f32.mxu0 0.0
        %4883 = vmatmul.mubr.f32.gmra.mrb[0].mxu0 %v4816
        %v4884 = vpop.f32.mrb[0].mxu0
        %v4885 = vadd.f32 0.0, %v4884
        %v4886 = vpop.f32.mrb[0].mxu0
        %4887 = vdwg.mxu0
        %v4888 = vmul.f32 %v4812, %v2761
        %v4889 = vmul.f32 %v4885, %v2766
        %v4890 = vadd.f32 %v4888, %v4889
        %4892 = vrot.lane.b32.xlu0 %v4890, 64
        %v4893 = vpop.permute.xlu0 %4892
        %v4895 = vsel %vm2684, %v4534, %v4893
        %s4896 = scalar_lea.vmem %s523, 8
        %4897 = vst [vmem:[%s4896] sm:$0xff] %v4895
        %p4898 = scmp.lt.s32.totalorder %s42, 5
        %s4899 = scalar_select %p4898, %s42, 5
        %s4900 = smul.addr %s4899, 2
        %s4901 = smul.addr %s4900, 8
        %s4902 = scalar_lea.vmem %s13, %s4901
        // Predicated region
        $region73: #{srl_second_order_scorer.3} parent=59 // pred_check
          %p4903 = pneg %p301
        $region74: #{srl_second_order_scorer.3} parent=59 // pred_check_branch
          %4905 = sbr.rel (%p4903) target = $region76
        $region75: #{srl_second_order_scorer.3} parent=59 // pred_region
          _
        $region76: #{srl_second_order_scorer.3} parent=59 // pred_fallthru
          _
      $region60: #{srl_second_order_scorer.3} parent=5 // pred_fallthru
        _
      %p4906 = scmp.le.s32.totalorder 2, %s37
      // Predicated region
      $region77: #{srl_second_order_scorer.3} parent=5 // pred_check
        %p4907 = pneg %p4906
      $region78: #{srl_second_order_scorer.3} parent=5 // pred_check_branch
        %4909 = sbr.rel (%p4907) target = $region80
      $region79: #{srl_second_order_scorer.3} parent=5 // pred_region
        %s4910 = ssub.s32 %s37, 2
        // Predicated region
        $region81: #{srl_second_order_scorer.3} parent=79 // pred_check
          %p4911 = pneg %p307
        $region82: #{srl_second_order_scorer.3} parent=79 // pred_check_branch
          %4913 = sbr.rel (%p4911) target = $region84
        $region83: #{srl_second_order_scorer.3} parent=79 // pred_region
          %p4914 = scmp.lt.s32.totalorder %s43, 5
          %s4915 = scalar_select %p4914, %s43, 5
          %s4916 = smul.addr %s4915, 2
          %s4917 = smul.addr %s4916, 8
          %s4918 = scalar_lea.vmem %s13, %s4917
        $region84: #{srl_second_order_scorer.3} parent=79 // pred_fallthru
          _
      $region80: #{srl_second_order_scorer.3} parent=5 // pred_fallthru
        _
    $region6: #{srl_second_order_scorer.3} parent=1 // loop_footer
      %s41 = sadd.s32 1, %s37
    $region7: #{srl_second_order_scorer.3} parent=1 // loop_footer_branch
      %36 = sbr.rel target = $region3
    $region8: #{srl_second_order_scorer.3} parent=1 // loop_exit
      _
    %4919 = vsyncpa [#allocation7], 1
    %s4920 = scalar_lea.sflag [#allocation7], 1
    %4921 = vsyncpa %s4920, 1
    %4922 = vsyncpa [#allocation9], 1

</llo_original>
